<compile_context>
chip_gen: v6e
topology: v6e:2x2x1
jax: 0.10.0
libtpu: 0.0.40
codegen_flags: <defaults>
</compile_context>

<pallas_src>
import functools

import jax
import jax.numpy as jnp
from jax.experimental import pallas as pl
from jax.experimental.pallas import tpu as pltpu


def _window_attention_kernel(x_ref, wqkv_ref, bqkv_ref, wo_ref, bo_ref, out_ref,
                             *, num_heads, head_dim, dim, w_blk, seq):
    """One grid step == W_BLK windows.

    x_ref    : (W_BLK, seq, dim)   tokens of W_BLK windows
    wqkv_ref : (dim, 3*dim)        fused, pre-transposed QKV weight (y = x @ W + b)
    bqkv_ref : (1, 3*dim)
    wo_ref   : (dim, dim)          pre-transposed output-projection weight
    bo_ref   : (1, dim)
    out_ref  : (W_BLK, seq, dim)
    """
    t = w_blk * seq
    # Merge the window axis into the token axis for the projections
    # (layout-trivial reshape: last dim is unchanged).
    x = x_ref[...].astype(jnp.float32).reshape(t, dim)                   # (T, D)

    # Fused Q/K/V projection: one MXU matmul instead of three.
    qkv = jnp.dot(x, wqkv_ref[...], preferred_element_type=jnp.float32)
    qkv = qkv + bqkv_ref[...]                                            # (T, 3D)

    wo = wo_ref[...]                                                     # (D, D)
    inv_scale = 1.0 / (float(head_dim) ** 0.5)        # scale = 0.5 -> / hd**0.5

    acc = None
    for h in range(num_heads):                        # static, tiny unrolled loop
        lo = h * head_dim
        hi = (h + 1) * head_dim
        q = qkv[:, lo:hi].reshape(w_blk, seq, head_dim)
        k = qkv[:, dim + lo: dim + hi].reshape(w_blk, seq, head_dim)
        v = qkv[:, 2 * dim + lo: 2 * dim + hi].reshape(w_blk, seq, head_dim)

        # Batched-over-windows attention (single batch dim dot_general).
        s = jnp.einsum('wnd,wmd->wnm', q, k,
                       preferred_element_type=jnp.float32) * inv_scale   # (W, N, N)
        s = s - jnp.max(s, axis=-1, keepdims=True)
        p = jnp.exp(s)
        p = p / jnp.sum(p, axis=-1, keepdims=True)                       # softmax (f32)
        oh = jnp.einsum('wnm,wmd->wnd', p, v,
                        preferred_element_type=jnp.float32)              # (W, N, hd)

        # Per-head slice of the output projection; avoids concatenating heads.
        contrib = jnp.dot(oh.reshape(t, head_dim), wo[lo:hi, :],
                          preferred_element_type=jnp.float32)            # (T, D)
        acc = contrib if acc is None else acc + contrib

    o = acc + bo_ref[...]
    out_ref[...] = o.reshape(w_blk, seq, dim).astype(out_ref.dtype)


def _pick_window_block(num_windows, target=32):
    """Largest divisor of num_windows <= min(target, num_windows // 2).

    Keeping the grid length >= 2 lets v7x shard the parallel axis across its
    two TensorCores; capping the block keeps the double-buffered in/out blocks
    comfortably inside v7x's smaller (64 MiB) VMEM.
    """
    if num_windows < 2:
        return 1
    cap = max(1, min(target, num_windows // 2))
    for cand in range(cap, 0, -1):
        if num_windows % cand == 0:
            return cand
    return 1


def window_attention_pallas(x, params, *, num_heads, window_size, top_k, w_blk=None):
    """x: (b, c, h, w) float32.  Returns (-1, dim, top_k * window_size**2)."""
    b, c, h, w = x.shape
    ws = window_size
    dim = c
    assert dim % num_heads == 0, "dim must be divisible by num_heads"
    assert h % ws == 0 and w % ws == 0, "spatial dims must be divisible by window_size"
    head_dim = dim // num_heads
    n = ws * ws

    # --- window partition (glue, plain JAX/XLA) ---
    xw = x.reshape(b, c, h // ws, ws, w // ws, ws)
    xw = jnp.transpose(xw, (0, 2, 4, 1, 3, 5)).reshape(-1, c, n)         # (B', c, n)
    num_windows = xw.shape[0]
    assert num_windows % top_k == 0, "num_windows must be divisible by top_k"
    x_tok = jnp.transpose(xw, (0, 2, 1))                                 # (B', n, dim)

    # --- fused / pre-transposed weights (nn.Linear computes x @ W.T + b) ---
    wq, bq, wk, bk, wv, bv, wo, bo = params
    wqkv_t = jnp.concatenate([wq.T, wk.T, wv.T], axis=1)                 # (dim, 3*dim)
    bqkv = jnp.concatenate([bq, bk, bv]).reshape(1, 3 * dim)             # (1, 3*dim)
    wo_t = jnp.transpose(wo)                                             # (dim, dim)
    bo2 = bo.reshape(1, dim)                                             # (1, dim)

    if w_blk is None:
        w_blk = _pick_window_block(num_windows)
    assert num_windows % w_blk == 0
    grid_len = num_windows // w_blk

    kernel = functools.partial(_window_attention_kernel,
                               num_heads=num_heads, head_dim=head_dim,
                               dim=dim, w_blk=w_blk, seq=n)

    # Advisory cost estimate so XLA schedules the surrounding reshapes well.
    flops = (2 * num_windows * n * dim * 3 * dim            # fused QKV projection
             + 4 * num_windows * num_heads * n * n * head_dim  # scores + PV
             + 2 * num_windows * n * dim * dim)              # output projection
    cost = pl.CostEstimate(
        flops=flops,
        transcendentals=num_windows * num_heads * n * n,
        bytes_accessed=(2 * num_windows * n * dim * 4
                        + grid_len * 4 * (dim * 3 * dim + 3 * dim + dim * dim + dim)),
    )

    tok_spec = lambda i: (i, 0, 0)
    const_spec = lambda i: (0, 0)
    # NOTE: at real model dims (dim >= 128) additionally: cast x / weights to
    # bf16 on v6e/v7x (keep f32 accumulation and softmax), single-buffer the
    # grid-invariant weight blocks, and re-budget w_blk against v7x's 64 MiB VMEM.
    attn = pl.pallas_call(
        kernel,
        out_shape=jax.ShapeDtypeStruct((num_windows, n, dim), x.dtype),
        grid_spec=pltpu.PrefetchScalarGridSpec(
            num_scalar_prefetch=0,
            grid=(grid_len,),
            in_specs=[
                pl.BlockSpec((w_blk, n, dim), tok_spec),     # x tokens
                pl.BlockSpec((dim, 3 * dim), const_spec),    # fused QKV weight
                pl.BlockSpec((1, 3 * dim), const_spec),      # fused QKV bias
                pl.BlockSpec((dim, dim), const_spec),        # output weight
                pl.BlockSpec((1, dim), const_spec),          # output bias
            ],
            out_specs=pl.BlockSpec((w_blk, n, dim), tok_spec),
        ),
        compiler_params=pltpu.CompilerParams(
            dimension_semantics=("parallel",)),
        cost_estimate=cost,
    )(x_tok, wqkv_t, bqkv, wo_t, bo2)                                    # (B', n, dim)

    # --- top_k regroup (raw reshape semantics, matches PyTorch .view) ---
    out = attn.reshape(-1, dim, top_k, ws, ws)
    out = jnp.transpose(out, (0, 2, 1, 3, 4))
    out = out.reshape(-1, dim, top_k * ws * ws)
    return out


def _reference(x, params, *, num_heads, window_size, top_k):
    """Pure-JAX reference of the (repaired) forward pass."""
    b, c, h, w = x.shape
    ws = window_size
    dim = c
    head_dim = dim // num_heads
    n = ws * ws
    xw = x.reshape(b, c, h // ws, ws, w // ws, ws)
    xw = jnp.transpose(xw, (0, 2, 4, 1, 3, 5)).reshape(-1, c, ws, ws)
    B = xw.shape[0]
    xt = jnp.transpose(xw.reshape(B, c, n), (0, 2, 1))
    wq, bq, wk, bk, wv, bv, wo, bo = params
    q = xt @ wq.T + bq
    k = xt @ wk.T + bk
    v = xt @ wv.T + bv
    q = q.reshape(B, n, num_heads, head_dim).transpose(0, 2, 1, 3)
    k = k.reshape(B, n, num_heads, head_dim).transpose(0, 2, 3, 1)
    v = v.reshape(B, n, num_heads, head_dim).transpose(0, 2, 1, 3)
    s = (q @ k) / (head_dim ** 0.5)
    p = jax.nn.softmax(s, axis=-1)
    a = (p @ v).transpose(0, 2, 1, 3).reshape(B, n, dim)
    o = a @ wo.T + bo
    o = o.reshape(-1, dim, top_k, ws, ws)
    o = jnp.transpose(o, (0, 2, 1, 3, 4)).reshape(-1, dim, top_k * ws * ws)
    return o


if __name__ == "__main__":
    # module hyper-params
    dim = 8
    num_heads = 2
    window_size = 8
    top_k = 2

    # input: (b, c, h, w) NCHW, c == dim
    b, c, h, w = 2, dim, 16, 16

    key = jax.random.PRNGKey(0)
    kx, *kp = jax.random.split(key, 10)
    x = jax.random.normal(kx, (b, c, h, w), jnp.float32)

    # deterministic Linear params, nn.Linear-style uniform(-1/sqrt(in), 1/sqrt(in))
    bound = 1.0 / (dim ** 0.5)
    def uni(k, shape):
        return jax.random.uniform(k, shape, jnp.float32, -bound, bound)
    params = (
        uni(kp[0], (dim, dim)), uni(kp[1], (dim,)),   # fc_q
        uni(kp[2], (dim, dim)), uni(kp[3], (dim,)),   # fc_k
        uni(kp[4], (dim, dim)), uni(kp[5], (dim,)),   # fc_v
        uni(kp[6], (dim, dim)), uni(kp[7], (dim,)),   # fc_o
    )

    out = window_attention_pallas(x, params, num_heads=num_heads,
                                  window_size=window_size, top_k=top_k)
    out = jax.block_until_ready(out)

    ref = _reference(x, params, num_heads=num_heads,
                     window_size=window_size, top_k=top_k)
    assert out.shape == ref.shape == (b * (h // window_size) * (w // window_size) // top_k,
                                      dim, top_k * window_size * window_size)
    assert jnp.allclose(out, ref, atol=2e-3, rtol=2e-3)

    print("KERNEL_OK")
</pallas_src>

<mosaic_0001>
module attributes {stable_mosaic.version = 11 : i64} {
  func.func @_window_attention_kernel(%arg0: i32, %arg1: memref<4x64x8xf32, #tpu.memory_space<vmem>>, %arg2: memref<8x24xf32, #tpu.memory_space<vmem>>, %arg3: memref<1x24xf32, #tpu.memory_space<vmem>>, %arg4: memref<8x8xf32, #tpu.memory_space<vmem>>, %arg5: memref<1x8xf32, #tpu.memory_space<vmem>>, %arg6: memref<4x64x8xf32, #tpu.memory_space<vmem>>) attributes {dimension_semantics = [#tpu.dimension_semantics<parallel>], iteration_bounds = array<i64: 2>, scalar_prefetch = 0 : i64, scratch_operands = 0 : i64, tpu.core_type = #tpu.core_type<tc>, window_params = [{transform_indices = @transform_0, window_bounds = array<i64: 4, 64, 8>}, {pipeline_mode = #tpu.pipeline_mode<synchronous>, transform_indices = @transform_1, window_bounds = array<i64: 8, 24>}, {pipeline_mode = #tpu.pipeline_mode<synchronous>, transform_indices = @transform_2, window_bounds = array<i64: 1, 24>}, {pipeline_mode = #tpu.pipeline_mode<synchronous>, transform_indices = @transform_3, window_bounds = array<i64: 8, 8>}, {pipeline_mode = #tpu.pipeline_mode<synchronous>, transform_indices = @transform_4, window_bounds = array<i64: 1, 8>}, {transform_indices = @transform_5, window_bounds = array<i64: 4, 64, 8>}]} {
    %c0 = arith.constant 0 : index
    %c0_0 = arith.constant 0 : index
    %c0_1 = arith.constant 0 : index
    %0 = vector.load %arg1[%c0, %c0_0, %c0_1] : memref<4x64x8xf32, #tpu.memory_space<vmem>>, vector<4x64x8xf32>
    %1 = vector.shape_cast %0 : vector<4x64x8xf32> to vector<256x8xf32>
    %c0_2 = arith.constant 0 : index
    %c0_3 = arith.constant 0 : index
    %2 = vector.load %arg2[%c0_2, %c0_3] : memref<8x24xf32, #tpu.memory_space<vmem>>, vector<8x24xf32>
    %cst = arith.constant dense<0.000000e+00> : vector<256x24xf32>
    %3 = tpu.matmul %1, %2, %cst {dimension_numbers = #tpu.dot_dimension_numbers<[1], [0], [0], [1], [0, 0, 1, 1], [], []>} : vector<256x8xf32>, vector<8x24xf32>, vector<256x24xf32> -> vector<256x24xf32>
    %c0_4 = arith.constant 0 : index
    %c0_5 = arith.constant 0 : index
    %4 = vector.load %arg3[%c0_4, %c0_5] : memref<1x24xf32, #tpu.memory_space<vmem>>, vector<1x24xf32>
    %5 = vector.broadcast %4 : vector<1x24xf32> to vector<256x24xf32>
    %6 = arith.addf %3, %5 : vector<256x24xf32>
    %c0_6 = arith.constant 0 : index
    %c0_7 = arith.constant 0 : index
    %7 = vector.load %arg4[%c0_6, %c0_7] : memref<8x8xf32, #tpu.memory_space<vmem>>, vector<8x8xf32>
    %8 = vector.extract_strided_slice %6 {offsets = [0, 0], sizes = [256, 4], strides = [1, 1]} : vector<256x24xf32> to vector<256x4xf32>
    %9 = vector.shape_cast %8 : vector<256x4xf32> to vector<4x64x4xf32>
    %10 = vector.extract_strided_slice %6 {offsets = [0, 8], sizes = [256, 4], strides = [1, 1]} : vector<256x24xf32> to vector<256x4xf32>
    %11 = vector.shape_cast %10 : vector<256x4xf32> to vector<4x64x4xf32>
    %12 = vector.extract_strided_slice %6 {offsets = [0, 16], sizes = [256, 4], strides = [1, 1]} : vector<256x24xf32> to vector<256x4xf32>
    %13 = vector.shape_cast %12 : vector<256x4xf32> to vector<4x64x4xf32>
    "tpu.trace_start"() <{level = 10 : i32, message = "wnd,wmd->wnm"}> : () -> ()
    %cst_8 = arith.constant dense<0.000000e+00> : vector<4x64x64xf32>
    %14 = tpu.matmul %9, %11, %cst_8 {dimension_numbers = #tpu.dot_dimension_numbers<[2], [2], [1], [1], [0, 0, 0, 1, 1, 1], [0], [0]>} : vector<4x64x4xf32>, vector<4x64x4xf32>, vector<4x64x64xf32> -> vector<4x64x64xf32>
    "tpu.trace_stop"() : () -> ()
    %cst_9 = arith.constant 5.000000e-01 : f32
    %15 = vector.broadcast %cst_9 : f32 to vector<4x64x64xf32>
    %16 = arith.mulf %14, %15 : vector<4x64x64xf32>
    %cst_10 = arith.constant dense<0xFF800000> : vector<4x64xf32>
    %17 = vector.multi_reduction <maximumf>, %16, %cst_10 [2] : vector<4x64x64xf32> to vector<4x64xf32>
    %18 = vector.shape_cast %17 : vector<4x64xf32> to vector<4x64x1xf32>
    %19 = vector.broadcast %18 : vector<4x64x1xf32> to vector<4x64x64xf32>
    %20 = arith.subf %16, %19 : vector<4x64x64xf32>
    %21 = math.exp %20 : vector<4x64x64xf32>
    %cst_11 = arith.constant dense<0.000000e+00> : vector<4x64xf32>
    %22 = vector.multi_reduction <add>, %21, %cst_11 [2] : vector<4x64x64xf32> to vector<4x64xf32>
    %23 = vector.shape_cast %22 : vector<4x64xf32> to vector<4x64x1xf32>
    %24 = vector.broadcast %23 : vector<4x64x1xf32> to vector<4x64x64xf32>
    %25 = arith.divf %21, %24 : vector<4x64x64xf32>
    "tpu.trace_start"() <{level = 10 : i32, message = "wnm,wmd->wnd"}> : () -> ()
    %cst_12 = arith.constant dense<0.000000e+00> : vector<4x64x4xf32>
    %26 = tpu.matmul %25, %13, %cst_12 {dimension_numbers = #tpu.dot_dimension_numbers<[2], [1], [1], [2], [0, 0, 0, 1, 1, 2], [0], [0]>} : vector<4x64x64xf32>, vector<4x64x4xf32>, vector<4x64x4xf32> -> vector<4x64x4xf32>
    "tpu.trace_stop"() : () -> ()
    %27 = vector.shape_cast %26 : vector<4x64x4xf32> to vector<256x4xf32>
    %28 = vector.extract_strided_slice %7 {offsets = [0, 0], sizes = [4, 8], strides = [1, 1]} : vector<8x8xf32> to vector<4x8xf32>
    %cst_13 = arith.constant dense<0.000000e+00> : vector<256x8xf32>
    %29 = tpu.matmul %27, %28, %cst_13 {dimension_numbers = #tpu.dot_dimension_numbers<[1], [0], [0], [1], [0, 0, 1, 1], [], []>} : vector<256x4xf32>, vector<4x8xf32>, vector<256x8xf32> -> vector<256x8xf32>
    %30 = vector.extract_strided_slice %6 {offsets = [0, 4], sizes = [256, 4], strides = [1, 1]} : vector<256x24xf32> to vector<256x4xf32>
    %31 = vector.shape_cast %30 : vector<256x4xf32> to vector<4x64x4xf32>
    %32 = vector.extract_strided_slice %6 {offsets = [0, 12], sizes = [256, 4], strides = [1, 1]} : vector<256x24xf32> to vector<256x4xf32>
    %33 = vector.shape_cast %32 : vector<256x4xf32> to vector<4x64x4xf32>
    %34 = vector.extract_strided_slice %6 {offsets = [0, 20], sizes = [256, 4], strides = [1, 1]} : vector<256x24xf32> to vector<256x4xf32>
    %35 = vector.shape_cast %34 : vector<256x4xf32> to vector<4x64x4xf32>
    "tpu.trace_start"() <{level = 10 : i32, message = "wnd,wmd->wnm"}> : () -> ()
    %cst_14 = arith.constant dense<0.000000e+00> : vector<4x64x64xf32>
    %36 = tpu.matmul %31, %33, %cst_14 {dimension_numbers = #tpu.dot_dimension_numbers<[2], [2], [1], [1], [0, 0, 0, 1, 1, 1], [0], [0]>} : vector<4x64x4xf32>, vector<4x64x4xf32>, vector<4x64x64xf32> -> vector<4x64x64xf32>
    "tpu.trace_stop"() : () -> ()
    %cst_15 = arith.constant 5.000000e-01 : f32
    %37 = vector.broadcast %cst_15 : f32 to vector<4x64x64xf32>
    %38 = arith.mulf %36, %37 : vector<4x64x64xf32>
    %cst_16 = arith.constant dense<0xFF800000> : vector<4x64xf32>
    %39 = vector.multi_reduction <maximumf>, %38, %cst_16 [2] : vector<4x64x64xf32> to vector<4x64xf32>
    %40 = vector.shape_cast %39 : vector<4x64xf32> to vector<4x64x1xf32>
    %41 = vector.broadcast %40 : vector<4x64x1xf32> to vector<4x64x64xf32>
    %42 = arith.subf %38, %41 : vector<4x64x64xf32>
    %43 = math.exp %42 : vector<4x64x64xf32>
    %cst_17 = arith.constant dense<0.000000e+00> : vector<4x64xf32>
    %44 = vector.multi_reduction <add>, %43, %cst_17 [2] : vector<4x64x64xf32> to vector<4x64xf32>
    %45 = vector.shape_cast %44 : vector<4x64xf32> to vector<4x64x1xf32>
    %46 = vector.broadcast %45 : vector<4x64x1xf32> to vector<4x64x64xf32>
    %47 = arith.divf %43, %46 : vector<4x64x64xf32>
    "tpu.trace_start"() <{level = 10 : i32, message = "wnm,wmd->wnd"}> : () -> ()
    %cst_18 = arith.constant dense<0.000000e+00> : vector<4x64x4xf32>
    %48 = tpu.matmul %47, %35, %cst_18 {dimension_numbers = #tpu.dot_dimension_numbers<[2], [1], [1], [2], [0, 0, 0, 1, 1, 2], [0], [0]>} : vector<4x64x64xf32>, vector<4x64x4xf32>, vector<4x64x4xf32> -> vector<4x64x4xf32>
    "tpu.trace_stop"() : () -> ()
    %49 = vector.shape_cast %48 : vector<4x64x4xf32> to vector<256x4xf32>
    %50 = vector.extract_strided_slice %7 {offsets = [4, 0], sizes = [4, 8], strides = [1, 1]} : vector<8x8xf32> to vector<4x8xf32>
    %cst_19 = arith.constant dense<0.000000e+00> : vector<256x8xf32>
    %51 = tpu.matmul %49, %50, %cst_19 {dimension_numbers = #tpu.dot_dimension_numbers<[1], [0], [0], [1], [0, 0, 1, 1], [], []>} : vector<256x4xf32>, vector<4x8xf32>, vector<256x8xf32> -> vector<256x8xf32>
    %52 = arith.addf %29, %51 : vector<256x8xf32>
    %c0_20 = arith.constant 0 : index
    %c0_21 = arith.constant 0 : index
    %53 = vector.load %arg5[%c0_20, %c0_21] : memref<1x8xf32, #tpu.memory_space<vmem>>, vector<1x8xf32>
    %54 = vector.broadcast %53 : vector<1x8xf32> to vector<256x8xf32>
    %55 = arith.addf %52, %54 : vector<256x8xf32>
    %56 = vector.shape_cast %55 : vector<256x8xf32> to vector<4x64x8xf32>
    %c0_22 = arith.constant 0 : index
    %c0_23 = arith.constant 0 : index
    %c0_24 = arith.constant 0 : index
    %57 = vector.load %arg6[%c0_22, %c0_23, %c0_24] : memref<4x64x8xf32, #tpu.memory_space<vmem>>, vector<4x64x8xf32>
    tpu.vector_store %arg6[%c0_22, %c0_23, %c0_24], %56 {strides = array<i32>} : memref<4x64x8xf32, #tpu.memory_space<vmem>>, vector<4x64x8xf32>,
    return
  }
  func.func @transform_0(%arg0: i32) -> (i32, i32, i32) {
    %c0_i32 = arith.constant 0 : i32
    %c0_i32_0 = arith.constant 0 : i32
    %c0_i32_1 = arith.constant 0 : i32
    return %arg0, %c0_i32, %c0_i32_0 : i32, i32, i32
  }
  func.func @transform_1(%arg0: i32) -> (i32, i32) {
    %c0_i32 = arith.constant 0 : i32
    %c0_i32_0 = arith.constant 0 : i32
    %c0_i32_1 = arith.constant 0 : i32
    return %c0_i32, %c0_i32_0 : i32, i32
  }
  func.func @transform_2(%arg0: i32) -> (i32, i32) {
    %c0_i32 = arith.constant 0 : i32
    %c0_i32_0 = arith.constant 0 : i32
    %c0_i32_1 = arith.constant 0 : i32
    return %c0_i32, %c0_i32_0 : i32, i32
  }
  func.func @transform_3(%arg0: i32) -> (i32, i32) {
    %c0_i32 = arith.constant 0 : i32
    %c0_i32_0 = arith.constant 0 : i32
    %c0_i32_1 = arith.constant 0 : i32
    return %c0_i32, %c0_i32_0 : i32, i32
  }
  func.func @transform_4(%arg0: i32) -> (i32, i32) {
    %c0_i32 = arith.constant 0 : i32
    %c0_i32_0 = arith.constant 0 : i32
    %c0_i32_1 = arith.constant 0 : i32
    return %c0_i32, %c0_i32_0 : i32, i32
  }
  func.func @transform_5(%arg0: i32) -> (i32, i32, i32) {
    %c0_i32 = arith.constant 0 : i32
    %c0_i32_0 = arith.constant 0 : i32
    %c0_i32_1 = arith.constant 0 : i32
    return %arg0, %c0_i32, %c0_i32_0 : i32, i32, i32
  }
}

</mosaic_0001>

<llo_original>
// kernel: tpu_custom_call.1
$region0: #{tpu_custom_call.1}
  #allocation0 [shape = 'u32[]', space=smem, size = 0x4, offset = 0x4, fixed_abs, tag = 'smem constant byte address 0x4 - core index']
  #allocation1 [shape = 'u32[144,128]{1,0:T(1,128)}', space=vmem, size = 0x12000, scoped, tag = 'internal scratch']
  %s0 = inlined_call_operand.vmem [shape: f32[8,64,8], index: 0, kind: input, shape index: {}]
  %s1 = inlined_call_operand.vmem [shape: f32[8,24], index: 1, kind: input, shape index: {}]
  %s2 = inlined_call_operand.vmem [shape: f32[1,24], index: 2, kind: input, shape index: {}]
  %s3 = inlined_call_operand.vmem [shape: f32[8,8], index: 3, kind: input, shape index: {}]
  %s4 = inlined_call_operand.vmem [shape: f32[1,8], index: 4, kind: input, shape index: {}]
  %s5 = inlined_call_operand.vmem [shape: f32[8,64,8], index: 5, kind: output, shape index: {}]
  %s6 = sld [smem:[#allocation0]]
  $region53: #{tpu_custom_call.1} parent=0
    _
  %s8 = ssub.s32 1, %s6
  %s9 = scalar_select 0, %s8, %s6
  loop: start=0, step=1, limit=4
  $region2: #{tpu_custom_call.1} parent=0 // loop_pre_header
    _
  $region3: #{tpu_custom_call.1} parent=0 // loop_header
    %s11 = sphi 0, %s15
    %p12 = scmp.ge.s32.totalorder %s11, 4
    %s21 = sphi 0, %s23
    %s24 = sphi 0, %s21
    %s25 = sphi 0, %s24
    %s41 = sphi 0, %s25
    %s45 = sphi 0, %s45
    %s47 = sphi 0, %s45
    %s48 = sphi 0, %s47
    %s62 = sphi 0, %s48
    %s66 = sphi 0, %s66
    %s68 = sphi 0, %s66
    %s69 = sphi 0, %s68
    %s83 = sphi 0, %s69
    %s87 = sphi 0, %s87
    %s89 = sphi 0, %s87
    %s90 = sphi 0, %s89
    %s104 = sphi 0, %s90
    %s108 = sphi 0, %s108
    %s110 = sphi 0, %s108
    %s111 = sphi 0, %s110
    %s125 = sphi 0, %s111
    %s131 = sphi 0, %s133
    %s134 = sphi 0, %s131
    %s135 = sphi 0, %s134
    %s151 = sphi 0, %s135
  $region4: #{tpu_custom_call.1} parent=0 // loop_header_branch
    %14 = sbr.rel (%p12) target = $region8
  $region5: #{tpu_custom_call.1} parent=0 // loop_body
    %s16 = ssub.s32 %s11, 1
    %s17 = ssub.s32 %s11, 2
    %s18 = sadd.s32 %s11, 1
    %s19 = ssub.s32 %s11, %s18
    %p20 = scmp.eq.s32.totalorder %s19, 0
    %s22 = sadd.s32 %s21, 1
    %s23 = scalar_select %p20, %s21, %s22
    %p26 = pneg %p20
    %p27 = scmp.eq.s32.totalorder %s11, 1
    %p28 = por %p26, %p27
    %p29 = scmp.ne.s32.totalorder %s21, %s24
    %p30 = scmp.eq.s32.totalorder %s11, 0
    %p31 = por %p29, %p30
    %p32 = scmp.ne.s32.totalorder %s21, %s24
    %p33 = scmp.eq.s32.totalorder %s16, 1
    %p34 = por %p32, %p33
    %p35 = scmp.ne.s32.totalorder %s24, %s25
    %p36 = scmp.eq.s32.totalorder %s16, 0
    %p37 = por %p35, %p36
    %p38 = scmp.ne.s32.totalorder %s24, %s25
    %p39 = scmp.eq.s32.totalorder %s17, 1
    %p40 = por %p38, %p39
    %p42 = scmp.ne.s32.totalorder %s25, %s41
    %p43 = scmp.eq.s32.totalorder %s17, 0
    %p44 = por %p42, %p43
    %s46 = sadd.s32 %s45, 1
    %p49 = scmp.eq.s32.totalorder %s11, 1
    %p50 = scmp.ne.s32.totalorder %s45, %s47
    %p51 = scmp.eq.s32.totalorder %s11, 0
    %p52 = por %p50, %p51
    %p53 = scmp.ne.s32.totalorder %s45, %s47
    %p54 = scmp.eq.s32.totalorder %s16, 1
    %p55 = por %p53, %p54
    %p56 = scmp.ne.s32.totalorder %s47, %s48
    %p57 = scmp.eq.s32.totalorder %s16, 0
    %p58 = por %p56, %p57
    %p59 = scmp.ne.s32.totalorder %s47, %s48
    %p60 = scmp.eq.s32.totalorder %s17, 1
    %p61 = por %p59, %p60
    %p63 = scmp.ne.s32.totalorder %s48, %s62
    %p64 = scmp.eq.s32.totalorder %s17, 0
    %p65 = por %p63, %p64
    %s67 = sadd.s32 %s66, 1
    %p70 = scmp.eq.s32.totalorder %s11, 1
    %p71 = scmp.ne.s32.totalorder %s66, %s68
    %p72 = scmp.eq.s32.totalorder %s11, 0
    %p73 = por %p71, %p72
    %p74 = scmp.ne.s32.totalorder %s66, %s68
    %p75 = scmp.eq.s32.totalorder %s16, 1
    %p76 = por %p74, %p75
    %p77 = scmp.ne.s32.totalorder %s68, %s69
    %p78 = scmp.eq.s32.totalorder %s16, 0
    %p79 = por %p77, %p78
    %p80 = scmp.ne.s32.totalorder %s68, %s69
    %p81 = scmp.eq.s32.totalorder %s17, 1
    %p82 = por %p80, %p81
    %p84 = scmp.ne.s32.totalorder %s69, %s83
    %p85 = scmp.eq.s32.totalorder %s17, 0
    %p86 = por %p84, %p85
    %s88 = sadd.s32 %s87, 1
    %p91 = scmp.eq.s32.totalorder %s11, 1
    %p92 = scmp.ne.s32.totalorder %s87, %s89
    %p93 = scmp.eq.s32.totalorder %s11, 0
    %p94 = por %p92, %p93
    %p95 = scmp.ne.s32.totalorder %s87, %s89
    %p96 = scmp.eq.s32.totalorder %s16, 1
    %p97 = por %p95, %p96
    %p98 = scmp.ne.s32.totalorder %s89, %s90
    %p99 = scmp.eq.s32.totalorder %s16, 0
    %p100 = por %p98, %p99
    %p101 = scmp.ne.s32.totalorder %s89, %s90
    %p102 = scmp.eq.s32.totalorder %s17, 1
    %p103 = por %p101, %p102
    %p105 = scmp.ne.s32.totalorder %s90, %s104
    %p106 = scmp.eq.s32.totalorder %s17, 0
    %p107 = por %p105, %p106
    %s109 = sadd.s32 %s108, 1
    %p112 = scmp.eq.s32.totalorder %s11, 1
    %p113 = scmp.ne.s32.totalorder %s108, %s110
    %p114 = scmp.eq.s32.totalorder %s11, 0
    %p115 = por %p113, %p114
    %p116 = scmp.ne.s32.totalorder %s108, %s110
    %p117 = scmp.eq.s32.totalorder %s16, 1
    %p118 = por %p116, %p117
    %p119 = scmp.ne.s32.totalorder %s110, %s111
    %p120 = scmp.eq.s32.totalorder %s16, 0
    %p121 = por %p119, %p120
    %p122 = scmp.ne.s32.totalorder %s110, %s111
    %p123 = scmp.eq.s32.totalorder %s17, 1
    %p124 = por %p122, %p123
    %p126 = scmp.ne.s32.totalorder %s111, %s125
    %p127 = scmp.eq.s32.totalorder %s17, 0
    %p128 = por %p126, %p127
    %s129 = ssub.s32 %s11, %s18
    %p130 = scmp.eq.s32.totalorder %s129, 0
    %s132 = sadd.s32 %s131, 1
    %s133 = scalar_select %p130, %s131, %s132
    %p136 = pneg %p130
    %p137 = scmp.eq.s32.totalorder %s11, 1
    %p138 = por %p136, %p137
    %p139 = scmp.ne.s32.totalorder %s131, %s134
    %p140 = scmp.eq.s32.totalorder %s11, 0
    %p141 = por %p139, %p140
    %p142 = scmp.ne.s32.totalorder %s131, %s134
    %p143 = scmp.eq.s32.totalorder %s16, 1
    %p144 = por %p142, %p143
    %p145 = scmp.ne.s32.totalorder %s134, %s135
    %p146 = scmp.eq.s32.totalorder %s16, 0
    %p147 = por %p145, %p146
    %p148 = scmp.ne.s32.totalorder %s134, %s135
    %p149 = scmp.eq.s32.totalorder %s17, 1
    %p150 = por %p148, %p149
    %p152 = scmp.ne.s32.totalorder %s135, %s151
    %p153 = scmp.eq.s32.totalorder %s17, 0
    %p154 = por %p152, %p153
    %p155 = scmp.le.s32.totalorder 1, %s11
    %p156 = scmp.lt.s32.totalorder %s11, 3
    %p157 = pnand %p155, %p156
    %p158 = pneg %p157
    // Predicated region
    $region9: #{tpu_custom_call.1} parent=5 // pred_check
      _
    $region10: #{tpu_custom_call.1} parent=5 // pred_check_branch
      %160 = sbr.rel (%p157) target = $region12
    $region11: #{tpu_custom_call.1} parent=5 // pred_region
      %s161 = ssub.s32 %s11, 1
      // Predicated region
      $region13: #{tpu_custom_call.1} parent=11 // pred_check
        %p162 = pneg %p58
      $region14: #{tpu_custom_call.1} parent=11 // pred_check_branch
        %164 = sbr.rel (%p162) target = $region16
      $region15: #{tpu_custom_call.1} parent=11 // pred_region
        _
      $region16: #{tpu_custom_call.1} parent=11 // pred_fallthru
        _
      // Predicated region
      $region17: #{tpu_custom_call.1} parent=11 // pred_check
        %p165 = pneg %p79
      $region18: #{tpu_custom_call.1} parent=11 // pred_check_branch
        %167 = sbr.rel (%p165) target = $region20
      $region19: #{tpu_custom_call.1} parent=11 // pred_region
        _
      $region20: #{tpu_custom_call.1} parent=11 // pred_fallthru
        _
      // Predicated region
      $region21: #{tpu_custom_call.1} parent=11 // pred_check
        %p168 = pneg %p100
      $region22: #{tpu_custom_call.1} parent=11 // pred_check_branch
        %170 = sbr.rel (%p168) target = $region24
      $region23: #{tpu_custom_call.1} parent=11 // pred_region
        _
      $region24: #{tpu_custom_call.1} parent=11 // pred_fallthru
        _
      // Predicated region
      $region25: #{tpu_custom_call.1} parent=11 // pred_check
        %p171 = pneg %p121
      $region26: #{tpu_custom_call.1} parent=11 // pred_check_branch
        %173 = sbr.rel (%p171) target = $region28
      $region27: #{tpu_custom_call.1} parent=11 // pred_region
        _
      $region28: #{tpu_custom_call.1} parent=11 // pred_fallthru
        _
    $region12: #{tpu_custom_call.1} parent=5 // pred_fallthru
      _
    %p174 = scmp.lt.s32.totalorder %s11, 2
    // Predicated region
    $region29: #{tpu_custom_call.1} parent=5 // pred_check
      %p175 = pneg %p174
    $region30: #{tpu_custom_call.1} parent=5 // pred_check_branch
      %177 = sbr.rel (%p175) target = $region32
    $region31: #{tpu_custom_call.1} parent=5 // pred_region
      // Predicated region
      $region33: #{tpu_custom_call.1} parent=31 // pred_check
        %p178 = pneg %p31
      $region34: #{tpu_custom_call.1} parent=31 // pred_check_branch
        %180 = sbr.rel (%p178) target = $region36
      $region35: #{tpu_custom_call.1} parent=31 // pred_region
        %s181 = smul.u32 4, %s11
        %p182 = scmp.lt.s32.totalorder %s181, 7
        %s183 = scalar_select %p182, %s181, 7
        %s184 = smul.addr %s183, 8
        %s185 = smul.addr %s184, 8
        %s186 = scalar_lea.vmem %s0, %s185
        %s187 = smul.u32 4, %s11
      $region36: #{tpu_custom_call.1} parent=31 // pred_fallthru
        _
    $region32: #{tpu_custom_call.1} parent=5 // pred_fallthru
      _
    %p188 = scmp.le.s32.totalorder 1, %s11
    %p189 = scmp.lt.s32.totalorder %s11, 3
    %p190 = pnand %p188, %p189
    %p191 = pneg %p190
    // Predicated region
    $region37: #{tpu_custom_call.1} parent=5 // pred_check
      _
    $region38: #{tpu_custom_call.1} parent=5 // pred_check_branch
      %193 = sbr.rel (%p190) target = $region40
    $region39: #{tpu_custom_call.1} parent=5 // pred_region
      %s194 = ssub.s32 %s11, 1
      %s195 = smul.u32 4, %s16
      %p196 = scmp.lt.s32.totalorder %s195, 7
      %s197 = scalar_select %p196, %s195, 7
      %s198 = smul.addr %s197, 8
      %s199 = smul.addr %s198, 8
      %s200 = scalar_lea.vmem %s0, %s199
      %p201 = pneg %p37
      %p202 = pneg %p34
      %p203 = pneg %p58
      %p204 = pneg %p55
      %p205 = pneg %p79
      %p206 = pneg %p76
      %p207 = pneg %p100
      %p208 = pneg %p97
      %p209 = pneg %p121
      %p210 = pneg %p118
      %p211 = pneg %p147
      %p212 = pneg %p144
      %s213 = smul.u32 4, %s16
      %p214 = scmp.lt.s32.totalorder %s213, 7
      %s215 = scalar_select %p214, %s213, 7
      %s216 = smul.addr %s215, 8
      %s217 = smul.addr %s216, 8
      %s218 = scalar_lea.vmem %s5, %s217
      %s219 = smul.u32 4, %s16
      %p220 = scmp.lt.s32.totalorder %s219, 7
      %s221 = scalar_select %p220, %s219, 7
      %s222 = smul.addr %s221, 8
      %s223 = smul.addr %s222, 8
      %s224 = scalar_lea.vmem %s0, %s223
      %s225 = smul.u32 4, %s16
      %s226 = smul.u32 4, %s16
      %p227 = scmp.lt.s32.totalorder %s226, 7
      %s228 = scalar_select %p227, %s226, 7
      %s229 = smul.addr %s228, 8
      %s230 = smul.addr %s229, 8
      %s231 = scalar_lea.vmem %s5, %s230
      %s232 = smul.u32 4, %s16
      %v233 = vld [vmem:[%s224] sm:$0xff]
      %v234 = vld [vmem:[%s224 + $0x8] sm:$0xff]
      %v235 = vld [vmem:[%s224 + $0x10] sm:$0xff]
      %v236 = vld [vmem:[%s224 + $0x18] sm:$0xff]
      %v237 = vld [vmem:[%s224 + $0x20] sm:$0xff]
      %v238 = vld [vmem:[%s224 + $0x28] sm:$0xff]
      %v239 = vld [vmem:[%s224 + $0x30] sm:$0xff]
      %v240 = vld [vmem:[%s224 + $0x38] sm:$0xff]
      %v241 = vld [vmem:[%s224 + $0x40] sm:$0xff]
      %v242 = vld [vmem:[%s224 + $0x48] sm:$0xff]
      %v243 = vld [vmem:[%s224 + $0x50] sm:$0xff]
      %v244 = vld [vmem:[%s224 + $0x58] sm:$0xff]
      %v245 = vld [vmem:[%s224 + $0x60] sm:$0xff]
      %v246 = vld [vmem:[%s224 + $0x68] sm:$0xff]
      %v247 = vld [vmem:[%s224 + $0x70] sm:$0xff]
      %v248 = vld [vmem:[%s224 + $0x78] sm:$0xff]
      %v249 = vld [vmem:[%s224 + $0x80] sm:$0xff]
      %v250 = vld [vmem:[%s224 + $0x88] sm:$0xff]
      %v251 = vld [vmem:[%s224 + $0x90] sm:$0xff]
      %v252 = vld [vmem:[%s224 + $0x98] sm:$0xff]
      %v253 = vld [vmem:[%s224 + $0xa0] sm:$0xff]
      %v254 = vld [vmem:[%s224 + $0xa8] sm:$0xff]
      %v255 = vld [vmem:[%s224 + $0xb0] sm:$0xff]
      %v256 = vld [vmem:[%s224 + $0xb8] sm:$0xff]
      %v257 = vld [vmem:[%s224 + $0xc0] sm:$0xff]
      %v258 = vld [vmem:[%s224 + $0xc8] sm:$0xff]
      %v259 = vld [vmem:[%s224 + $0xd0] sm:$0xff]
      %v260 = vld [vmem:[%s224 + $0xd8] sm:$0xff]
      %v261 = vld [vmem:[%s224 + $0xe0] sm:$0xff]
      %v262 = vld [vmem:[%s224 + $0xe8] sm:$0xff]
      %v263 = vld [vmem:[%s224 + $0xf0] sm:$0xff]
      %v264 = vld [vmem:[%s224 + $0xf8] sm:$0xff]
      %v265 = vld [vmem:[%s1] sm:$0xff]
      %v266 = vld [vmem:[%s2] sm:$0x1]
      %v268 = vlaneseq
      %v269 = vshrl.u32 %v268, 7
      %v270 = vsub.s32 0, %v269
      %v271 = vrot.slane %v266, %v270
      %vm273 = vcmask 64512
      %v275 = vsel %vm273, %v233, 0
      %v278 = vsel %vm273, %v234, 0
      %v281 = vsel %vm273, %v235, 0
      %v284 = vsel %vm273, %v236, 0
      %v287 = vsel %vm273, %v237, 0
      %v290 = vsel %vm273, %v238, 0
      %v293 = vsel %vm273, %v239, 0
      %v296 = vsel %vm273, %v240, 0
      %v299 = vsel %vm273, %v241, 0
      %v302 = vsel %vm273, %v242, 0
      %v305 = vsel %vm273, %v243, 0
      %v308 = vsel %vm273, %v244, 0
      %v311 = vsel %vm273, %v245, 0
      %v314 = vsel %vm273, %v246, 0
      %v317 = vsel %vm273, %v247, 0
      %v320 = vsel %vm273, %v248, 0
      %v323 = vsel %vm273, %v249, 0
      %v326 = vsel %vm273, %v250, 0
      %v329 = vsel %vm273, %v251, 0
      %v332 = vsel %vm273, %v252, 0
      %v335 = vsel %vm273, %v253, 0
      %v338 = vsel %vm273, %v254, 0
      %v341 = vsel %vm273, %v255, 0
      %v344 = vsel %vm273, %v256, 0
      %v347 = vsel %vm273, %v257, 0
      %v350 = vsel %vm273, %v258, 0
      %v353 = vsel %vm273, %v259, 0
      %v356 = vsel %vm273, %v260, 0
      %v359 = vsel %vm273, %v261, 0
      %v362 = vsel %vm273, %v262, 0
      %v365 = vsel %vm273, %v263, 0
      %v368 = vsel %vm273, %v264, 0
      %370 = vmatprep.subr.mxu0 0.0
      %371 = vmatpush1.msra.mxu0 0.0
      %372 = vmatprep.subr.mxu0 0.0
      %373 = vmatpush1.msra.mxu0 0.0
      %374 = vmatprep.subr.mxu0 0.0
      %375 = vmatpush1.msra.mxu0 0.0
      %376 = vmatprep.subr.mxu0 0.0
      %377 = vmatpush1.msra.mxu0 0.0
      %378 = vmatprep.subr.mxu0 0.0
      %379 = vmatpush1.msra.mxu0 0.0
      %380 = vmatprep.subr.mxu0 0.0
      %381 = vmatpush1.msra.mxu0 0.0
      %382 = vmatprep.subr.mxu0 0.0
      %383 = vmatpush1.msra.mxu0 0.0
      %384 = vmatprep.subr.mxu0 0.0
      %385 = vmatpush1.msra.mxu0 0.0
      %386 = vmatprep.subr.mxu0 0.0
      %387 = vmatpush1.msra.mxu0 0.0
      %388 = vmatprep.subr.mxu0 0.0
      %389 = vmatpush1.msra.mxu0 0.0
      %390 = vmatprep.subr.mxu0 0.0
      %391 = vmatpush1.msra.mxu0 0.0
      %392 = vmatprep.subr.mxu0 0.0
      %393 = vmatpush1.msra.mxu0 0.0
      %394 = vmatprep.subr.mxu0 0.0
      %395 = vmatpush1.msra.mxu0 0.0
      %396 = vmatprep.subr.mxu0 0.0
      %397 = vmatpush1.msra.mxu0 0.0
      %398 = vmatprep.subr.mxu0 0.0
      %399 = vmatpush1.msra.mxu0 0.0
      %400 = vmatprep.subr.mxu0 0.0
      %401 = vmatpush1.msra.mxu0 %v265
      %402 = vmatprep.subr.mxu0 0.0
      %403 = vmatpush2.msra.mxu0 0.0
      %404 = vmatprep.subr.mxu0 0.0
      %405 = vmatpush2.msra.mxu0 0.0
      %406 = vmatprep.subr.mxu0 0.0
      %407 = vmatpush2.msra.mxu0 0.0
      %408 = vmatprep.subr.mxu0 0.0
      %409 = vmatpush2.msra.mxu0 0.0
      %410 = vmatprep.subr.mxu0 0.0
      %411 = vmatpush2.msra.mxu0 0.0
      %412 = vmatprep.subr.mxu0 0.0
      %413 = vmatpush2.msra.mxu0 0.0
      %414 = vmatprep.subr.mxu0 0.0
      %415 = vmatpush2.msra.mxu0 0.0
      %416 = vmatprep.subr.mxu0 0.0
      %417 = vmatpush2.msra.mxu0 0.0
      %418 = vmatprep.subr.mxu0 0.0
      %419 = vmatpush2.msra.mxu0 0.0
      %420 = vmatprep.subr.mxu0 0.0
      %421 = vmatpush2.msra.mxu0 0.0
      %422 = vmatprep.subr.mxu0 0.0
      %423 = vmatpush2.msra.mxu0 0.0
      %424 = vmatprep.subr.mxu0 0.0
      %425 = vmatpush2.msra.mxu0 0.0
      %426 = vmatprep.subr.mxu0 0.0
      %427 = vmatpush2.msra.mxu0 0.0
      %428 = vmatprep.subr.mxu0 0.0
      %429 = vmatpush2.msra.mxu0 0.0
      %430 = vmatprep.subr.mxu0 0.0
      %431 = vmatpush2.msra.mxu0 0.0
      %432 = vmatprep.subr.mxu0 0.0
      %433 = vmatpush2.msra.mxu0 0.0
      %434 = vmatprep.mubr.f32.mxu0 0.0
      %435 = vmatmul.mubr.f32.gmra.mxu0 %v275
      %v436 = vpop.f32.mrf.mxu0
      %v437 = vadd.f32 %v271, %v436
      %v438 = vpop.f32.mrf.mxu0
      %439 = vmatprep.mubr.f32.mxu0 0.0
      %440 = vmatmul.mubr.f32.gmra.mxu0 %v278
      %v441 = vpop.f32.mrf.mxu0
      %v442 = vadd.f32 %v271, %v441
      %v443 = vpop.f32.mrf.mxu0
      %444 = vmatprep.mubr.f32.mxu0 0.0
      %445 = vmatmul.mubr.f32.gmra.mxu0 %v281
      %v446 = vpop.f32.mrf.mxu0
      %v447 = vadd.f32 %v271, %v446
      %v448 = vpop.f32.mrf.mxu0
      %449 = vmatprep.mubr.f32.mxu0 0.0
      %450 = vmatmul.mubr.f32.gmra.mxu0 %v284
      %v451 = vpop.f32.mrf.mxu0
      %v452 = vadd.f32 %v271, %v451
      %v453 = vpop.f32.mrf.mxu0
      %454 = vmatprep.mubr.f32.mxu0 0.0
      %455 = vmatmul.mubr.f32.gmra.mxu0 %v287
      %v456 = vpop.f32.mrf.mxu0
      %v457 = vadd.f32 %v271, %v456
      %v458 = vpop.f32.mrf.mxu0
      %459 = vmatprep.mubr.f32.mxu0 0.0
      %460 = vmatmul.mubr.f32.gmra.mxu0 %v290
      %v461 = vpop.f32.mrf.mxu0
      %v462 = vadd.f32 %v271, %v461
      %v463 = vpop.f32.mrf.mxu0
      %464 = vmatprep.mubr.f32.mxu0 0.0
      %465 = vmatmul.mubr.f32.gmra.mxu0 %v293
      %v466 = vpop.f32.mrf.mxu0
      %v467 = vadd.f32 %v271, %v466
      %v468 = vpop.f32.mrf.mxu0
      %469 = vmatprep.mubr.f32.mxu0 0.0
      %470 = vmatmul.mubr.f32.gmra.mxu0 %v296
      %v471 = vpop.f32.mrf.mxu0
      %v472 = vadd.f32 %v271, %v471
      %v473 = vpop.f32.mrf.mxu0
      %474 = vmatprep.mubr.f32.mxu0 0.0
      %475 = vmatmul.mubr.f32.gmra.mxu0 %v299
      %v476 = vpop.f32.mrf.mxu0
      %v477 = vadd.f32 %v271, %v476
      %v478 = vpop.f32.mrf.mxu0
      %479 = vmatprep.mubr.f32.mxu0 0.0
      %480 = vmatmul.mubr.f32.gmra.mxu0 %v302
      %v481 = vpop.f32.mrf.mxu0
      %v482 = vadd.f32 %v271, %v481
      %v483 = vpop.f32.mrf.mxu0
      %484 = vmatprep.mubr.f32.mxu0 0.0
      %485 = vmatmul.mubr.f32.gmra.mxu0 %v305
      %v486 = vpop.f32.mrf.mxu0
      %v487 = vadd.f32 %v271, %v486
      %v488 = vpop.f32.mrf.mxu0
      %489 = vmatprep.mubr.f32.mxu0 0.0
      %490 = vmatmul.mubr.f32.gmra.mxu0 %v308
      %v491 = vpop.f32.mrf.mxu0
      %v492 = vadd.f32 %v271, %v491
      %v493 = vpop.f32.mrf.mxu0
      %494 = vmatprep.mubr.f32.mxu0 0.0
      %495 = vmatmul.mubr.f32.gmra.mxu0 %v311
      %v496 = vpop.f32.mrf.mxu0
      %v497 = vadd.f32 %v271, %v496
      %v498 = vpop.f32.mrf.mxu0
      %499 = vmatprep.mubr.f32.mxu0 0.0
      %500 = vmatmul.mubr.f32.gmra.mxu0 %v314
      %v501 = vpop.f32.mrf.mxu0
      %v502 = vadd.f32 %v271, %v501
      %v503 = vpop.f32.mrf.mxu0
      %504 = vmatprep.mubr.f32.mxu0 0.0
      %505 = vmatmul.mubr.f32.gmra.mxu0 %v317
      %v506 = vpop.f32.mrf.mxu0
      %v507 = vadd.f32 %v271, %v506
      %v508 = vpop.f32.mrf.mxu0
      %509 = vmatprep.mubr.f32.mxu0 0.0
      %510 = vmatmul.mubr.f32.gmra.mxu0 %v320
      %v511 = vpop.f32.mrf.mxu0
      %v512 = vadd.f32 %v271, %v511
      %v513 = vpop.f32.mrf.mxu0
      %514 = vmatprep.mubr.f32.mxu0 0.0
      %515 = vmatmul.mubr.f32.gmra.mxu0 %v323
      %v516 = vpop.f32.mrf.mxu0
      %v517 = vadd.f32 %v271, %v516
      %v518 = vpop.f32.mrf.mxu0
      %519 = vmatprep.mubr.f32.mxu0 0.0
      %520 = vmatmul.mubr.f32.gmra.mxu0 %v326
      %v521 = vpop.f32.mrf.mxu0
      %v522 = vadd.f32 %v271, %v521
      %v523 = vpop.f32.mrf.mxu0
      %524 = vmatprep.mubr.f32.mxu0 0.0
      %525 = vmatmul.mubr.f32.gmra.mxu0 %v329
      %v526 = vpop.f32.mrf.mxu0
      %v527 = vadd.f32 %v271, %v526
      %v528 = vpop.f32.mrf.mxu0
      %529 = vmatprep.mubr.f32.mxu0 0.0
      %530 = vmatmul.mubr.f32.gmra.mxu0 %v332
      %v531 = vpop.f32.mrf.mxu0
      %v532 = vadd.f32 %v271, %v531
      %v533 = vpop.f32.mrf.mxu0
      %534 = vmatprep.mubr.f32.mxu0 0.0
      %535 = vmatmul.mubr.f32.gmra.mxu0 %v335
      %v536 = vpop.f32.mrf.mxu0
      %v537 = vadd.f32 %v271, %v536
      %v538 = vpop.f32.mrf.mxu0
      %539 = vmatprep.mubr.f32.mxu0 0.0
      %540 = vmatmul.mubr.f32.gmra.mxu0 %v338
      %v541 = vpop.f32.mrf.mxu0
      %v542 = vadd.f32 %v271, %v541
      %v543 = vpop.f32.mrf.mxu0
      %544 = vmatprep.mubr.f32.mxu0 0.0
      %545 = vmatmul.mubr.f32.gmra.mxu0 %v341
      %v546 = vpop.f32.mrf.mxu0
      %v547 = vadd.f32 %v271, %v546
      %v548 = vpop.f32.mrf.mxu0
      %549 = vmatprep.mubr.f32.mxu0 0.0
      %550 = vmatmul.mubr.f32.gmra.mxu0 %v344
      %v551 = vpop.f32.mrf.mxu0
      %v552 = vadd.f32 %v271, %v551
      %v553 = vpop.f32.mrf.mxu0
      %554 = vmatprep.mubr.f32.mxu0 0.0
      %555 = vmatmul.mubr.f32.gmra.mxu0 %v347
      %v556 = vpop.f32.mrf.mxu0
      %v557 = vadd.f32 %v271, %v556
      %v558 = vpop.f32.mrf.mxu0
      %559 = vmatprep.mubr.f32.mxu0 0.0
      %560 = vmatmul.mubr.f32.gmra.mxu0 %v350
      %v561 = vpop.f32.mrf.mxu0
      %v562 = vadd.f32 %v271, %v561
      %v563 = vpop.f32.mrf.mxu0
      %564 = vmatprep.mubr.f32.mxu0 0.0
      %565 = vmatmul.mubr.f32.gmra.mxu0 %v353
      %v566 = vpop.f32.mrf.mxu0
      %v567 = vadd.f32 %v271, %v566
      %v568 = vpop.f32.mrf.mxu0
      %569 = vmatprep.mubr.f32.mxu0 0.0
      %570 = vmatmul.mubr.f32.gmra.mxu0 %v356
      %v571 = vpop.f32.mrf.mxu0
      %v572 = vadd.f32 %v271, %v571
      %v573 = vpop.f32.mrf.mxu0
      %574 = vmatprep.mubr.f32.mxu0 0.0
      %575 = vmatmul.mubr.f32.gmra.mxu0 %v359
      %v576 = vpop.f32.mrf.mxu0
      %v577 = vadd.f32 %v271, %v576
      %v578 = vpop.f32.mrf.mxu0
      %579 = vmatprep.mubr.f32.mxu0 0.0
      %580 = vmatmul.mubr.f32.gmra.mxu0 %v362
      %v581 = vpop.f32.mrf.mxu0
      %v582 = vadd.f32 %v271, %v581
      %v583 = vpop.f32.mrf.mxu0
      %584 = vmatprep.mubr.f32.mxu0 0.0
      %585 = vmatmul.mubr.f32.gmra.mxu0 %v365
      %v586 = vpop.f32.mrf.mxu0
      %v587 = vadd.f32 %v271, %v586
      %v588 = vpop.f32.mrf.mxu0
      %589 = vmatprep.mubr.f32.mxu0 0.0
      %590 = vmatmul.mubr.f32.gmra.mxu0 %v368
      %v591 = vpop.f32.mrf.mxu0
      %v592 = vadd.f32 %v271, %v591
      %v593 = vpop.f32.mrf.mxu0
      %594 = vdwg.mxu0
      %v595 = vld [vmem:[%s3] sm:$0xff]
      %604 = vrot.lane.b32.xlu0 %v437, 120
      %v605 = vpop.permute.xlu0 %604
      %606 = vrot.lane.b32.xlu0 %v442, 120
      %v607 = vpop.permute.xlu0 %606
      %608 = vrot.lane.b32.xlu0 %v447, 120
      %v609 = vpop.permute.xlu0 %608
      %610 = vrot.lane.b32.xlu0 %v452, 120
      %v611 = vpop.permute.xlu0 %610
      %612 = vrot.lane.b32.xlu0 %v457, 120
      %v613 = vpop.permute.xlu0 %612
      %614 = vrot.lane.b32.xlu0 %v462, 120
      %v615 = vpop.permute.xlu0 %614
      %616 = vrot.lane.b32.xlu0 %v467, 120
      %v617 = vpop.permute.xlu0 %616
      %618 = vrot.lane.b32.xlu0 %v472, 120
      %v619 = vpop.permute.xlu0 %618
      %vm620 = vcmask 31744
      %v621 = vsel %vm620, %v437, 0
      %v623 = vsel %vm620, %v442, 0
      %v625 = vsel %vm620, %v447, 0
      %v627 = vsel %vm620, %v452, 0
      %v629 = vsel %vm620, %v457, 0
      %v631 = vsel %vm620, %v462, 0
      %v633 = vsel %vm620, %v467, 0
      %v635 = vsel %vm620, %v472, 0
      %v637 = vsel %vm620, %v605, 0
      %v639 = vsel %vm620, %v607, 0
      %v641 = vsel %vm620, %v609, 0
      %v643 = vsel %vm620, %v611, 0
      %v645 = vsel %vm620, %v613, 0
      %v647 = vsel %vm620, %v615, 0
      %v649 = vsel %vm620, %v617, 0
      %v651 = vsel %vm620, %v619, 0
      %653 = vmatprep.subr.mxu0 0.0
      %654 = vmatpush1.xpose.msra.mxu0 0.0
      %655 = vmatprep.subr.mxu0 0.0
      %656 = vmatpush1.xpose.msra.mxu0 0.0
      %657 = vmatprep.subr.mxu0 0.0
      %658 = vmatpush1.xpose.msra.mxu0 0.0
      %659 = vmatprep.subr.mxu0 0.0
      %660 = vmatpush1.xpose.msra.mxu0 0.0
      %661 = vmatprep.subr.mxu0 0.0
      %662 = vmatpush1.xpose.msra.mxu0 0.0
      %663 = vmatprep.subr.mxu0 0.0
      %664 = vmatpush1.xpose.msra.mxu0 0.0
      %665 = vmatprep.subr.mxu0 0.0
      %666 = vmatpush1.xpose.msra.mxu0 0.0
      %667 = vmatprep.subr.mxu0 0.0
      %668 = vmatpush1.xpose.msra.mxu0 0.0
      %669 = vmatprep.subr.mxu0 0.0
      %670 = vmatpush1.xpose.msra.mxu0 %v651
      %671 = vmatprep.subr.mxu0 0.0
      %672 = vmatpush1.xpose.msra.mxu0 %v649
      %673 = vmatprep.subr.mxu0 0.0
      %674 = vmatpush1.xpose.msra.mxu0 %v647
      %675 = vmatprep.subr.mxu0 0.0
      %676 = vmatpush1.xpose.msra.mxu0 %v645
      %677 = vmatprep.subr.mxu0 0.0
      %678 = vmatpush1.xpose.msra.mxu0 %v643
      %679 = vmatprep.subr.mxu0 0.0
      %680 = vmatpush1.xpose.msra.mxu0 %v641
      %681 = vmatprep.subr.mxu0 0.0
      %682 = vmatpush1.xpose.msra.mxu0 %v639
      %683 = vmatprep.subr.mxu0 0.0
      %684 = vmatpush1.xpose.msra.mxu0 %v637
      %685 = vmatprep.subr.mxu0 0.0
      %686 = vmatpush2.xpose.msra.mxu0 0.0
      %687 = vmatprep.subr.mxu0 0.0
      %688 = vmatpush2.xpose.msra.mxu0 0.0
      %689 = vmatprep.subr.mxu0 0.0
      %690 = vmatpush2.xpose.msra.mxu0 0.0
      %691 = vmatprep.subr.mxu0 0.0
      %692 = vmatpush2.xpose.msra.mxu0 0.0
      %693 = vmatprep.subr.mxu0 0.0
      %694 = vmatpush2.xpose.msra.mxu0 0.0
      %695 = vmatprep.subr.mxu0 0.0
      %696 = vmatpush2.xpose.msra.mxu0 0.0
      %697 = vmatprep.subr.mxu0 0.0
      %698 = vmatpush2.xpose.msra.mxu0 0.0
      %699 = vmatprep.subr.mxu0 0.0
      %700 = vmatpush2.xpose.msra.mxu0 0.0
      %701 = vmatprep.subr.mxu0 0.0
      %702 = vmatpush2.xpose.msra.mxu0 0.0
      %703 = vmatprep.subr.mxu0 0.0
      %704 = vmatpush2.xpose.msra.mxu0 0.0
      %705 = vmatprep.subr.mxu0 0.0
      %706 = vmatpush2.xpose.msra.mxu0 0.0
      %707 = vmatprep.subr.mxu0 0.0
      %708 = vmatpush2.xpose.msra.mxu0 0.0
      %709 = vmatprep.subr.mxu0 0.0
      %710 = vmatpush2.xpose.msra.mxu0 0.0
      %711 = vmatprep.subr.mxu0 0.0
      %712 = vmatpush2.xpose.msra.mxu0 0.0
      %713 = vmatprep.subr.mxu0 0.0
      %714 = vmatpush2.xpose.msra.mxu0 0.0
      %715 = vmatprep.subr.mxu0 0.0
      %716 = vmatpush2.xpose.msra.mxu0 0.0
      %717 = vmatprep.mubr.f32.mxu0 0.0
      %718 = vmatmul.mubr.f32.gmra.mxu0 %v621
      %v719 = vpop.f32.mrf.mxu0
      %v720 = vadd.f32 0.0, %v719
      %v721 = vpop.f32.mrf.mxu0
      %722 = vmatprep.mubr.f32.mxu0 0.0
      %723 = vmatmul.mubr.f32.gmra.mxu0 %v623
      %v724 = vpop.f32.mrf.mxu0
      %v725 = vadd.f32 0.0, %v724
      %v726 = vpop.f32.mrf.mxu0
      %727 = vmatprep.mubr.f32.mxu0 0.0
      %728 = vmatmul.mubr.f32.gmra.mxu0 %v625
      %v729 = vpop.f32.mrf.mxu0
      %v730 = vadd.f32 0.0, %v729
      %v731 = vpop.f32.mrf.mxu0
      %732 = vmatprep.mubr.f32.mxu0 0.0
      %733 = vmatmul.mubr.f32.gmra.mxu0 %v627
      %v734 = vpop.f32.mrf.mxu0
      %v735 = vadd.f32 0.0, %v734
      %v736 = vpop.f32.mrf.mxu0
      %737 = vmatprep.mubr.f32.mxu0 0.0
      %738 = vmatmul.mubr.f32.gmra.mxu0 %v629
      %v739 = vpop.f32.mrf.mxu0
      %v740 = vadd.f32 0.0, %v739
      %v741 = vpop.f32.mrf.mxu0
      %742 = vmatprep.mubr.f32.mxu0 0.0
      %743 = vmatmul.mubr.f32.gmra.mxu0 %v631
      %v744 = vpop.f32.mrf.mxu0
      %v745 = vadd.f32 0.0, %v744
      %v746 = vpop.f32.mrf.mxu0
      %747 = vmatprep.mubr.f32.mxu0 0.0
      %748 = vmatmul.mubr.f32.gmra.mxu0 %v633
      %v749 = vpop.f32.mrf.mxu0
      %v750 = vadd.f32 0.0, %v749
      %v751 = vpop.f32.mrf.mxu0
      %752 = vmatprep.mubr.f32.mxu0 0.0
      %753 = vmatmul.mubr.f32.gmra.mxu0 %v635
      %v754 = vpop.f32.mrf.mxu0
      %v755 = vadd.f32 0.0, %v754
      %v756 = vpop.f32.mrf.mxu0
      %757 = vdwg.mxu0
      %766 = vrot.lane.b32.xlu0 %v477, 120
      %v767 = vpop.permute.xlu0 %766
      %768 = vrot.lane.b32.xlu0 %v482, 120
      %v769 = vpop.permute.xlu0 %768
      %770 = vrot.lane.b32.xlu0 %v487, 120
      %v771 = vpop.permute.xlu0 %770
      %772 = vrot.lane.b32.xlu0 %v492, 120
      %v773 = vpop.permute.xlu0 %772
      %774 = vrot.lane.b32.xlu0 %v497, 120
      %v775 = vpop.permute.xlu0 %774
      %776 = vrot.lane.b32.xlu0 %v502, 120
      %v777 = vpop.permute.xlu0 %776
      %778 = vrot.lane.b32.xlu0 %v507, 120
      %v779 = vpop.permute.xlu0 %778
      %780 = vrot.lane.b32.xlu0 %v512, 120
      %v781 = vpop.permute.xlu0 %780
      %v782 = vsel %vm620, %v477, 0
      %v784 = vsel %vm620, %v482, 0
      %v786 = vsel %vm620, %v487, 0
      %v788 = vsel %vm620, %v492, 0
      %v790 = vsel %vm620, %v497, 0
      %v792 = vsel %vm620, %v502, 0
      %v794 = vsel %vm620, %v507, 0
      %v796 = vsel %vm620, %v512, 0
      %v798 = vsel %vm620, %v767, 0
      %v800 = vsel %vm620, %v769, 0
      %v802 = vsel %vm620, %v771, 0
      %v804 = vsel %vm620, %v773, 0
      %v806 = vsel %vm620, %v775, 0
      %v808 = vsel %vm620, %v777, 0
      %v810 = vsel %vm620, %v779, 0
      %v812 = vsel %vm620, %v781, 0
      %814 = vmatprep.subr.mxu0 0.0
      %815 = vmatpush1.xpose.msra.mxu0 0.0
      %816 = vmatprep.subr.mxu0 0.0
      %817 = vmatpush1.xpose.msra.mxu0 0.0
      %818 = vmatprep.subr.mxu0 0.0
      %819 = vmatpush1.xpose.msra.mxu0 0.0
      %820 = vmatprep.subr.mxu0 0.0
      %821 = vmatpush1.xpose.msra.mxu0 0.0
      %822 = vmatprep.subr.mxu0 0.0
      %823 = vmatpush1.xpose.msra.mxu0 0.0
      %824 = vmatprep.subr.mxu0 0.0
      %825 = vmatpush1.xpose.msra.mxu0 0.0
      %826 = vmatprep.subr.mxu0 0.0
      %827 = vmatpush1.xpose.msra.mxu0 0.0
      %828 = vmatprep.subr.mxu0 0.0
      %829 = vmatpush1.xpose.msra.mxu0 0.0
      %830 = vmatprep.subr.mxu0 0.0
      %831 = vmatpush1.xpose.msra.mxu0 %v812
      %832 = vmatprep.subr.mxu0 0.0
      %833 = vmatpush1.xpose.msra.mxu0 %v810
      %834 = vmatprep.subr.mxu0 0.0
      %835 = vmatpush1.xpose.msra.mxu0 %v808
      %836 = vmatprep.subr.mxu0 0.0
      %837 = vmatpush1.xpose.msra.mxu0 %v806
      %838 = vmatprep.subr.mxu0 0.0
      %839 = vmatpush1.xpose.msra.mxu0 %v804
      %840 = vmatprep.subr.mxu0 0.0
      %841 = vmatpush1.xpose.msra.mxu0 %v802
      %842 = vmatprep.subr.mxu0 0.0
      %843 = vmatpush1.xpose.msra.mxu0 %v800
      %844 = vmatprep.subr.mxu0 0.0
      %845 = vmatpush1.xpose.msra.mxu0 %v798
      %846 = vmatprep.subr.mxu0 0.0
      %847 = vmatpush2.xpose.msra.mxu0 0.0
      %848 = vmatprep.subr.mxu0 0.0
      %849 = vmatpush2.xpose.msra.mxu0 0.0
      %850 = vmatprep.subr.mxu0 0.0
      %851 = vmatpush2.xpose.msra.mxu0 0.0
      %852 = vmatprep.subr.mxu0 0.0
      %853 = vmatpush2.xpose.msra.mxu0 0.0
      %854 = vmatprep.subr.mxu0 0.0
      %855 = vmatpush2.xpose.msra.mxu0 0.0
      %856 = vmatprep.subr.mxu0 0.0
      %857 = vmatpush2.xpose.msra.mxu0 0.0
      %858 = vmatprep.subr.mxu0 0.0
      %859 = vmatpush2.xpose.msra.mxu0 0.0
      %860 = vmatprep.subr.mxu0 0.0
      %861 = vmatpush2.xpose.msra.mxu0 0.0
      %862 = vmatprep.subr.mxu0 0.0
      %863 = vmatpush2.xpose.msra.mxu0 0.0
      %864 = vmatprep.subr.mxu0 0.0
      %865 = vmatpush2.xpose.msra.mxu0 0.0
      %866 = vmatprep.subr.mxu0 0.0
      %867 = vmatpush2.xpose.msra.mxu0 0.0
      %868 = vmatprep.subr.mxu0 0.0
      %869 = vmatpush2.xpose.msra.mxu0 0.0
      %870 = vmatprep.subr.mxu0 0.0
      %871 = vmatpush2.xpose.msra.mxu0 0.0
      %872 = vmatprep.subr.mxu0 0.0
      %873 = vmatpush2.xpose.msra.mxu0 0.0
      %874 = vmatprep.subr.mxu0 0.0
      %875 = vmatpush2.xpose.msra.mxu0 0.0
      %876 = vmatprep.subr.mxu0 0.0
      %877 = vmatpush2.xpose.msra.mxu0 0.0
      %878 = vmatprep.mubr.f32.mxu0 0.0
      %879 = vmatmul.mubr.f32.gmra.mxu0 %v782
      %v880 = vpop.f32.mrf.mxu0
      %v881 = vadd.f32 0.0, %v880
      %v882 = vpop.f32.mrf.mxu0
      %883 = vmatprep.mubr.f32.mxu0 0.0
      %884 = vmatmul.mubr.f32.gmra.mxu0 %v784
      %v885 = vpop.f32.mrf.mxu0
      %v886 = vadd.f32 0.0, %v885
      %v887 = vpop.f32.mrf.mxu0
      %888 = vmatprep.mubr.f32.mxu0 0.0
      %889 = vmatmul.mubr.f32.gmra.mxu0 %v786
      %v890 = vpop.f32.mrf.mxu0
      %v891 = vadd.f32 0.0, %v890
      %v892 = vpop.f32.mrf.mxu0
      %893 = vmatprep.mubr.f32.mxu0 0.0
      %894 = vmatmul.mubr.f32.gmra.mxu0 %v788
      %v895 = vpop.f32.mrf.mxu0
      %v896 = vadd.f32 0.0, %v895
      %v897 = vpop.f32.mrf.mxu0
      %898 = vmatprep.mubr.f32.mxu0 0.0
      %899 = vmatmul.mubr.f32.gmra.mxu0 %v790
      %v900 = vpop.f32.mrf.mxu0
      %v901 = vadd.f32 0.0, %v900
      %v902 = vpop.f32.mrf.mxu0
      %903 = vmatprep.mubr.f32.mxu0 0.0
      %904 = vmatmul.mubr.f32.gmra.mxu0 %v792
      %v905 = vpop.f32.mrf.mxu0
      %v906 = vadd.f32 0.0, %v905
      %v907 = vpop.f32.mrf.mxu0
      %908 = vmatprep.mubr.f32.mxu0 0.0
      %909 = vmatmul.mubr.f32.gmra.mxu0 %v794
      %v910 = vpop.f32.mrf.mxu0
      %v911 = vadd.f32 0.0, %v910
      %v912 = vpop.f32.mrf.mxu0
      %913 = vmatprep.mubr.f32.mxu0 0.0
      %914 = vmatmul.mubr.f32.gmra.mxu0 %v796
      %v915 = vpop.f32.mrf.mxu0
      %v916 = vadd.f32 0.0, %v915
      %v917 = vpop.f32.mrf.mxu0
      %918 = vdwg.mxu0
      %927 = vrot.lane.b32.xlu0 %v517, 120
      %v928 = vpop.permute.xlu0 %927
      %929 = vrot.lane.b32.xlu0 %v522, 120
      %v930 = vpop.permute.xlu0 %929
      %931 = vrot.lane.b32.xlu0 %v527, 120
      %v932 = vpop.permute.xlu0 %931
      %933 = vrot.lane.b32.xlu0 %v532, 120
      %v934 = vpop.permute.xlu0 %933
      %935 = vrot.lane.b32.xlu0 %v537, 120
      %v936 = vpop.permute.xlu0 %935
      %937 = vrot.lane.b32.xlu0 %v542, 120
      %v938 = vpop.permute.xlu0 %937
      %939 = vrot.lane.b32.xlu0 %v547, 120
      %v940 = vpop.permute.xlu0 %939
      %941 = vrot.lane.b32.xlu0 %v552, 120
      %v942 = vpop.permute.xlu0 %941
      %v943 = vsel %vm620, %v517, 0
      %v945 = vsel %vm620, %v522, 0
      %v947 = vsel %vm620, %v527, 0
      %v949 = vsel %vm620, %v532, 0
      %v951 = vsel %vm620, %v537, 0
      %v953 = vsel %vm620, %v542, 0
      %v955 = vsel %vm620, %v547, 0
      %v957 = vsel %vm620, %v552, 0
      %v959 = vsel %vm620, %v928, 0
      %v961 = vsel %vm620, %v930, 0
      %v963 = vsel %vm620, %v932, 0
      %v965 = vsel %vm620, %v934, 0
      %v967 = vsel %vm620, %v936, 0
      %v969 = vsel %vm620, %v938, 0
      %v971 = vsel %vm620, %v940, 0
      %v973 = vsel %vm620, %v942, 0
      %975 = vmatprep.subr.mxu0 0.0
      %976 = vmatpush1.xpose.msra.mxu0 0.0
      %977 = vmatprep.subr.mxu0 0.0
      %978 = vmatpush1.xpose.msra.mxu0 0.0
      %979 = vmatprep.subr.mxu0 0.0
      %980 = vmatpush1.xpose.msra.mxu0 0.0
      %981 = vmatprep.subr.mxu0 0.0
      %982 = vmatpush1.xpose.msra.mxu0 0.0
      %983 = vmatprep.subr.mxu0 0.0
      %984 = vmatpush1.xpose.msra.mxu0 0.0
      %985 = vmatprep.subr.mxu0 0.0
      %986 = vmatpush1.xpose.msra.mxu0 0.0
      %987 = vmatprep.subr.mxu0 0.0
      %988 = vmatpush1.xpose.msra.mxu0 0.0
      %989 = vmatprep.subr.mxu0 0.0
      %990 = vmatpush1.xpose.msra.mxu0 0.0
      %991 = vmatprep.subr.mxu0 0.0
      %992 = vmatpush1.xpose.msra.mxu0 %v973
      %993 = vmatprep.subr.mxu0 0.0
      %994 = vmatpush1.xpose.msra.mxu0 %v971
      %995 = vmatprep.subr.mxu0 0.0
      %996 = vmatpush1.xpose.msra.mxu0 %v969
      %997 = vmatprep.subr.mxu0 0.0
      %998 = vmatpush1.xpose.msra.mxu0 %v967
      %999 = vmatprep.subr.mxu0 0.0
      %1000 = vmatpush1.xpose.msra.mxu0 %v965
      %1001 = vmatprep.subr.mxu0 0.0
      %1002 = vmatpush1.xpose.msra.mxu0 %v963
      %1003 = vmatprep.subr.mxu0 0.0
      %1004 = vmatpush1.xpose.msra.mxu0 %v961
      %1005 = vmatprep.subr.mxu0 0.0
      %1006 = vmatpush1.xpose.msra.mxu0 %v959
      %1007 = vmatprep.subr.mxu0 0.0
      %1008 = vmatpush2.xpose.msra.mxu0 0.0
      %1009 = vmatprep.subr.mxu0 0.0
      %1010 = vmatpush2.xpose.msra.mxu0 0.0
      %1011 = vmatprep.subr.mxu0 0.0
      %1012 = vmatpush2.xpose.msra.mxu0 0.0
      %1013 = vmatprep.subr.mxu0 0.0
      %1014 = vmatpush2.xpose.msra.mxu0 0.0
      %1015 = vmatprep.subr.mxu0 0.0
      %1016 = vmatpush2.xpose.msra.mxu0 0.0
      %1017 = vmatprep.subr.mxu0 0.0
      %1018 = vmatpush2.xpose.msra.mxu0 0.0
      %1019 = vmatprep.subr.mxu0 0.0
      %1020 = vmatpush2.xpose.msra.mxu0 0.0
      %1021 = vmatprep.subr.mxu0 0.0
      %1022 = vmatpush2.xpose.msra.mxu0 0.0
      %1023 = vmatprep.subr.mxu0 0.0
      %1024 = vmatpush2.xpose.msra.mxu0 0.0
      %1025 = vmatprep.subr.mxu0 0.0
      %1026 = vmatpush2.xpose.msra.mxu0 0.0
      %1027 = vmatprep.subr.mxu0 0.0
      %1028 = vmatpush2.xpose.msra.mxu0 0.0
      %1029 = vmatprep.subr.mxu0 0.0
      %1030 = vmatpush2.xpose.msra.mxu0 0.0
      %1031 = vmatprep.subr.mxu0 0.0
      %1032 = vmatpush2.xpose.msra.mxu0 0.0
      %1033 = vmatprep.subr.mxu0 0.0
      %1034 = vmatpush2.xpose.msra.mxu0 0.0
      %1035 = vmatprep.subr.mxu0 0.0
      %1036 = vmatpush2.xpose.msra.mxu0 0.0
      %1037 = vmatprep.subr.mxu0 0.0
      %1038 = vmatpush2.xpose.msra.mxu0 0.0
      %1039 = vmatprep.mubr.f32.mxu0 0.0
      %1040 = vmatmul.mubr.f32.gmra.mxu0 %v943
      %v1041 = vpop.f32.mrf.mxu0
      %v1042 = vadd.f32 0.0, %v1041
      %v1043 = vpop.f32.mrf.mxu0
      %1044 = vmatprep.mubr.f32.mxu0 0.0
      %1045 = vmatmul.mubr.f32.gmra.mxu0 %v945
      %v1046 = vpop.f32.mrf.mxu0
      %v1047 = vadd.f32 0.0, %v1046
      %v1048 = vpop.f32.mrf.mxu0
      %1049 = vmatprep.mubr.f32.mxu0 0.0
      %1050 = vmatmul.mubr.f32.gmra.mxu0 %v947
      %v1051 = vpop.f32.mrf.mxu0
      %v1052 = vadd.f32 0.0, %v1051
      %v1053 = vpop.f32.mrf.mxu0
      %1054 = vmatprep.mubr.f32.mxu0 0.0
      %1055 = vmatmul.mubr.f32.gmra.mxu0 %v949
      %v1056 = vpop.f32.mrf.mxu0
      %v1057 = vadd.f32 0.0, %v1056
      %v1058 = vpop.f32.mrf.mxu0
      %1059 = vmatprep.mubr.f32.mxu0 0.0
      %1060 = vmatmul.mubr.f32.gmra.mxu0 %v951
      %v1061 = vpop.f32.mrf.mxu0
      %v1062 = vadd.f32 0.0, %v1061
      %v1063 = vpop.f32.mrf.mxu0
      %1064 = vmatprep.mubr.f32.mxu0 0.0
      %1065 = vmatmul.mubr.f32.gmra.mxu0 %v953
      %v1066 = vpop.f32.mrf.mxu0
      %v1067 = vadd.f32 0.0, %v1066
      %v1068 = vpop.f32.mrf.mxu0
      %1069 = vmatprep.mubr.f32.mxu0 0.0
      %1070 = vmatmul.mubr.f32.gmra.mxu0 %v955
      %v1071 = vpop.f32.mrf.mxu0
      %v1072 = vadd.f32 0.0, %v1071
      %v1073 = vpop.f32.mrf.mxu0
      %1074 = vmatprep.mubr.f32.mxu0 0.0
      %1075 = vmatmul.mubr.f32.gmra.mxu0 %v957
      %v1076 = vpop.f32.mrf.mxu0
      %v1077 = vadd.f32 0.0, %v1076
      %v1078 = vpop.f32.mrf.mxu0
      %1079 = vdwg.mxu0
      %1088 = vrot.lane.b32.xlu0 %v557, 120
      %v1089 = vpop.permute.xlu0 %1088
      %1090 = vrot.lane.b32.xlu0 %v562, 120
      %v1091 = vpop.permute.xlu0 %1090
      %1092 = vrot.lane.b32.xlu0 %v567, 120
      %v1093 = vpop.permute.xlu0 %1092
      %1094 = vrot.lane.b32.xlu0 %v572, 120
      %v1095 = vpop.permute.xlu0 %1094
      %1096 = vrot.lane.b32.xlu0 %v577, 120
      %v1097 = vpop.permute.xlu0 %1096
      %1098 = vrot.lane.b32.xlu0 %v582, 120
      %v1099 = vpop.permute.xlu0 %1098
      %1100 = vrot.lane.b32.xlu0 %v587, 120
      %v1101 = vpop.permute.xlu0 %1100
      %1102 = vrot.lane.b32.xlu0 %v592, 120
      %v1103 = vpop.permute.xlu0 %1102
      %v1104 = vsel %vm620, %v557, 0
      %v1106 = vsel %vm620, %v562, 0
      %v1108 = vsel %vm620, %v567, 0
      %v1110 = vsel %vm620, %v572, 0
      %v1112 = vsel %vm620, %v577, 0
      %v1114 = vsel %vm620, %v582, 0
      %v1116 = vsel %vm620, %v587, 0
      %v1118 = vsel %vm620, %v592, 0
      %v1120 = vsel %vm620, %v1089, 0
      %v1122 = vsel %vm620, %v1091, 0
      %v1124 = vsel %vm620, %v1093, 0
      %v1126 = vsel %vm620, %v1095, 0
      %v1128 = vsel %vm620, %v1097, 0
      %v1130 = vsel %vm620, %v1099, 0
      %v1132 = vsel %vm620, %v1101, 0
      %v1134 = vsel %vm620, %v1103, 0
      %1136 = vmatprep.subr.mxu0 0.0
      %1137 = vmatpush1.xpose.msra.mxu0 0.0
      %1138 = vmatprep.subr.mxu0 0.0
      %1139 = vmatpush1.xpose.msra.mxu0 0.0
      %1140 = vmatprep.subr.mxu0 0.0
      %1141 = vmatpush1.xpose.msra.mxu0 0.0
      %1142 = vmatprep.subr.mxu0 0.0
      %1143 = vmatpush1.xpose.msra.mxu0 0.0
      %1144 = vmatprep.subr.mxu0 0.0
      %1145 = vmatpush1.xpose.msra.mxu0 0.0
      %1146 = vmatprep.subr.mxu0 0.0
      %1147 = vmatpush1.xpose.msra.mxu0 0.0
      %1148 = vmatprep.subr.mxu0 0.0
      %1149 = vmatpush1.xpose.msra.mxu0 0.0
      %1150 = vmatprep.subr.mxu0 0.0
      %1151 = vmatpush1.xpose.msra.mxu0 0.0
      %1152 = vmatprep.subr.mxu0 0.0
      %1153 = vmatpush1.xpose.msra.mxu0 %v1134
      %1154 = vmatprep.subr.mxu0 0.0
      %1155 = vmatpush1.xpose.msra.mxu0 %v1132
      %1156 = vmatprep.subr.mxu0 0.0
      %1157 = vmatpush1.xpose.msra.mxu0 %v1130
      %1158 = vmatprep.subr.mxu0 0.0
      %1159 = vmatpush1.xpose.msra.mxu0 %v1128
      %1160 = vmatprep.subr.mxu0 0.0
      %1161 = vmatpush1.xpose.msra.mxu0 %v1126
      %1162 = vmatprep.subr.mxu0 0.0
      %1163 = vmatpush1.xpose.msra.mxu0 %v1124
      %1164 = vmatprep.subr.mxu0 0.0
      %1165 = vmatpush1.xpose.msra.mxu0 %v1122
      %1166 = vmatprep.subr.mxu0 0.0
      %1167 = vmatpush1.xpose.msra.mxu0 %v1120
      %1168 = vmatprep.subr.mxu0 0.0
      %1169 = vmatpush2.xpose.msra.mxu0 0.0
      %1170 = vmatprep.subr.mxu0 0.0
      %1171 = vmatpush2.xpose.msra.mxu0 0.0
      %1172 = vmatprep.subr.mxu0 0.0
      %1173 = vmatpush2.xpose.msra.mxu0 0.0
      %1174 = vmatprep.subr.mxu0 0.0
      %1175 = vmatpush2.xpose.msra.mxu0 0.0
      %1176 = vmatprep.subr.mxu0 0.0
      %1177 = vmatpush2.xpose.msra.mxu0 0.0
      %1178 = vmatprep.subr.mxu0 0.0
      %1179 = vmatpush2.xpose.msra.mxu0 0.0
      %1180 = vmatprep.subr.mxu0 0.0
      %1181 = vmatpush2.xpose.msra.mxu0 0.0
      %1182 = vmatprep.subr.mxu0 0.0
      %1183 = vmatpush2.xpose.msra.mxu0 0.0
      %1184 = vmatprep.subr.mxu0 0.0
      %1185 = vmatpush2.xpose.msra.mxu0 0.0
      %1186 = vmatprep.subr.mxu0 0.0
      %1187 = vmatpush2.xpose.msra.mxu0 0.0
      %1188 = vmatprep.subr.mxu0 0.0
      %1189 = vmatpush2.xpose.msra.mxu0 0.0
      %1190 = vmatprep.subr.mxu0 0.0
      %1191 = vmatpush2.xpose.msra.mxu0 0.0
      %1192 = vmatprep.subr.mxu0 0.0
      %1193 = vmatpush2.xpose.msra.mxu0 0.0
      %1194 = vmatprep.subr.mxu0 0.0
      %1195 = vmatpush2.xpose.msra.mxu0 0.0
      %1196 = vmatprep.subr.mxu0 0.0
      %1197 = vmatpush2.xpose.msra.mxu0 0.0
      %1198 = vmatprep.subr.mxu0 0.0
      %1199 = vmatpush2.xpose.msra.mxu0 0.0
      %1200 = vmatprep.mubr.f32.mxu0 0.0
      %1201 = vmatmul.mubr.f32.gmra.mxu0 %v1104
      %v1202 = vpop.f32.mrf.mxu0
      %v1203 = vadd.f32 0.0, %v1202
      %v1204 = vpop.f32.mrf.mxu0
      %1205 = vmatprep.mubr.f32.mxu0 0.0
      %1206 = vmatmul.mubr.f32.gmra.mxu0 %v1106
      %v1207 = vpop.f32.mrf.mxu0
      %v1208 = vadd.f32 0.0, %v1207
      %v1209 = vpop.f32.mrf.mxu0
      %1210 = vmatprep.mubr.f32.mxu0 0.0
      %1211 = vmatmul.mubr.f32.gmra.mxu0 %v1108
      %v1212 = vpop.f32.mrf.mxu0
      %v1213 = vadd.f32 0.0, %v1212
      %v1214 = vpop.f32.mrf.mxu0
      %1215 = vmatprep.mubr.f32.mxu0 0.0
      %1216 = vmatmul.mubr.f32.gmra.mxu0 %v1110
      %v1217 = vpop.f32.mrf.mxu0
      %v1218 = vadd.f32 0.0, %v1217
      %v1219 = vpop.f32.mrf.mxu0
      %1220 = vmatprep.mubr.f32.mxu0 0.0
      %1221 = vmatmul.mubr.f32.gmra.mxu0 %v1112
      %v1222 = vpop.f32.mrf.mxu0
      %v1223 = vadd.f32 0.0, %v1222
      %v1224 = vpop.f32.mrf.mxu0
      %1225 = vmatprep.mubr.f32.mxu0 0.0
      %1226 = vmatmul.mubr.f32.gmra.mxu0 %v1114
      %v1227 = vpop.f32.mrf.mxu0
      %v1228 = vadd.f32 0.0, %v1227
      %v1229 = vpop.f32.mrf.mxu0
      %1230 = vmatprep.mubr.f32.mxu0 0.0
      %1231 = vmatmul.mubr.f32.gmra.mxu0 %v1116
      %v1232 = vpop.f32.mrf.mxu0
      %v1233 = vadd.f32 0.0, %v1232
      %v1234 = vpop.f32.mrf.mxu0
      %1235 = vmatprep.mubr.f32.mxu0 0.0
      %1236 = vmatmul.mubr.f32.gmra.mxu0 %v1118
      %v1237 = vpop.f32.mrf.mxu0
      %v1238 = vadd.f32 0.0, %v1237
      %v1239 = vpop.f32.mrf.mxu0
      %1240 = vdwg.mxu0
      %v1241 = vmul.f32 %v720, 0.5
      %v1242 = vmul.f32 %v725, 0.5
      %v1243 = vmul.f32 %v730, 0.5
      %v1244 = vmul.f32 %v735, 0.5
      %v1245 = vmul.f32 %v740, 0.5
      %v1246 = vmul.f32 %v745, 0.5
      %v1247 = vmul.f32 %v750, 0.5
      %v1248 = vmul.f32 %v755, 0.5
      %v1249 = vmul.f32 %v881, 0.5
      %v1250 = vmul.f32 %v886, 0.5
      %v1251 = vmul.f32 %v891, 0.5
      %v1252 = vmul.f32 %v896, 0.5
      %v1253 = vmul.f32 %v901, 0.5
      %v1254 = vmul.f32 %v906, 0.5
      %v1255 = vmul.f32 %v911, 0.5
      %v1256 = vmul.f32 %v916, 0.5
      %v1257 = vmul.f32 %v1042, 0.5
      %v1258 = vmul.f32 %v1047, 0.5
      %v1259 = vmul.f32 %v1052, 0.5
      %v1260 = vmul.f32 %v1057, 0.5
      %v1261 = vmul.f32 %v1062, 0.5
      %v1262 = vmul.f32 %v1067, 0.5
      %v1263 = vmul.f32 %v1072, 0.5
      %v1264 = vmul.f32 %v1077, 0.5
      %v1265 = vmul.f32 %v1203, 0.5
      %v1266 = vmul.f32 %v1208, 0.5
      %v1267 = vmul.f32 %v1213, 0.5
      %v1268 = vmul.f32 %v1218, 0.5
      %v1269 = vmul.f32 %v1223, 0.5
      %v1270 = vmul.f32 %v1228, 0.5
      %v1271 = vmul.f32 %v1233, 0.5
      %v1272 = vmul.f32 %v1238, 0.5
      %vm1273 = vcmask 523264
      %v1274 = vsel %vm1273, %v1241, -inf
      %1275 = vmax.xlane.f32.xlu0 %v1274
      %v1276 = vpop.xlane.xlu0 %1275
      %v1277 = vsel %vm1273, %v1242, -inf
      %1278 = vmax.xlane.f32.xlu0 %v1277
      %v1279 = vpop.xlane.xlu0 %1278
      %v1280 = vsel %vm1273, %v1243, -inf
      %1281 = vmax.xlane.f32.xlu0 %v1280
      %v1282 = vpop.xlane.xlu0 %1281
      %v1283 = vsel %vm1273, %v1244, -inf
      %1284 = vmax.xlane.f32.xlu0 %v1283
      %v1285 = vpop.xlane.xlu0 %1284
      %v1286 = vsel %vm1273, %v1245, -inf
      %1287 = vmax.xlane.f32.xlu0 %v1286
      %v1288 = vpop.xlane.xlu0 %1287
      %v1289 = vsel %vm1273, %v1246, -inf
      %1290 = vmax.xlane.f32.xlu0 %v1289
      %v1291 = vpop.xlane.xlu0 %1290
      %v1292 = vsel %vm1273, %v1247, -inf
      %1293 = vmax.xlane.f32.xlu0 %v1292
      %v1294 = vpop.xlane.xlu0 %1293
      %v1295 = vsel %vm1273, %v1248, -inf
      %1296 = vmax.xlane.f32.xlu0 %v1295
      %v1297 = vpop.xlane.xlu0 %1296
      %v1298 = vsel %vm1273, %v1249, -inf
      %1299 = vmax.xlane.f32.xlu0 %v1298
      %v1300 = vpop.xlane.xlu0 %1299
      %v1301 = vsel %vm1273, %v1250, -inf
      %1302 = vmax.xlane.f32.xlu0 %v1301
      %v1303 = vpop.xlane.xlu0 %1302
      %v1304 = vsel %vm1273, %v1251, -inf
      %1305 = vmax.xlane.f32.xlu0 %v1304
      %v1306 = vpop.xlane.xlu0 %1305
      %v1307 = vsel %vm1273, %v1252, -inf
      %1308 = vmax.xlane.f32.xlu0 %v1307
      %v1309 = vpop.xlane.xlu0 %1308
      %v1310 = vsel %vm1273, %v1253, -inf
      %1311 = vmax.xlane.f32.xlu0 %v1310
      %v1312 = vpop.xlane.xlu0 %1311
      %v1313 = vsel %vm1273, %v1254, -inf
      %1314 = vmax.xlane.f32.xlu0 %v1313
      %v1315 = vpop.xlane.xlu0 %1314
      %v1316 = vsel %vm1273, %v1255, -inf
      %1317 = vmax.xlane.f32.xlu0 %v1316
      %v1318 = vpop.xlane.xlu0 %1317
      %v1319 = vsel %vm1273, %v1256, -inf
      %1320 = vmax.xlane.f32.xlu0 %v1319
      %v1321 = vpop.xlane.xlu0 %1320
      %v1322 = vsel %vm1273, %v1257, -inf
      %1323 = vmax.xlane.f32.xlu0 %v1322
      %v1324 = vpop.xlane.xlu0 %1323
      %v1325 = vsel %vm1273, %v1258, -inf
      %1326 = vmax.xlane.f32.xlu0 %v1325
      %v1327 = vpop.xlane.xlu0 %1326
      %v1328 = vsel %vm1273, %v1259, -inf
      %1329 = vmax.xlane.f32.xlu0 %v1328
      %v1330 = vpop.xlane.xlu0 %1329
      %v1331 = vsel %vm1273, %v1260, -inf
      %1332 = vmax.xlane.f32.xlu0 %v1331
      %v1333 = vpop.xlane.xlu0 %1332
      %v1334 = vsel %vm1273, %v1261, -inf
      %1335 = vmax.xlane.f32.xlu0 %v1334
      %v1336 = vpop.xlane.xlu0 %1335
      %v1337 = vsel %vm1273, %v1262, -inf
      %1338 = vmax.xlane.f32.xlu0 %v1337
      %v1339 = vpop.xlane.xlu0 %1338
      %v1340 = vsel %vm1273, %v1263, -inf
      %1341 = vmax.xlane.f32.xlu0 %v1340
      %v1342 = vpop.xlane.xlu0 %1341
      %v1343 = vsel %vm1273, %v1264, -inf
      %1344 = vmax.xlane.f32.xlu0 %v1343
      %v1345 = vpop.xlane.xlu0 %1344
      %v1346 = vsel %vm1273, %v1265, -inf
      %1347 = vmax.xlane.f32.xlu0 %v1346
      %v1348 = vpop.xlane.xlu0 %1347
      %v1349 = vsel %vm1273, %v1266, -inf
      %1350 = vmax.xlane.f32.xlu0 %v1349
      %v1351 = vpop.xlane.xlu0 %1350
      %v1352 = vsel %vm1273, %v1267, -inf
      %1353 = vmax.xlane.f32.xlu0 %v1352
      %v1354 = vpop.xlane.xlu0 %1353
      %v1355 = vsel %vm1273, %v1268, -inf
      %1356 = vmax.xlane.f32.xlu0 %v1355
      %v1357 = vpop.xlane.xlu0 %1356
      %v1358 = vsel %vm1273, %v1269, -inf
      %1359 = vmax.xlane.f32.xlu0 %v1358
      %v1360 = vpop.xlane.xlu0 %1359
      %v1361 = vsel %vm1273, %v1270, -inf
      %1362 = vmax.xlane.f32.xlu0 %v1361
      %v1363 = vpop.xlane.xlu0 %1362
      %v1364 = vsel %vm1273, %v1271, -inf
      %1365 = vmax.xlane.f32.xlu0 %v1364
      %v1366 = vpop.xlane.xlu0 %1365
      %v1367 = vsel %vm1273, %v1272, -inf
      %1368 = vmax.xlane.f32.xlu0 %v1367
      %v1369 = vpop.xlane.xlu0 %1368
      %v1370 = vsub.f32 %v1241, %v1276
      %v1371 = vsub.f32 %v1242, %v1279
      %v1372 = vsub.f32 %v1243, %v1282
      %v1373 = vsub.f32 %v1244, %v1285
      %v1374 = vsub.f32 %v1245, %v1288
      %v1375 = vsub.f32 %v1246, %v1291
      %v1376 = vsub.f32 %v1247, %v1294
      %v1377 = vsub.f32 %v1248, %v1297
      %v1378 = vsub.f32 %v1249, %v1300
      %v1379 = vsub.f32 %v1250, %v1303
      %v1380 = vsub.f32 %v1251, %v1306
      %v1381 = vsub.f32 %v1252, %v1309
      %v1382 = vsub.f32 %v1253, %v1312
      %v1383 = vsub.f32 %v1254, %v1315
      %v1384 = vsub.f32 %v1255, %v1318
      %v1385 = vsub.f32 %v1256, %v1321
      %v1386 = vsub.f32 %v1257, %v1324
      %v1387 = vsub.f32 %v1258, %v1327
      %v1388 = vsub.f32 %v1259, %v1330
      %v1389 = vsub.f32 %v1260, %v1333
      %v1390 = vsub.f32 %v1261, %v1336
      %v1391 = vsub.f32 %v1262, %v1339
      %v1392 = vsub.f32 %v1263, %v1342
      %v1393 = vsub.f32 %v1264, %v1345
      %v1394 = vsub.f32 %v1265, %v1348
      %v1395 = vsub.f32 %v1266, %v1351
      %v1396 = vsub.f32 %v1267, %v1354
      %v1397 = vsub.f32 %v1268, %v1357
      %v1398 = vsub.f32 %v1269, %v1360
      %v1399 = vsub.f32 %v1270, %v1363
      %v1400 = vsub.f32 %v1271, %v1366
      %v1401 = vsub.f32 %v1272, %v1369
      %v1402 = vmul.f32 %v1370, 1.442695
      %v1403 = vpow.pop %v1402
      %v1404 = vmul.f32 %v1371, 1.442695
      %v1405 = vpow.pop %v1404
      %v1406 = vmul.f32 %v1372, 1.442695
      %v1407 = vpow.pop %v1406
      %v1408 = vmul.f32 %v1373, 1.442695
      %v1409 = vpow.pop %v1408
      %v1410 = vmul.f32 %v1374, 1.442695
      %v1411 = vpow.pop %v1410
      %v1412 = vmul.f32 %v1375, 1.442695
      %v1413 = vpow.pop %v1412
      %v1414 = vmul.f32 %v1376, 1.442695
      %v1415 = vpow.pop %v1414
      %v1416 = vmul.f32 %v1377, 1.442695
      %v1417 = vpow.pop %v1416
      %v1418 = vmul.f32 %v1378, 1.442695
      %v1419 = vpow.pop %v1418
      %v1420 = vmul.f32 %v1379, 1.442695
      %v1421 = vpow.pop %v1420
      %v1422 = vmul.f32 %v1380, 1.442695
      %v1423 = vpow.pop %v1422
      %v1424 = vmul.f32 %v1381, 1.442695
      %v1425 = vpow.pop %v1424
      %v1426 = vmul.f32 %v1382, 1.442695
      %v1427 = vpow.pop %v1426
      %v1428 = vmul.f32 %v1383, 1.442695
      %v1429 = vpow.pop %v1428
      %v1430 = vmul.f32 %v1384, 1.442695
      %v1431 = vpow.pop %v1430
      %v1432 = vmul.f32 %v1385, 1.442695
      %v1433 = vpow.pop %v1432
      %v1434 = vmul.f32 %v1386, 1.442695
      %v1435 = vpow.pop %v1434
      %v1436 = vmul.f32 %v1387, 1.442695
      %v1437 = vpow.pop %v1436
      %v1438 = vmul.f32 %v1388, 1.442695
      %v1439 = vpow.pop %v1438
      %v1440 = vmul.f32 %v1389, 1.442695
      %v1441 = vpow.pop %v1440
      %v1442 = vmul.f32 %v1390, 1.442695
      %v1443 = vpow.pop %v1442
      %v1444 = vmul.f32 %v1391, 1.442695
      %v1445 = vpow.pop %v1444
      %v1446 = vmul.f32 %v1392, 1.442695
      %v1447 = vpow.pop %v1446
      %v1448 = vmul.f32 %v1393, 1.442695
      %v1449 = vpow.pop %v1448
      %v1450 = vmul.f32 %v1394, 1.442695
      %v1451 = vpow.pop %v1450
      %v1452 = vmul.f32 %v1395, 1.442695
      %v1453 = vpow.pop %v1452
      %v1454 = vmul.f32 %v1396, 1.442695
      %v1455 = vpow.pop %v1454
      %v1456 = vmul.f32 %v1397, 1.442695
      %v1457 = vpow.pop %v1456
      %v1458 = vmul.f32 %v1398, 1.442695
      %v1459 = vpow.pop %v1458
      %v1460 = vmul.f32 %v1399, 1.442695
      %v1461 = vpow.pop %v1460
      %v1462 = vmul.f32 %v1400, 1.442695
      %v1463 = vpow.pop %v1462
      %v1464 = vmul.f32 %v1401, 1.442695
      %v1465 = vpow.pop %v1464
      %v1466 = vsel %vm1273, %v1403, 0.0
      %1467 = vadd.xlane.f32.xlu0 %v1466
      %v1468 = vpop.xlane.xlu0 %1467
      %v1469 = vsel %vm1273, %v1405, 0.0
      %1470 = vadd.xlane.f32.xlu0 %v1469
      %v1471 = vpop.xlane.xlu0 %1470
      %v1472 = vsel %vm1273, %v1407, 0.0
      %1473 = vadd.xlane.f32.xlu0 %v1472
      %v1474 = vpop.xlane.xlu0 %1473
      %v1475 = vsel %vm1273, %v1409, 0.0
      %1476 = vadd.xlane.f32.xlu0 %v1475
      %v1477 = vpop.xlane.xlu0 %1476
      %v1478 = vsel %vm1273, %v1411, 0.0
      %1479 = vadd.xlane.f32.xlu0 %v1478
      %v1480 = vpop.xlane.xlu0 %1479
      %v1481 = vsel %vm1273, %v1413, 0.0
      %1482 = vadd.xlane.f32.xlu0 %v1481
      %v1483 = vpop.xlane.xlu0 %1482
      %v1484 = vsel %vm1273, %v1415, 0.0
      %1485 = vadd.xlane.f32.xlu0 %v1484
      %v1486 = vpop.xlane.xlu0 %1485
      %v1487 = vsel %vm1273, %v1417, 0.0
      %1488 = vadd.xlane.f32.xlu0 %v1487
      %v1489 = vpop.xlane.xlu0 %1488
      %v1490 = vsel %vm1273, %v1419, 0.0
      %1491 = vadd.xlane.f32.xlu0 %v1490
      %v1492 = vpop.xlane.xlu0 %1491
      %v1493 = vsel %vm1273, %v1421, 0.0
      %1494 = vadd.xlane.f32.xlu0 %v1493
      %v1495 = vpop.xlane.xlu0 %1494
      %v1496 = vsel %vm1273, %v1423, 0.0
      %1497 = vadd.xlane.f32.xlu0 %v1496
      %v1498 = vpop.xlane.xlu0 %1497
      %v1499 = vsel %vm1273, %v1425, 0.0
      %1500 = vadd.xlane.f32.xlu0 %v1499
      %v1501 = vpop.xlane.xlu0 %1500
      %v1502 = vsel %vm1273, %v1427, 0.0
      %1503 = vadd.xlane.f32.xlu0 %v1502
      %v1504 = vpop.xlane.xlu0 %1503
      %v1505 = vsel %vm1273, %v1429, 0.0
      %1506 = vadd.xlane.f32.xlu0 %v1505
      %v1507 = vpop.xlane.xlu0 %1506
      %v1508 = vsel %vm1273, %v1431, 0.0
      %1509 = vadd.xlane.f32.xlu0 %v1508
      %v1510 = vpop.xlane.xlu0 %1509
      %v1511 = vsel %vm1273, %v1433, 0.0
      %1512 = vadd.xlane.f32.xlu0 %v1511
      %v1513 = vpop.xlane.xlu0 %1512
      %v1514 = vsel %vm1273, %v1435, 0.0
      %1515 = vadd.xlane.f32.xlu0 %v1514
      %v1516 = vpop.xlane.xlu0 %1515
      %v1517 = vsel %vm1273, %v1437, 0.0
      %1518 = vadd.xlane.f32.xlu0 %v1517
      %v1519 = vpop.xlane.xlu0 %1518
      %v1520 = vsel %vm1273, %v1439, 0.0
      %1521 = vadd.xlane.f32.xlu0 %v1520
      %v1522 = vpop.xlane.xlu0 %1521
      %v1523 = vsel %vm1273, %v1441, 0.0
      %1524 = vadd.xlane.f32.xlu0 %v1523
      %v1525 = vpop.xlane.xlu0 %1524
      %v1526 = vsel %vm1273, %v1443, 0.0
      %1527 = vadd.xlane.f32.xlu0 %v1526
      %v1528 = vpop.xlane.xlu0 %1527
      %v1529 = vsel %vm1273, %v1445, 0.0
      %1530 = vadd.xlane.f32.xlu0 %v1529
      %v1531 = vpop.xlane.xlu0 %1530
      %v1532 = vsel %vm1273, %v1447, 0.0
      %1533 = vadd.xlane.f32.xlu0 %v1532
      %v1534 = vpop.xlane.xlu0 %1533
      %v1535 = vsel %vm1273, %v1449, 0.0
      %1536 = vadd.xlane.f32.xlu0 %v1535
      %v1537 = vpop.xlane.xlu0 %1536
      %v1538 = vsel %vm1273, %v1451, 0.0
      %1539 = vadd.xlane.f32.xlu0 %v1538
      %v1540 = vpop.xlane.xlu0 %1539
      %v1541 = vsel %vm1273, %v1453, 0.0
      %1542 = vadd.xlane.f32.xlu0 %v1541
      %v1543 = vpop.xlane.xlu0 %1542
      %v1544 = vsel %vm1273, %v1455, 0.0
      %1545 = vadd.xlane.f32.xlu0 %v1544
      %v1546 = vpop.xlane.xlu0 %1545
      %v1547 = vsel %vm1273, %v1457, 0.0
      %1548 = vadd.xlane.f32.xlu0 %v1547
      %v1549 = vpop.xlane.xlu0 %1548
      %v1550 = vsel %vm1273, %v1459, 0.0
      %1551 = vadd.xlane.f32.xlu0 %v1550
      %v1552 = vpop.xlane.xlu0 %1551
      %v1553 = vsel %vm1273, %v1461, 0.0
      %1554 = vadd.xlane.f32.xlu0 %v1553
      %v1555 = vpop.xlane.xlu0 %1554
      %v1556 = vsel %vm1273, %v1463, 0.0
      %1557 = vadd.xlane.f32.xlu0 %v1556
      %v1558 = vpop.xlane.xlu0 %1557
      %v1559 = vsel %vm1273, %v1465, 0.0
      %1560 = vadd.xlane.f32.xlu0 %v1559
      %v1561 = vpop.xlane.xlu0 %1560
      %v1562 = vrcp.pop %v1468
      %v1563 = vmul.f32 %v1403, %v1562
      %v1564 = vrcp.pop %v1471
      %v1565 = vmul.f32 %v1405, %v1564
      %v1566 = vrcp.pop %v1474
      %v1567 = vmul.f32 %v1407, %v1566
      %v1568 = vrcp.pop %v1477
      %v1569 = vmul.f32 %v1409, %v1568
      %v1570 = vrcp.pop %v1480
      %v1571 = vmul.f32 %v1411, %v1570
      %v1572 = vrcp.pop %v1483
      %v1573 = vmul.f32 %v1413, %v1572
      %v1574 = vrcp.pop %v1486
      %v1575 = vmul.f32 %v1415, %v1574
      %v1576 = vrcp.pop %v1489
      %v1577 = vmul.f32 %v1417, %v1576
      %v1578 = vrcp.pop %v1492
      %v1579 = vmul.f32 %v1419, %v1578
      %v1580 = vrcp.pop %v1495
      %v1581 = vmul.f32 %v1421, %v1580
      %v1582 = vrcp.pop %v1498
      %v1583 = vmul.f32 %v1423, %v1582
      %v1584 = vrcp.pop %v1501
      %v1585 = vmul.f32 %v1425, %v1584
      %v1586 = vrcp.pop %v1504
      %v1587 = vmul.f32 %v1427, %v1586
      %v1588 = vrcp.pop %v1507
      %v1589 = vmul.f32 %v1429, %v1588
      %v1590 = vrcp.pop %v1510
      %v1591 = vmul.f32 %v1431, %v1590
      %v1592 = vrcp.pop %v1513
      %v1593 = vmul.f32 %v1433, %v1592
      %v1594 = vrcp.pop %v1516
      %v1595 = vmul.f32 %v1435, %v1594
      %v1596 = vrcp.pop %v1519
      %v1597 = vmul.f32 %v1437, %v1596
      %v1598 = vrcp.pop %v1522
      %v1599 = vmul.f32 %v1439, %v1598
      %v1600 = vrcp.pop %v1525
      %v1601 = vmul.f32 %v1441, %v1600
      %v1602 = vrcp.pop %v1528
      %v1603 = vmul.f32 %v1443, %v1602
      %v1604 = vrcp.pop %v1531
      %v1605 = vmul.f32 %v1445, %v1604
      %v1606 = vrcp.pop %v1534
      %v1607 = vmul.f32 %v1447, %v1606
      %v1608 = vrcp.pop %v1537
      %v1609 = vmul.f32 %v1449, %v1608
      %v1610 = vrcp.pop %v1540
      %v1611 = vmul.f32 %v1451, %v1610
      %v1612 = vrcp.pop %v1543
      %v1613 = vmul.f32 %v1453, %v1612
      %v1614 = vrcp.pop %v1546
      %v1615 = vmul.f32 %v1455, %v1614
      %v1616 = vrcp.pop %v1549
      %v1617 = vmul.f32 %v1457, %v1616
      %v1618 = vrcp.pop %v1552
      %v1619 = vmul.f32 %v1459, %v1618
      %v1620 = vrcp.pop %v1555
      %v1621 = vmul.f32 %v1461, %v1620
      %v1622 = vrcp.pop %v1558
      %v1623 = vmul.f32 %v1463, %v1622
      %v1624 = vrcp.pop %v1561
      %v1625 = vmul.f32 %v1465, %v1624
      %1626 = vrot.lane.b32.xlu0 %v437, 112
      %v1627 = vpop.permute.xlu0 %1626
      %1628 = vrot.lane.b32.xlu0 %v442, 112
      %v1629 = vpop.permute.xlu0 %1628
      %1630 = vrot.lane.b32.xlu0 %v447, 112
      %v1631 = vpop.permute.xlu0 %1630
      %1632 = vrot.lane.b32.xlu0 %v452, 112
      %v1633 = vpop.permute.xlu0 %1632
      %1634 = vrot.lane.b32.xlu0 %v457, 112
      %v1635 = vpop.permute.xlu0 %1634
      %1636 = vrot.lane.b32.xlu0 %v462, 112
      %v1637 = vpop.permute.xlu0 %1636
      %1638 = vrot.lane.b32.xlu0 %v467, 112
      %v1639 = vpop.permute.xlu0 %1638
      %1640 = vrot.lane.b32.xlu0 %v472, 112
      %v1641 = vpop.permute.xlu0 %1640
      %v1651 = vsel %vm1273, %v1563, 0
      %v1654 = vsel %vm1273, %v1565, 0
      %v1657 = vsel %vm1273, %v1567, 0
      %v1660 = vsel %vm1273, %v1569, 0
      %v1663 = vsel %vm1273, %v1571, 0
      %v1666 = vsel %vm1273, %v1573, 0
      %v1669 = vsel %vm1273, %v1575, 0
      %v1672 = vsel %vm1273, %v1577, 0
      %1674 = vmatprep.subr.mxu0 0.0
      %1675 = vmatpush1.msra.mxu0 0.0
      %1676 = vmatprep.subr.mxu0 0.0
      %1677 = vmatpush1.msra.mxu0 0.0
      %1678 = vmatprep.subr.mxu0 0.0
      %1679 = vmatpush1.msra.mxu0 0.0
      %1680 = vmatprep.subr.mxu0 0.0
      %1681 = vmatpush1.msra.mxu0 0.0
      %1682 = vmatprep.subr.mxu0 0.0
      %1683 = vmatpush1.msra.mxu0 0.0
      %1684 = vmatprep.subr.mxu0 0.0
      %1685 = vmatpush1.msra.mxu0 0.0
      %1686 = vmatprep.subr.mxu0 0.0
      %1687 = vmatpush1.msra.mxu0 0.0
      %1688 = vmatprep.subr.mxu0 0.0
      %1689 = vmatpush1.msra.mxu0 0.0
      %1690 = vmatprep.subr.mxu0 0.0
      %1691 = vmatpush1.msra.mxu0 %v1641
      %1692 = vmatprep.subr.mxu0 0.0
      %1693 = vmatpush1.msra.mxu0 %v1639
      %1694 = vmatprep.subr.mxu0 0.0
      %1695 = vmatpush1.msra.mxu0 %v1637
      %1696 = vmatprep.subr.mxu0 0.0
      %1697 = vmatpush1.msra.mxu0 %v1635
      %1698 = vmatprep.subr.mxu0 0.0
      %1699 = vmatpush1.msra.mxu0 %v1633
      %1700 = vmatprep.subr.mxu0 0.0
      %1701 = vmatpush1.msra.mxu0 %v1631
      %1702 = vmatprep.subr.mxu0 0.0
      %1703 = vmatpush1.msra.mxu0 %v1629
      %1704 = vmatprep.subr.mxu0 0.0
      %1705 = vmatpush1.msra.mxu0 %v1627
      %1706 = vmatprep.subr.mxu0 0.0
      %1707 = vmatpush2.msra.mxu0 0.0
      %1708 = vmatprep.subr.mxu0 0.0
      %1709 = vmatpush2.msra.mxu0 0.0
      %1710 = vmatprep.subr.mxu0 0.0
      %1711 = vmatpush2.msra.mxu0 0.0
      %1712 = vmatprep.subr.mxu0 0.0
      %1713 = vmatpush2.msra.mxu0 0.0
      %1714 = vmatprep.subr.mxu0 0.0
      %1715 = vmatpush2.msra.mxu0 0.0
      %1716 = vmatprep.subr.mxu0 0.0
      %1717 = vmatpush2.msra.mxu0 0.0
      %1718 = vmatprep.subr.mxu0 0.0
      %1719 = vmatpush2.msra.mxu0 0.0
      %1720 = vmatprep.subr.mxu0 0.0
      %1721 = vmatpush2.msra.mxu0 0.0
      %1722 = vmatprep.subr.mxu0 0.0
      %1723 = vmatpush2.msra.mxu0 0.0
      %1724 = vmatprep.subr.mxu0 0.0
      %1725 = vmatpush2.msra.mxu0 0.0
      %1726 = vmatprep.subr.mxu0 0.0
      %1727 = vmatpush2.msra.mxu0 0.0
      %1728 = vmatprep.subr.mxu0 0.0
      %1729 = vmatpush2.msra.mxu0 0.0
      %1730 = vmatprep.subr.mxu0 0.0
      %1731 = vmatpush2.msra.mxu0 0.0
      %1732 = vmatprep.subr.mxu0 0.0
      %1733 = vmatpush2.msra.mxu0 0.0
      %1734 = vmatprep.subr.mxu0 0.0
      %1735 = vmatpush2.msra.mxu0 0.0
      %1736 = vmatprep.subr.mxu0 0.0
      %1737 = vmatpush2.msra.mxu0 0.0
      %1738 = vmatprep.mubr.f32.mxu0 0.0
      %1739 = vmatmul.mubr.f32.gmra.mxu0 %v1651
      %v1740 = vpop.f32.mrf.mxu0
      %v1741 = vadd.f32 0.0, %v1740
      %v1742 = vpop.f32.mrf.mxu0
      %1743 = vmatprep.mubr.f32.mxu0 0.0
      %1744 = vmatmul.mubr.f32.gmra.mxu0 %v1654
      %v1745 = vpop.f32.mrf.mxu0
      %v1746 = vadd.f32 0.0, %v1745
      %v1747 = vpop.f32.mrf.mxu0
      %1748 = vmatprep.mubr.f32.mxu0 0.0
      %1749 = vmatmul.mubr.f32.gmra.mxu0 %v1657
      %v1750 = vpop.f32.mrf.mxu0
      %v1751 = vadd.f32 0.0, %v1750
      %v1752 = vpop.f32.mrf.mxu0
      %1753 = vmatprep.mubr.f32.mxu0 0.0
      %1754 = vmatmul.mubr.f32.gmra.mxu0 %v1660
      %v1755 = vpop.f32.mrf.mxu0
      %v1756 = vadd.f32 0.0, %v1755
      %v1757 = vpop.f32.mrf.mxu0
      %1758 = vmatprep.mubr.f32.mxu0 0.0
      %1759 = vmatmul.mubr.f32.gmra.mxu0 %v1663
      %v1760 = vpop.f32.mrf.mxu0
      %v1761 = vadd.f32 0.0, %v1760
      %v1762 = vpop.f32.mrf.mxu0
      %1763 = vmatprep.mubr.f32.mxu0 0.0
      %1764 = vmatmul.mubr.f32.gmra.mxu0 %v1666
      %v1765 = vpop.f32.mrf.mxu0
      %v1766 = vadd.f32 0.0, %v1765
      %v1767 = vpop.f32.mrf.mxu0
      %1768 = vmatprep.mubr.f32.mxu0 0.0
      %1769 = vmatmul.mubr.f32.gmra.mxu0 %v1669
      %v1770 = vpop.f32.mrf.mxu0
      %v1771 = vadd.f32 0.0, %v1770
      %v1772 = vpop.f32.mrf.mxu0
      %1773 = vmatprep.mubr.f32.mxu0 0.0
      %1774 = vmatmul.mubr.f32.gmra.mxu0 %v1672
      %v1775 = vpop.f32.mrf.mxu0
      %v1776 = vadd.f32 0.0, %v1775
      %v1777 = vpop.f32.mrf.mxu0
      %1778 = vdwg.mxu0
      %1779 = vrot.lane.b32.xlu0 %v477, 112
      %v1780 = vpop.permute.xlu0 %1779
      %1781 = vrot.lane.b32.xlu0 %v482, 112
      %v1782 = vpop.permute.xlu0 %1781
      %1783 = vrot.lane.b32.xlu0 %v487, 112
      %v1784 = vpop.permute.xlu0 %1783
      %1785 = vrot.lane.b32.xlu0 %v492, 112
      %v1786 = vpop.permute.xlu0 %1785
      %1787 = vrot.lane.b32.xlu0 %v497, 112
      %v1788 = vpop.permute.xlu0 %1787
      %1789 = vrot.lane.b32.xlu0 %v502, 112
      %v1790 = vpop.permute.xlu0 %1789
      %1791 = vrot.lane.b32.xlu0 %v507, 112
      %v1792 = vpop.permute.xlu0 %1791
      %1793 = vrot.lane.b32.xlu0 %v512, 112
      %v1794 = vpop.permute.xlu0 %1793
      %v1804 = vsel %vm1273, %v1579, 0
      %v1807 = vsel %vm1273, %v1581, 0
      %v1810 = vsel %vm1273, %v1583, 0
      %v1813 = vsel %vm1273, %v1585, 0
      %v1816 = vsel %vm1273, %v1587, 0
      %v1819 = vsel %vm1273, %v1589, 0
      %v1822 = vsel %vm1273, %v1591, 0
      %v1825 = vsel %vm1273, %v1593, 0
      %1827 = vmatprep.subr.mxu0 0.0
      %1828 = vmatpush1.msra.mxu0 0.0
      %1829 = vmatprep.subr.mxu0 0.0
      %1830 = vmatpush1.msra.mxu0 0.0
      %1831 = vmatprep.subr.mxu0 0.0
      %1832 = vmatpush1.msra.mxu0 0.0
      %1833 = vmatprep.subr.mxu0 0.0
      %1834 = vmatpush1.msra.mxu0 0.0
      %1835 = vmatprep.subr.mxu0 0.0
      %1836 = vmatpush1.msra.mxu0 0.0
      %1837 = vmatprep.subr.mxu0 0.0
      %1838 = vmatpush1.msra.mxu0 0.0
      %1839 = vmatprep.subr.mxu0 0.0
      %1840 = vmatpush1.msra.mxu0 0.0
      %1841 = vmatprep.subr.mxu0 0.0
      %1842 = vmatpush1.msra.mxu0 0.0
      %1843 = vmatprep.subr.mxu0 0.0
      %1844 = vmatpush1.msra.mxu0 %v1794
      %1845 = vmatprep.subr.mxu0 0.0
      %1846 = vmatpush1.msra.mxu0 %v1792
      %1847 = vmatprep.subr.mxu0 0.0
      %1848 = vmatpush1.msra.mxu0 %v1790
      %1849 = vmatprep.subr.mxu0 0.0
      %1850 = vmatpush1.msra.mxu0 %v1788
      %1851 = vmatprep.subr.mxu0 0.0
      %1852 = vmatpush1.msra.mxu0 %v1786
      %1853 = vmatprep.subr.mxu0 0.0
      %1854 = vmatpush1.msra.mxu0 %v1784
      %1855 = vmatprep.subr.mxu0 0.0
      %1856 = vmatpush1.msra.mxu0 %v1782
      %1857 = vmatprep.subr.mxu0 0.0
      %1858 = vmatpush1.msra.mxu0 %v1780
      %1859 = vmatprep.subr.mxu0 0.0
      %1860 = vmatpush2.msra.mxu0 0.0
      %1861 = vmatprep.subr.mxu0 0.0
      %1862 = vmatpush2.msra.mxu0 0.0
      %1863 = vmatprep.subr.mxu0 0.0
      %1864 = vmatpush2.msra.mxu0 0.0
      %1865 = vmatprep.subr.mxu0 0.0
      %1866 = vmatpush2.msra.mxu0 0.0
      %1867 = vmatprep.subr.mxu0 0.0
      %1868 = vmatpush2.msra.mxu0 0.0
      %1869 = vmatprep.subr.mxu0 0.0
      %1870 = vmatpush2.msra.mxu0 0.0
      %1871 = vmatprep.subr.mxu0 0.0
      %1872 = vmatpush2.msra.mxu0 0.0
      %1873 = vmatprep.subr.mxu0 0.0
      %1874 = vmatpush2.msra.mxu0 0.0
      %1875 = vmatprep.subr.mxu0 0.0
      %1876 = vmatpush2.msra.mxu0 0.0
      %1877 = vmatprep.subr.mxu0 0.0
      %1878 = vmatpush2.msra.mxu0 0.0
      %1879 = vmatprep.subr.mxu0 0.0
      %1880 = vmatpush2.msra.mxu0 0.0
      %1881 = vmatprep.subr.mxu0 0.0
      %1882 = vmatpush2.msra.mxu0 0.0
      %1883 = vmatprep.subr.mxu0 0.0
      %1884 = vmatpush2.msra.mxu0 0.0
      %1885 = vmatprep.subr.mxu0 0.0
      %1886 = vmatpush2.msra.mxu0 0.0
      %1887 = vmatprep.subr.mxu0 0.0
      %1888 = vmatpush2.msra.mxu0 0.0
      %1889 = vmatprep.subr.mxu0 0.0
      %1890 = vmatpush2.msra.mxu0 0.0
      %1891 = vmatprep.mubr.f32.mxu0 0.0
      %1892 = vmatmul.mubr.f32.gmra.mxu0 %v1804
      %v1893 = vpop.f32.mrf.mxu0
      %v1894 = vadd.f32 0.0, %v1893
      %v1895 = vpop.f32.mrf.mxu0
      %1896 = vmatprep.mubr.f32.mxu0 0.0
      %1897 = vmatmul.mubr.f32.gmra.mxu0 %v1807
      %v1898 = vpop.f32.mrf.mxu0
      %v1899 = vadd.f32 0.0, %v1898
      %v1900 = vpop.f32.mrf.mxu0
      %1901 = vmatprep.mubr.f32.mxu0 0.0
      %1902 = vmatmul.mubr.f32.gmra.mxu0 %v1810
      %v1903 = vpop.f32.mrf.mxu0
      %v1904 = vadd.f32 0.0, %v1903
      %v1905 = vpop.f32.mrf.mxu0
      %1906 = vmatprep.mubr.f32.mxu0 0.0
      %1907 = vmatmul.mubr.f32.gmra.mxu0 %v1813
      %v1908 = vpop.f32.mrf.mxu0
      %v1909 = vadd.f32 0.0, %v1908
      %v1910 = vpop.f32.mrf.mxu0
      %1911 = vmatprep.mubr.f32.mxu0 0.0
      %1912 = vmatmul.mubr.f32.gmra.mxu0 %v1816
      %v1913 = vpop.f32.mrf.mxu0
      %v1914 = vadd.f32 0.0, %v1913
      %v1915 = vpop.f32.mrf.mxu0
      %1916 = vmatprep.mubr.f32.mxu0 0.0
      %1917 = vmatmul.mubr.f32.gmra.mxu0 %v1819
      %v1918 = vpop.f32.mrf.mxu0
      %v1919 = vadd.f32 0.0, %v1918
      %v1920 = vpop.f32.mrf.mxu0
      %1921 = vmatprep.mubr.f32.mxu0 0.0
      %1922 = vmatmul.mubr.f32.gmra.mxu0 %v1822
      %v1923 = vpop.f32.mrf.mxu0
      %v1924 = vadd.f32 0.0, %v1923
      %v1925 = vpop.f32.mrf.mxu0
      %1926 = vmatprep.mubr.f32.mxu0 0.0
      %1927 = vmatmul.mubr.f32.gmra.mxu0 %v1825
      %v1928 = vpop.f32.mrf.mxu0
      %v1929 = vadd.f32 0.0, %v1928
      %v1930 = vpop.f32.mrf.mxu0
      %1931 = vdwg.mxu0
      %1932 = vrot.lane.b32.xlu0 %v517, 112
      %v1933 = vpop.permute.xlu0 %1932
      %1934 = vrot.lane.b32.xlu0 %v522, 112
      %v1935 = vpop.permute.xlu0 %1934
      %1936 = vrot.lane.b32.xlu0 %v527, 112
      %v1937 = vpop.permute.xlu0 %1936
      %1938 = vrot.lane.b32.xlu0 %v532, 112
      %v1939 = vpop.permute.xlu0 %1938
      %1940 = vrot.lane.b32.xlu0 %v537, 112
      %v1941 = vpop.permute.xlu0 %1940
      %1942 = vrot.lane.b32.xlu0 %v542, 112
      %v1943 = vpop.permute.xlu0 %1942
      %1944 = vrot.lane.b32.xlu0 %v547, 112
      %v1945 = vpop.permute.xlu0 %1944
      %1946 = vrot.lane.b32.xlu0 %v552, 112
      %v1947 = vpop.permute.xlu0 %1946
      %v1957 = vsel %vm1273, %v1595, 0
      %v1960 = vsel %vm1273, %v1597, 0
      %v1963 = vsel %vm1273, %v1599, 0
      %v1966 = vsel %vm1273, %v1601, 0
      %v1969 = vsel %vm1273, %v1603, 0
      %v1972 = vsel %vm1273, %v1605, 0
      %v1975 = vsel %vm1273, %v1607, 0
      %v1978 = vsel %vm1273, %v1609, 0
      %1980 = vmatprep.subr.mxu0 0.0
      %1981 = vmatpush1.msra.mxu0 0.0
      %1982 = vmatprep.subr.mxu0 0.0
      %1983 = vmatpush1.msra.mxu0 0.0
      %1984 = vmatprep.subr.mxu0 0.0
      %1985 = vmatpush1.msra.mxu0 0.0
      %1986 = vmatprep.subr.mxu0 0.0
      %1987 = vmatpush1.msra.mxu0 0.0
      %1988 = vmatprep.subr.mxu0 0.0
      %1989 = vmatpush1.msra.mxu0 0.0
      %1990 = vmatprep.subr.mxu0 0.0
      %1991 = vmatpush1.msra.mxu0 0.0
      %1992 = vmatprep.subr.mxu0 0.0
      %1993 = vmatpush1.msra.mxu0 0.0
      %1994 = vmatprep.subr.mxu0 0.0
      %1995 = vmatpush1.msra.mxu0 0.0
      %1996 = vmatprep.subr.mxu0 0.0
      %1997 = vmatpush1.msra.mxu0 %v1947
      %1998 = vmatprep.subr.mxu0 0.0
      %1999 = vmatpush1.msra.mxu0 %v1945
      %2000 = vmatprep.subr.mxu0 0.0
      %2001 = vmatpush1.msra.mxu0 %v1943
      %2002 = vmatprep.subr.mxu0 0.0
      %2003 = vmatpush1.msra.mxu0 %v1941
      %2004 = vmatprep.subr.mxu0 0.0
      %2005 = vmatpush1.msra.mxu0 %v1939
      %2006 = vmatprep.subr.mxu0 0.0
      %2007 = vmatpush1.msra.mxu0 %v1937
      %2008 = vmatprep.subr.mxu0 0.0
      %2009 = vmatpush1.msra.mxu0 %v1935
      %2010 = vmatprep.subr.mxu0 0.0
      %2011 = vmatpush1.msra.mxu0 %v1933
      %2012 = vmatprep.subr.mxu0 0.0
      %2013 = vmatpush2.msra.mxu0 0.0
      %2014 = vmatprep.subr.mxu0 0.0
      %2015 = vmatpush2.msra.mxu0 0.0
      %2016 = vmatprep.subr.mxu0 0.0
      %2017 = vmatpush2.msra.mxu0 0.0
      %2018 = vmatprep.subr.mxu0 0.0
      %2019 = vmatpush2.msra.mxu0 0.0
      %2020 = vmatprep.subr.mxu0 0.0
      %2021 = vmatpush2.msra.mxu0 0.0
      %2022 = vmatprep.subr.mxu0 0.0
      %2023 = vmatpush2.msra.mxu0 0.0
      %2024 = vmatprep.subr.mxu0 0.0
      %2025 = vmatpush2.msra.mxu0 0.0
      %2026 = vmatprep.subr.mxu0 0.0
      %2027 = vmatpush2.msra.mxu0 0.0
      %2028 = vmatprep.subr.mxu0 0.0
      %2029 = vmatpush2.msra.mxu0 0.0
      %2030 = vmatprep.subr.mxu0 0.0
      %2031 = vmatpush2.msra.mxu0 0.0
      %2032 = vmatprep.subr.mxu0 0.0
      %2033 = vmatpush2.msra.mxu0 0.0
      %2034 = vmatprep.subr.mxu0 0.0
      %2035 = vmatpush2.msra.mxu0 0.0
      %2036 = vmatprep.subr.mxu0 0.0
      %2037 = vmatpush2.msra.mxu0 0.0
      %2038 = vmatprep.subr.mxu0 0.0
      %2039 = vmatpush2.msra.mxu0 0.0
      %2040 = vmatprep.subr.mxu0 0.0
      %2041 = vmatpush2.msra.mxu0 0.0
      %2042 = vmatprep.subr.mxu0 0.0
      %2043 = vmatpush2.msra.mxu0 0.0
      %2044 = vmatprep.mubr.f32.mxu0 0.0
      %2045 = vmatmul.mubr.f32.gmra.mxu0 %v1957
      %v2046 = vpop.f32.mrf.mxu0
      %v2047 = vadd.f32 0.0, %v2046
      %v2048 = vpop.f32.mrf.mxu0
      %2049 = vmatprep.mubr.f32.mxu0 0.0
      %2050 = vmatmul.mubr.f32.gmra.mxu0 %v1960
      %v2051 = vpop.f32.mrf.mxu0
      %v2052 = vadd.f32 0.0, %v2051
      %v2053 = vpop.f32.mrf.mxu0
      %2054 = vmatprep.mubr.f32.mxu0 0.0
      %2055 = vmatmul.mubr.f32.gmra.mxu0 %v1963
      %v2056 = vpop.f32.mrf.mxu0
      %v2057 = vadd.f32 0.0, %v2056
      %v2058 = vpop.f32.mrf.mxu0
      %2059 = vmatprep.mubr.f32.mxu0 0.0
      %2060 = vmatmul.mubr.f32.gmra.mxu0 %v1966
      %v2061 = vpop.f32.mrf.mxu0
      %v2062 = vadd.f32 0.0, %v2061
      %v2063 = vpop.f32.mrf.mxu0
      %2064 = vmatprep.mubr.f32.mxu0 0.0
      %2065 = vmatmul.mubr.f32.gmra.mxu0 %v1969
      %v2066 = vpop.f32.mrf.mxu0
      %v2067 = vadd.f32 0.0, %v2066
      %v2068 = vpop.f32.mrf.mxu0
      %2069 = vmatprep.mubr.f32.mxu0 0.0
      %2070 = vmatmul.mubr.f32.gmra.mxu0 %v1972
      %v2071 = vpop.f32.mrf.mxu0
      %v2072 = vadd.f32 0.0, %v2071
      %v2073 = vpop.f32.mrf.mxu0
      %2074 = vmatprep.mubr.f32.mxu0 0.0
      %2075 = vmatmul.mubr.f32.gmra.mxu0 %v1975
      %v2076 = vpop.f32.mrf.mxu0
      %v2077 = vadd.f32 0.0, %v2076
      %v2078 = vpop.f32.mrf.mxu0
      %2079 = vmatprep.mubr.f32.mxu0 0.0
      %2080 = vmatmul.mubr.f32.gmra.mxu0 %v1978
      %v2081 = vpop.f32.mrf.mxu0
      %v2082 = vadd.f32 0.0, %v2081
      %v2083 = vpop.f32.mrf.mxu0
      %2084 = vdwg.mxu0
      %2085 = vrot.lane.b32.xlu0 %v557, 112
      %v2086 = vpop.permute.xlu0 %2085
      %2087 = vrot.lane.b32.xlu0 %v562, 112
      %v2088 = vpop.permute.xlu0 %2087
      %2089 = vrot.lane.b32.xlu0 %v567, 112
      %v2090 = vpop.permute.xlu0 %2089
      %2091 = vrot.lane.b32.xlu0 %v572, 112
      %v2092 = vpop.permute.xlu0 %2091
      %2093 = vrot.lane.b32.xlu0 %v577, 112
      %v2094 = vpop.permute.xlu0 %2093
      %2095 = vrot.lane.b32.xlu0 %v582, 112
      %v2096 = vpop.permute.xlu0 %2095
      %2097 = vrot.lane.b32.xlu0 %v587, 112
      %v2098 = vpop.permute.xlu0 %2097
      %2099 = vrot.lane.b32.xlu0 %v592, 112
      %v2100 = vpop.permute.xlu0 %2099
      %v2110 = vsel %vm1273, %v1611, 0
      %v2113 = vsel %vm1273, %v1613, 0
      %v2116 = vsel %vm1273, %v1615, 0
      %v2119 = vsel %vm1273, %v1617, 0
      %v2122 = vsel %vm1273, %v1619, 0
      %v2125 = vsel %vm1273, %v1621, 0
      %v2128 = vsel %vm1273, %v1623, 0
      %v2131 = vsel %vm1273, %v1625, 0
      %2133 = vmatprep.subr.mxu0 0.0
      %2134 = vmatpush1.msra.mxu0 0.0
      %2135 = vmatprep.subr.mxu0 0.0
      %2136 = vmatpush1.msra.mxu0 0.0
      %2137 = vmatprep.subr.mxu0 0.0
      %2138 = vmatpush1.msra.mxu0 0.0
      %2139 = vmatprep.subr.mxu0 0.0
      %2140 = vmatpush1.msra.mxu0 0.0
      %2141 = vmatprep.subr.mxu0 0.0
      %2142 = vmatpush1.msra.mxu0 0.0
      %2143 = vmatprep.subr.mxu0 0.0
      %2144 = vmatpush1.msra.mxu0 0.0
      %2145 = vmatprep.subr.mxu0 0.0
      %2146 = vmatpush1.msra.mxu0 0.0
      %2147 = vmatprep.subr.mxu0 0.0
      %2148 = vmatpush1.msra.mxu0 0.0
      %2149 = vmatprep.subr.mxu0 0.0
      %2150 = vmatpush1.msra.mxu0 %v2100
      %2151 = vmatprep.subr.mxu0 0.0
      %2152 = vmatpush1.msra.mxu0 %v2098
      %2153 = vmatprep.subr.mxu0 0.0
      %2154 = vmatpush1.msra.mxu0 %v2096
      %2155 = vmatprep.subr.mxu0 0.0
      %2156 = vmatpush1.msra.mxu0 %v2094
      %2157 = vmatprep.subr.mxu0 0.0
      %2158 = vmatpush1.msra.mxu0 %v2092
      %2159 = vmatprep.subr.mxu0 0.0
      %2160 = vmatpush1.msra.mxu0 %v2090
      %2161 = vmatprep.subr.mxu0 0.0
      %2162 = vmatpush1.msra.mxu0 %v2088
      %2163 = vmatprep.subr.mxu0 0.0
      %2164 = vmatpush1.msra.mxu0 %v2086
      %2165 = vmatprep.subr.mxu0 0.0
      %2166 = vmatpush2.msra.mxu0 0.0
      %2167 = vmatprep.subr.mxu0 0.0
      %2168 = vmatpush2.msra.mxu0 0.0
      %2169 = vmatprep.subr.mxu0 0.0
      %2170 = vmatpush2.msra.mxu0 0.0
      %2171 = vmatprep.subr.mxu0 0.0
      %2172 = vmatpush2.msra.mxu0 0.0
      %2173 = vmatprep.subr.mxu0 0.0
      %2174 = vmatpush2.msra.mxu0 0.0
      %2175 = vmatprep.subr.mxu0 0.0
      %2176 = vmatpush2.msra.mxu0 0.0
      %2177 = vmatprep.subr.mxu0 0.0
      %2178 = vmatpush2.msra.mxu0 0.0
      %2179 = vmatprep.subr.mxu0 0.0
      %2180 = vmatpush2.msra.mxu0 0.0
      %2181 = vmatprep.subr.mxu0 0.0
      %2182 = vmatpush2.msra.mxu0 0.0
      %2183 = vmatprep.subr.mxu0 0.0
      %2184 = vmatpush2.msra.mxu0 0.0
      %2185 = vmatprep.subr.mxu0 0.0
      %2186 = vmatpush2.msra.mxu0 0.0
      %2187 = vmatprep.subr.mxu0 0.0
      %2188 = vmatpush2.msra.mxu0 0.0
      %2189 = vmatprep.subr.mxu0 0.0
      %2190 = vmatpush2.msra.mxu0 0.0
      %2191 = vmatprep.subr.mxu0 0.0
      %2192 = vmatpush2.msra.mxu0 0.0
      %2193 = vmatprep.subr.mxu0 0.0
      %2194 = vmatpush2.msra.mxu0 0.0
      %2195 = vmatprep.subr.mxu0 0.0
      %2196 = vmatpush2.msra.mxu0 0.0
      %2197 = vmatprep.mubr.f32.mxu0 0.0
      %2198 = vmatmul.mubr.f32.gmra.mxu0 %v2110
      %v2199 = vpop.f32.mrf.mxu0
      %v2200 = vadd.f32 0.0, %v2199
      %v2201 = vpop.f32.mrf.mxu0
      %2202 = vmatprep.mubr.f32.mxu0 0.0
      %2203 = vmatmul.mubr.f32.gmra.mxu0 %v2113
      %v2204 = vpop.f32.mrf.mxu0
      %v2205 = vadd.f32 0.0, %v2204
      %v2206 = vpop.f32.mrf.mxu0
      %2207 = vmatprep.mubr.f32.mxu0 0.0
      %2208 = vmatmul.mubr.f32.gmra.mxu0 %v2116
      %v2209 = vpop.f32.mrf.mxu0
      %v2210 = vadd.f32 0.0, %v2209
      %v2211 = vpop.f32.mrf.mxu0
      %2212 = vmatprep.mubr.f32.mxu0 0.0
      %2213 = vmatmul.mubr.f32.gmra.mxu0 %v2119
      %v2214 = vpop.f32.mrf.mxu0
      %v2215 = vadd.f32 0.0, %v2214
      %v2216 = vpop.f32.mrf.mxu0
      %2217 = vmatprep.mubr.f32.mxu0 0.0
      %2218 = vmatmul.mubr.f32.gmra.mxu0 %v2122
      %v2219 = vpop.f32.mrf.mxu0
      %v2220 = vadd.f32 0.0, %v2219
      %v2221 = vpop.f32.mrf.mxu0
      %2222 = vmatprep.mubr.f32.mxu0 0.0
      %2223 = vmatmul.mubr.f32.gmra.mxu0 %v2125
      %v2224 = vpop.f32.mrf.mxu0
      %v2225 = vadd.f32 0.0, %v2224
      %v2226 = vpop.f32.mrf.mxu0
      %2227 = vmatprep.mubr.f32.mxu0 0.0
      %2228 = vmatmul.mubr.f32.gmra.mxu0 %v2128
      %v2229 = vpop.f32.mrf.mxu0
      %v2230 = vadd.f32 0.0, %v2229
      %v2231 = vpop.f32.mrf.mxu0
      %2232 = vmatprep.mubr.f32.mxu0 0.0
      %2233 = vmatmul.mubr.f32.gmra.mxu0 %v2131
      %v2234 = vpop.f32.mrf.mxu0
      %v2235 = vadd.f32 0.0, %v2234
      %v2236 = vpop.f32.mrf.mxu0
      %2237 = vdwg.mxu0
      %2238 = vrot.lane.b32.xlu0 %v437, 124
      %v2239 = vpop.permute.xlu0 %2238
      %2240 = vrot.lane.b32.xlu0 %v442, 124
      %v2241 = vpop.permute.xlu0 %2240
      %2242 = vrot.lane.b32.xlu0 %v447, 124
      %v2243 = vpop.permute.xlu0 %2242
      %2244 = vrot.lane.b32.xlu0 %v452, 124
      %v2245 = vpop.permute.xlu0 %2244
      %2246 = vrot.lane.b32.xlu0 %v457, 124
      %v2247 = vpop.permute.xlu0 %2246
      %2248 = vrot.lane.b32.xlu0 %v462, 124
      %v2249 = vpop.permute.xlu0 %2248
      %2250 = vrot.lane.b32.xlu0 %v467, 124
      %v2251 = vpop.permute.xlu0 %2250
      %2252 = vrot.lane.b32.xlu0 %v472, 124
      %v2253 = vpop.permute.xlu0 %2252
      %2254 = vrot.lane.b32.xlu0 %v437, 116
      %v2255 = vpop.permute.xlu0 %2254
      %2256 = vrot.lane.b32.xlu0 %v442, 116
      %v2257 = vpop.permute.xlu0 %2256
      %2258 = vrot.lane.b32.xlu0 %v447, 116
      %v2259 = vpop.permute.xlu0 %2258
      %2260 = vrot.lane.b32.xlu0 %v452, 116
      %v2261 = vpop.permute.xlu0 %2260
      %2262 = vrot.lane.b32.xlu0 %v457, 116
      %v2263 = vpop.permute.xlu0 %2262
      %2264 = vrot.lane.b32.xlu0 %v462, 116
      %v2265 = vpop.permute.xlu0 %2264
      %2266 = vrot.lane.b32.xlu0 %v467, 116
      %v2267 = vpop.permute.xlu0 %2266
      %2268 = vrot.lane.b32.xlu0 %v472, 116
      %v2269 = vpop.permute.xlu0 %2268
      %v2270 = vsel %vm620, %v2239, 0
      %v2272 = vsel %vm620, %v2241, 0
      %v2274 = vsel %vm620, %v2243, 0
      %v2276 = vsel %vm620, %v2245, 0
      %v2278 = vsel %vm620, %v2247, 0
      %v2280 = vsel %vm620, %v2249, 0
      %v2282 = vsel %vm620, %v2251, 0
      %v2284 = vsel %vm620, %v2253, 0
      %v2286 = vsel %vm620, %v2255, 0
      %v2288 = vsel %vm620, %v2257, 0
      %v2290 = vsel %vm620, %v2259, 0
      %v2292 = vsel %vm620, %v2261, 0
      %v2294 = vsel %vm620, %v2263, 0
      %v2296 = vsel %vm620, %v2265, 0
      %v2298 = vsel %vm620, %v2267, 0
      %v2300 = vsel %vm620, %v2269, 0
      %2302 = vmatprep.subr.mxu0 0.0
      %2303 = vmatpush1.xpose.msra.mxu0 0.0
      %2304 = vmatprep.subr.mxu0 0.0
      %2305 = vmatpush1.xpose.msra.mxu0 0.0
      %2306 = vmatprep.subr.mxu0 0.0
      %2307 = vmatpush1.xpose.msra.mxu0 0.0
      %2308 = vmatprep.subr.mxu0 0.0
      %2309 = vmatpush1.xpose.msra.mxu0 0.0
      %2310 = vmatprep.subr.mxu0 0.0
      %2311 = vmatpush1.xpose.msra.mxu0 0.0
      %2312 = vmatprep.subr.mxu0 0.0
      %2313 = vmatpush1.xpose.msra.mxu0 0.0
      %2314 = vmatprep.subr.mxu0 0.0
      %2315 = vmatpush1.xpose.msra.mxu0 0.0
      %2316 = vmatprep.subr.mxu0 0.0
      %2317 = vmatpush1.xpose.msra.mxu0 0.0
      %2318 = vmatprep.subr.mxu0 0.0
      %2319 = vmatpush1.xpose.msra.mxu0 %v2300
      %2320 = vmatprep.subr.mxu0 0.0
      %2321 = vmatpush1.xpose.msra.mxu0 %v2298
      %2322 = vmatprep.subr.mxu0 0.0
      %2323 = vmatpush1.xpose.msra.mxu0 %v2296
      %2324 = vmatprep.subr.mxu0 0.0
      %2325 = vmatpush1.xpose.msra.mxu0 %v2294
      %2326 = vmatprep.subr.mxu0 0.0
      %2327 = vmatpush1.xpose.msra.mxu0 %v2292
      %2328 = vmatprep.subr.mxu0 0.0
      %2329 = vmatpush1.xpose.msra.mxu0 %v2290
      %2330 = vmatprep.subr.mxu0 0.0
      %2331 = vmatpush1.xpose.msra.mxu0 %v2288
      %2332 = vmatprep.subr.mxu0 0.0
      %2333 = vmatpush1.xpose.msra.mxu0 %v2286
      %2334 = vmatprep.subr.mxu0 0.0
      %2335 = vmatpush2.xpose.msra.mxu0 0.0
      %2336 = vmatprep.subr.mxu0 0.0
      %2337 = vmatpush2.xpose.msra.mxu0 0.0
      %2338 = vmatprep.subr.mxu0 0.0
      %2339 = vmatpush2.xpose.msra.mxu0 0.0
      %2340 = vmatprep.subr.mxu0 0.0
      %2341 = vmatpush2.xpose.msra.mxu0 0.0
      %2342 = vmatprep.subr.mxu0 0.0
      %2343 = vmatpush2.xpose.msra.mxu0 0.0
      %2344 = vmatprep.subr.mxu0 0.0
      %2345 = vmatpush2.xpose.msra.mxu0 0.0
      %2346 = vmatprep.subr.mxu0 0.0
      %2347 = vmatpush2.xpose.msra.mxu0 0.0
      %2348 = vmatprep.subr.mxu0 0.0
      %2349 = vmatpush2.xpose.msra.mxu0 0.0
      %2350 = vmatprep.subr.mxu0 0.0
      %2351 = vmatpush2.xpose.msra.mxu0 0.0
      %2352 = vmatprep.subr.mxu0 0.0
      %2353 = vmatpush2.xpose.msra.mxu0 0.0
      %2354 = vmatprep.subr.mxu0 0.0
      %2355 = vmatpush2.xpose.msra.mxu0 0.0
      %2356 = vmatprep.subr.mxu0 0.0
      %2357 = vmatpush2.xpose.msra.mxu0 0.0
      %2358 = vmatprep.subr.mxu0 0.0
      %2359 = vmatpush2.xpose.msra.mxu0 0.0
      %2360 = vmatprep.subr.mxu0 0.0
      %2361 = vmatpush2.xpose.msra.mxu0 0.0
      %2362 = vmatprep.subr.mxu0 0.0
      %2363 = vmatpush2.xpose.msra.mxu0 0.0
      %2364 = vmatprep.subr.mxu0 0.0
      %2365 = vmatpush2.xpose.msra.mxu0 0.0
      %2366 = vmatprep.mubr.f32.mxu0 0.0
      %2367 = vmatmul.mubr.f32.gmra.mxu0 %v2270
      %v2368 = vpop.f32.mrf.mxu0
      %v2369 = vadd.f32 0.0, %v2368
      %v2370 = vpop.f32.mrf.mxu0
      %2371 = vmatprep.mubr.f32.mxu0 0.0
      %2372 = vmatmul.mubr.f32.gmra.mxu0 %v2272
      %v2373 = vpop.f32.mrf.mxu0
      %v2374 = vadd.f32 0.0, %v2373
      %v2375 = vpop.f32.mrf.mxu0
      %2376 = vmatprep.mubr.f32.mxu0 0.0
      %2377 = vmatmul.mubr.f32.gmra.mxu0 %v2274
      %v2378 = vpop.f32.mrf.mxu0
      %v2379 = vadd.f32 0.0, %v2378
      %v2380 = vpop.f32.mrf.mxu0
      %2381 = vmatprep.mubr.f32.mxu0 0.0
      %2382 = vmatmul.mubr.f32.gmra.mxu0 %v2276
      %v2383 = vpop.f32.mrf.mxu0
      %v2384 = vadd.f32 0.0, %v2383
      %v2385 = vpop.f32.mrf.mxu0
      %2386 = vmatprep.mubr.f32.mxu0 0.0
      %2387 = vmatmul.mubr.f32.gmra.mxu0 %v2278
      %v2388 = vpop.f32.mrf.mxu0
      %v2389 = vadd.f32 0.0, %v2388
      %v2390 = vpop.f32.mrf.mxu0
      %2391 = vmatprep.mubr.f32.mxu0 0.0
      %2392 = vmatmul.mubr.f32.gmra.mxu0 %v2280
      %v2393 = vpop.f32.mrf.mxu0
      %v2394 = vadd.f32 0.0, %v2393
      %v2395 = vpop.f32.mrf.mxu0
      %2396 = vmatprep.mubr.f32.mxu0 0.0
      %2397 = vmatmul.mubr.f32.gmra.mxu0 %v2282
      %v2398 = vpop.f32.mrf.mxu0
      %v2399 = vadd.f32 0.0, %v2398
      %v2400 = vpop.f32.mrf.mxu0
      %2401 = vmatprep.mubr.f32.mxu0 0.0
      %2402 = vmatmul.mubr.f32.gmra.mxu0 %v2284
      %v2403 = vpop.f32.mrf.mxu0
      %v2404 = vadd.f32 0.0, %v2403
      %v2405 = vpop.f32.mrf.mxu0
      %2406 = vdwg.mxu0
      %2407 = vrot.lane.b32.xlu0 %v477, 124
      %v2408 = vpop.permute.xlu0 %2407
      %2409 = vrot.lane.b32.xlu0 %v482, 124
      %v2410 = vpop.permute.xlu0 %2409
      %2411 = vrot.lane.b32.xlu0 %v487, 124
      %v2412 = vpop.permute.xlu0 %2411
      %2413 = vrot.lane.b32.xlu0 %v492, 124
      %v2414 = vpop.permute.xlu0 %2413
      %2415 = vrot.lane.b32.xlu0 %v497, 124
      %v2416 = vpop.permute.xlu0 %2415
      %2417 = vrot.lane.b32.xlu0 %v502, 124
      %v2418 = vpop.permute.xlu0 %2417
      %2419 = vrot.lane.b32.xlu0 %v507, 124
      %v2420 = vpop.permute.xlu0 %2419
      %2421 = vrot.lane.b32.xlu0 %v512, 124
      %v2422 = vpop.permute.xlu0 %2421
      %2423 = vrot.lane.b32.xlu0 %v477, 116
      %v2424 = vpop.permute.xlu0 %2423
      %2425 = vrot.lane.b32.xlu0 %v482, 116
      %v2426 = vpop.permute.xlu0 %2425
      %2427 = vrot.lane.b32.xlu0 %v487, 116
      %v2428 = vpop.permute.xlu0 %2427
      %2429 = vrot.lane.b32.xlu0 %v492, 116
      %v2430 = vpop.permute.xlu0 %2429
      %2431 = vrot.lane.b32.xlu0 %v497, 116
      %v2432 = vpop.permute.xlu0 %2431
      %2433 = vrot.lane.b32.xlu0 %v502, 116
      %v2434 = vpop.permute.xlu0 %2433
      %2435 = vrot.lane.b32.xlu0 %v507, 116
      %v2436 = vpop.permute.xlu0 %2435
      %2437 = vrot.lane.b32.xlu0 %v512, 116
      %v2438 = vpop.permute.xlu0 %2437
      %v2439 = vsel %vm620, %v2408, 0
      %v2441 = vsel %vm620, %v2410, 0
      %v2443 = vsel %vm620, %v2412, 0
      %v2445 = vsel %vm620, %v2414, 0
      %v2447 = vsel %vm620, %v2416, 0
      %v2449 = vsel %vm620, %v2418, 0
      %v2451 = vsel %vm620, %v2420, 0
      %v2453 = vsel %vm620, %v2422, 0
      %v2455 = vsel %vm620, %v2424, 0
      %v2457 = vsel %vm620, %v2426, 0
      %v2459 = vsel %vm620, %v2428, 0
      %v2461 = vsel %vm620, %v2430, 0
      %v2463 = vsel %vm620, %v2432, 0
      %v2465 = vsel %vm620, %v2434, 0
      %v2467 = vsel %vm620, %v2436, 0
      %v2469 = vsel %vm620, %v2438, 0
      %2471 = vmatprep.subr.mxu0 0.0
      %2472 = vmatpush1.xpose.msra.mxu0 0.0
      %2473 = vmatprep.subr.mxu0 0.0
      %2474 = vmatpush1.xpose.msra.mxu0 0.0
      %2475 = vmatprep.subr.mxu0 0.0
      %2476 = vmatpush1.xpose.msra.mxu0 0.0
      %2477 = vmatprep.subr.mxu0 0.0
      %2478 = vmatpush1.xpose.msra.mxu0 0.0
      %2479 = vmatprep.subr.mxu0 0.0
      %2480 = vmatpush1.xpose.msra.mxu0 0.0
      %2481 = vmatprep.subr.mxu0 0.0
      %2482 = vmatpush1.xpose.msra.mxu0 0.0
      %2483 = vmatprep.subr.mxu0 0.0
      %2484 = vmatpush1.xpose.msra.mxu0 0.0
      %2485 = vmatprep.subr.mxu0 0.0
      %2486 = vmatpush1.xpose.msra.mxu0 0.0
      %2487 = vmatprep.subr.mxu0 0.0
      %2488 = vmatpush1.xpose.msra.mxu0 %v2469
      %2489 = vmatprep.subr.mxu0 0.0
      %2490 = vmatpush1.xpose.msra.mxu0 %v2467
      %2491 = vmatprep.subr.mxu0 0.0
      %2492 = vmatpush1.xpose.msra.mxu0 %v2465
      %2493 = vmatprep.subr.mxu0 0.0
      %2494 = vmatpush1.xpose.msra.mxu0 %v2463
      %2495 = vmatprep.subr.mxu0 0.0
      %2496 = vmatpush1.xpose.msra.mxu0 %v2461
      %2497 = vmatprep.subr.mxu0 0.0
      %2498 = vmatpush1.xpose.msra.mxu0 %v2459
      %2499 = vmatprep.subr.mxu0 0.0
      %2500 = vmatpush1.xpose.msra.mxu0 %v2457
      %2501 = vmatprep.subr.mxu0 0.0
      %2502 = vmatpush1.xpose.msra.mxu0 %v2455
      %2503 = vmatprep.subr.mxu0 0.0
      %2504 = vmatpush2.xpose.msra.mxu0 0.0
      %2505 = vmatprep.subr.mxu0 0.0
      %2506 = vmatpush2.xpose.msra.mxu0 0.0
      %2507 = vmatprep.subr.mxu0 0.0
      %2508 = vmatpush2.xpose.msra.mxu0 0.0
      %2509 = vmatprep.subr.mxu0 0.0
      %2510 = vmatpush2.xpose.msra.mxu0 0.0
      %2511 = vmatprep.subr.mxu0 0.0
      %2512 = vmatpush2.xpose.msra.mxu0 0.0
      %2513 = vmatprep.subr.mxu0 0.0
      %2514 = vmatpush2.xpose.msra.mxu0 0.0
      %2515 = vmatprep.subr.mxu0 0.0
      %2516 = vmatpush2.xpose.msra.mxu0 0.0
      %2517 = vmatprep.subr.mxu0 0.0
      %2518 = vmatpush2.xpose.msra.mxu0 0.0
      %2519 = vmatprep.subr.mxu0 0.0
      %2520 = vmatpush2.xpose.msra.mxu0 0.0
      %2521 = vmatprep.subr.mxu0 0.0
      %2522 = vmatpush2.xpose.msra.mxu0 0.0
      %2523 = vmatprep.subr.mxu0 0.0
      %2524 = vmatpush2.xpose.msra.mxu0 0.0
      %2525 = vmatprep.subr.mxu0 0.0
      %2526 = vmatpush2.xpose.msra.mxu0 0.0
      %2527 = vmatprep.subr.mxu0 0.0
      %2528 = vmatpush2.xpose.msra.mxu0 0.0
      %2529 = vmatprep.subr.mxu0 0.0
      %2530 = vmatpush2.xpose.msra.mxu0 0.0
      %2531 = vmatprep.subr.mxu0 0.0
      %2532 = vmatpush2.xpose.msra.mxu0 0.0
      %2533 = vmatprep.subr.mxu0 0.0
      %2534 = vmatpush2.xpose.msra.mxu0 0.0
      %2535 = vmatprep.mubr.f32.mxu0 0.0
      %2536 = vmatmul.mubr.f32.gmra.mxu0 %v2439
      %v2537 = vpop.f32.mrf.mxu0
      %v2538 = vadd.f32 0.0, %v2537
      %v2539 = vpop.f32.mrf.mxu0
      %2540 = vmatprep.mubr.f32.mxu0 0.0
      %2541 = vmatmul.mubr.f32.gmra.mxu0 %v2441
      %v2542 = vpop.f32.mrf.mxu0
      %v2543 = vadd.f32 0.0, %v2542
      %v2544 = vpop.f32.mrf.mxu0
      %2545 = vmatprep.mubr.f32.mxu0 0.0
      %2546 = vmatmul.mubr.f32.gmra.mxu0 %v2443
      %v2547 = vpop.f32.mrf.mxu0
      %v2548 = vadd.f32 0.0, %v2547
      %v2549 = vpop.f32.mrf.mxu0
      %2550 = vmatprep.mubr.f32.mxu0 0.0
      %2551 = vmatmul.mubr.f32.gmra.mxu0 %v2445
      %v2552 = vpop.f32.mrf.mxu0
      %v2553 = vadd.f32 0.0, %v2552
      %v2554 = vpop.f32.mrf.mxu0
      %2555 = vmatprep.mubr.f32.mxu0 0.0
      %2556 = vmatmul.mubr.f32.gmra.mxu0 %v2447
      %v2557 = vpop.f32.mrf.mxu0
      %v2558 = vadd.f32 0.0, %v2557
      %v2559 = vpop.f32.mrf.mxu0
      %2560 = vmatprep.mubr.f32.mxu0 0.0
      %2561 = vmatmul.mubr.f32.gmra.mxu0 %v2449
      %v2562 = vpop.f32.mrf.mxu0
      %v2563 = vadd.f32 0.0, %v2562
      %v2564 = vpop.f32.mrf.mxu0
      %2565 = vmatprep.mubr.f32.mxu0 0.0
      %2566 = vmatmul.mubr.f32.gmra.mxu0 %v2451
      %v2567 = vpop.f32.mrf.mxu0
      %v2568 = vadd.f32 0.0, %v2567
      %v2569 = vpop.f32.mrf.mxu0
      %2570 = vmatprep.mubr.f32.mxu0 0.0
      %2571 = vmatmul.mubr.f32.gmra.mxu0 %v2453
      %v2572 = vpop.f32.mrf.mxu0
      %v2573 = vadd.f32 0.0, %v2572
      %v2574 = vpop.f32.mrf.mxu0
      %2575 = vdwg.mxu0
      %2576 = vrot.lane.b32.xlu0 %v517, 124
      %v2577 = vpop.permute.xlu0 %2576
      %2578 = vrot.lane.b32.xlu0 %v522, 124
      %v2579 = vpop.permute.xlu0 %2578
      %2580 = vrot.lane.b32.xlu0 %v527, 124
      %v2581 = vpop.permute.xlu0 %2580
      %2582 = vrot.lane.b32.xlu0 %v532, 124
      %v2583 = vpop.permute.xlu0 %2582
      %2584 = vrot.lane.b32.xlu0 %v537, 124
      %v2585 = vpop.permute.xlu0 %2584
      %2586 = vrot.lane.b32.xlu0 %v542, 124
      %v2587 = vpop.permute.xlu0 %2586
      %2588 = vrot.lane.b32.xlu0 %v547, 124
      %v2589 = vpop.permute.xlu0 %2588
      %2590 = vrot.lane.b32.xlu0 %v552, 124
      %v2591 = vpop.permute.xlu0 %2590
      %2592 = vrot.lane.b32.xlu0 %v517, 116
      %v2593 = vpop.permute.xlu0 %2592
      %2594 = vrot.lane.b32.xlu0 %v522, 116
      %v2595 = vpop.permute.xlu0 %2594
      %2596 = vrot.lane.b32.xlu0 %v527, 116
      %v2597 = vpop.permute.xlu0 %2596
      %2598 = vrot.lane.b32.xlu0 %v532, 116
      %v2599 = vpop.permute.xlu0 %2598
      %2600 = vrot.lane.b32.xlu0 %v537, 116
      %v2601 = vpop.permute.xlu0 %2600
      %2602 = vrot.lane.b32.xlu0 %v542, 116
      %v2603 = vpop.permute.xlu0 %2602
      %2604 = vrot.lane.b32.xlu0 %v547, 116
      %v2605 = vpop.permute.xlu0 %2604
      %2606 = vrot.lane.b32.xlu0 %v552, 116
      %v2607 = vpop.permute.xlu0 %2606
      %v2608 = vsel %vm620, %v2577, 0
      %v2610 = vsel %vm620, %v2579, 0
      %v2612 = vsel %vm620, %v2581, 0
      %v2614 = vsel %vm620, %v2583, 0
      %v2616 = vsel %vm620, %v2585, 0
      %v2618 = vsel %vm620, %v2587, 0
      %v2620 = vsel %vm620, %v2589, 0
      %v2622 = vsel %vm620, %v2591, 0
      %v2624 = vsel %vm620, %v2593, 0
      %v2626 = vsel %vm620, %v2595, 0
      %v2628 = vsel %vm620, %v2597, 0
      %v2630 = vsel %vm620, %v2599, 0
      %v2632 = vsel %vm620, %v2601, 0
      %v2634 = vsel %vm620, %v2603, 0
      %v2636 = vsel %vm620, %v2605, 0
      %v2638 = vsel %vm620, %v2607, 0
      %2640 = vmatprep.subr.mxu0 0.0
      %2641 = vmatpush1.xpose.msra.mxu0 0.0
      %2642 = vmatprep.subr.mxu0 0.0
      %2643 = vmatpush1.xpose.msra.mxu0 0.0
      %2644 = vmatprep.subr.mxu0 0.0
      %2645 = vmatpush1.xpose.msra.mxu0 0.0
      %2646 = vmatprep.subr.mxu0 0.0
      %2647 = vmatpush1.xpose.msra.mxu0 0.0
      %2648 = vmatprep.subr.mxu0 0.0
      %2649 = vmatpush1.xpose.msra.mxu0 0.0
      %2650 = vmatprep.subr.mxu0 0.0
      %2651 = vmatpush1.xpose.msra.mxu0 0.0
      %2652 = vmatprep.subr.mxu0 0.0
      %2653 = vmatpush1.xpose.msra.mxu0 0.0
      %2654 = vmatprep.subr.mxu0 0.0
      %2655 = vmatpush1.xpose.msra.mxu0 0.0
      %2656 = vmatprep.subr.mxu0 0.0
      %2657 = vmatpush1.xpose.msra.mxu0 %v2638
      %2658 = vmatprep.subr.mxu0 0.0
      %2659 = vmatpush1.xpose.msra.mxu0 %v2636
      %2660 = vmatprep.subr.mxu0 0.0
      %2661 = vmatpush1.xpose.msra.mxu0 %v2634
      %2662 = vmatprep.subr.mxu0 0.0
      %2663 = vmatpush1.xpose.msra.mxu0 %v2632
      %2664 = vmatprep.subr.mxu0 0.0
      %2665 = vmatpush1.xpose.msra.mxu0 %v2630
      %2666 = vmatprep.subr.mxu0 0.0
      %2667 = vmatpush1.xpose.msra.mxu0 %v2628
      %2668 = vmatprep.subr.mxu0 0.0
      %2669 = vmatpush1.xpose.msra.mxu0 %v2626
      %2670 = vmatprep.subr.mxu0 0.0
      %2671 = vmatpush1.xpose.msra.mxu0 %v2624
      %2672 = vmatprep.subr.mxu0 0.0
      %2673 = vmatpush2.xpose.msra.mxu0 0.0
      %2674 = vmatprep.subr.mxu0 0.0
      %2675 = vmatpush2.xpose.msra.mxu0 0.0
      %2676 = vmatprep.subr.mxu0 0.0
      %2677 = vmatpush2.xpose.msra.mxu0 0.0
      %2678 = vmatprep.subr.mxu0 0.0
      %2679 = vmatpush2.xpose.msra.mxu0 0.0
      %2680 = vmatprep.subr.mxu0 0.0
      %2681 = vmatpush2.xpose.msra.mxu0 0.0
      %2682 = vmatprep.subr.mxu0 0.0
      %2683 = vmatpush2.xpose.msra.mxu0 0.0
      %2684 = vmatprep.subr.mxu0 0.0
      %2685 = vmatpush2.xpose.msra.mxu0 0.0
      %2686 = vmatprep.subr.mxu0 0.0
      %2687 = vmatpush2.xpose.msra.mxu0 0.0
      %2688 = vmatprep.subr.mxu0 0.0
      %2689 = vmatpush2.xpose.msra.mxu0 0.0
      %2690 = vmatprep.subr.mxu0 0.0
      %2691 = vmatpush2.xpose.msra.mxu0 0.0
      %2692 = vmatprep.subr.mxu0 0.0
      %2693 = vmatpush2.xpose.msra.mxu0 0.0
      %2694 = vmatprep.subr.mxu0 0.0
      %2695 = vmatpush2.xpose.msra.mxu0 0.0
      %2696 = vmatprep.subr.mxu0 0.0
      %2697 = vmatpush2.xpose.msra.mxu0 0.0
      %2698 = vmatprep.subr.mxu0 0.0
      %2699 = vmatpush2.xpose.msra.mxu0 0.0
      %2700 = vmatprep.subr.mxu0 0.0
      %2701 = vmatpush2.xpose.msra.mxu0 0.0
      %2702 = vmatprep.subr.mxu0 0.0
      %2703 = vmatpush2.xpose.msra.mxu0 0.0
      %2704 = vmatprep.mubr.f32.mxu0 0.0
      %2705 = vmatmul.mubr.f32.gmra.mxu0 %v2608
      %v2706 = vpop.f32.mrf.mxu0
      %v2707 = vadd.f32 0.0, %v2706
      %v2708 = vpop.f32.mrf.mxu0
      %2709 = vmatprep.mubr.f32.mxu0 0.0
      %2710 = vmatmul.mubr.f32.gmra.mxu0 %v2610
      %v2711 = vpop.f32.mrf.mxu0
      %v2712 = vadd.f32 0.0, %v2711
      %v2713 = vpop.f32.mrf.mxu0
      %2714 = vmatprep.mubr.f32.mxu0 0.0
      %2715 = vmatmul.mubr.f32.gmra.mxu0 %v2612
      %v2716 = vpop.f32.mrf.mxu0
      %v2717 = vadd.f32 0.0, %v2716
      %v2718 = vpop.f32.mrf.mxu0
      %2719 = vmatprep.mubr.f32.mxu0 0.0
      %2720 = vmatmul.mubr.f32.gmra.mxu0 %v2614
      %v2721 = vpop.f32.mrf.mxu0
      %v2722 = vadd.f32 0.0, %v2721
      %v2723 = vpop.f32.mrf.mxu0
      %2724 = vmatprep.mubr.f32.mxu0 0.0
      %2725 = vmatmul.mubr.f32.gmra.mxu0 %v2616
      %v2726 = vpop.f32.mrf.mxu0
      %v2727 = vadd.f32 0.0, %v2726
      %v2728 = vpop.f32.mrf.mxu0
      %2729 = vmatprep.mubr.f32.mxu0 0.0
      %2730 = vmatmul.mubr.f32.gmra.mxu0 %v2618
      %v2731 = vpop.f32.mrf.mxu0
      %v2732 = vadd.f32 0.0, %v2731
      %v2733 = vpop.f32.mrf.mxu0
      %2734 = vmatprep.mubr.f32.mxu0 0.0
      %2735 = vmatmul.mubr.f32.gmra.mxu0 %v2620
      %v2736 = vpop.f32.mrf.mxu0
      %v2737 = vadd.f32 0.0, %v2736
      %v2738 = vpop.f32.mrf.mxu0
      %2739 = vmatprep.mubr.f32.mxu0 0.0
      %2740 = vmatmul.mubr.f32.gmra.mxu0 %v2622
      %v2741 = vpop.f32.mrf.mxu0
      %v2742 = vadd.f32 0.0, %v2741
      %v2743 = vpop.f32.mrf.mxu0
      %2744 = vdwg.mxu0
      %2745 = vrot.lane.b32.xlu0 %v557, 124
      %v2746 = vpop.permute.xlu0 %2745
      %2747 = vrot.lane.b32.xlu0 %v562, 124
      %v2748 = vpop.permute.xlu0 %2747
      %2749 = vrot.lane.b32.xlu0 %v567, 124
      %v2750 = vpop.permute.xlu0 %2749
      %2751 = vrot.lane.b32.xlu0 %v572, 124
      %v2752 = vpop.permute.xlu0 %2751
      %2753 = vrot.lane.b32.xlu0 %v577, 124
      %v2754 = vpop.permute.xlu0 %2753
      %2755 = vrot.lane.b32.xlu0 %v582, 124
      %v2756 = vpop.permute.xlu0 %2755
      %2757 = vrot.lane.b32.xlu0 %v587, 124
      %v2758 = vpop.permute.xlu0 %2757
      %2759 = vrot.lane.b32.xlu0 %v592, 124
      %v2760 = vpop.permute.xlu0 %2759
      %2761 = vrot.lane.b32.xlu0 %v557, 116
      %v2762 = vpop.permute.xlu0 %2761
      %2763 = vrot.lane.b32.xlu0 %v562, 116
      %v2764 = vpop.permute.xlu0 %2763
      %2765 = vrot.lane.b32.xlu0 %v567, 116
      %v2766 = vpop.permute.xlu0 %2765
      %2767 = vrot.lane.b32.xlu0 %v572, 116
      %v2768 = vpop.permute.xlu0 %2767
      %2769 = vrot.lane.b32.xlu0 %v577, 116
      %v2770 = vpop.permute.xlu0 %2769
      %2771 = vrot.lane.b32.xlu0 %v582, 116
      %v2772 = vpop.permute.xlu0 %2771
      %2773 = vrot.lane.b32.xlu0 %v587, 116
      %v2774 = vpop.permute.xlu0 %2773
      %2775 = vrot.lane.b32.xlu0 %v592, 116
      %v2776 = vpop.permute.xlu0 %2775
      %v2777 = vsel %vm620, %v2746, 0
      %v2779 = vsel %vm620, %v2748, 0
      %v2781 = vsel %vm620, %v2750, 0
      %v2783 = vsel %vm620, %v2752, 0
      %v2785 = vsel %vm620, %v2754, 0
      %v2787 = vsel %vm620, %v2756, 0
      %v2789 = vsel %vm620, %v2758, 0
      %v2791 = vsel %vm620, %v2760, 0
      %v2793 = vsel %vm620, %v2762, 0
      %v2795 = vsel %vm620, %v2764, 0
      %v2797 = vsel %vm620, %v2766, 0
      %v2799 = vsel %vm620, %v2768, 0
      %v2801 = vsel %vm620, %v2770, 0
      %v2803 = vsel %vm620, %v2772, 0
      %v2805 = vsel %vm620, %v2774, 0
      %v2807 = vsel %vm620, %v2776, 0
      %2809 = vmatprep.subr.mxu0 0.0
      %2810 = vmatpush1.xpose.msra.mxu0 0.0
      %2811 = vmatprep.subr.mxu0 0.0
      %2812 = vmatpush1.xpose.msra.mxu0 0.0
      %2813 = vmatprep.subr.mxu0 0.0
      %2814 = vmatpush1.xpose.msra.mxu0 0.0
      %2815 = vmatprep.subr.mxu0 0.0
      %2816 = vmatpush1.xpose.msra.mxu0 0.0
      %2817 = vmatprep.subr.mxu0 0.0
      %2818 = vmatpush1.xpose.msra.mxu0 0.0
      %2819 = vmatprep.subr.mxu0 0.0
      %2820 = vmatpush1.xpose.msra.mxu0 0.0
      %2821 = vmatprep.subr.mxu0 0.0
      %2822 = vmatpush1.xpose.msra.mxu0 0.0
      %2823 = vmatprep.subr.mxu0 0.0
      %2824 = vmatpush1.xpose.msra.mxu0 0.0
      %2825 = vmatprep.subr.mxu0 0.0
      %2826 = vmatpush1.xpose.msra.mxu0 %v2807
      %2827 = vmatprep.subr.mxu0 0.0
      %2828 = vmatpush1.xpose.msra.mxu0 %v2805
      %2829 = vmatprep.subr.mxu0 0.0
      %2830 = vmatpush1.xpose.msra.mxu0 %v2803
      %2831 = vmatprep.subr.mxu0 0.0
      %2832 = vmatpush1.xpose.msra.mxu0 %v2801
      %2833 = vmatprep.subr.mxu0 0.0
      %2834 = vmatpush1.xpose.msra.mxu0 %v2799
      %2835 = vmatprep.subr.mxu0 0.0
      %2836 = vmatpush1.xpose.msra.mxu0 %v2797
      %2837 = vmatprep.subr.mxu0 0.0
      %2838 = vmatpush1.xpose.msra.mxu0 %v2795
      %2839 = vmatprep.subr.mxu0 0.0
      %2840 = vmatpush1.xpose.msra.mxu0 %v2793
      %2841 = vmatprep.subr.mxu0 0.0
      %2842 = vmatpush2.xpose.msra.mxu0 0.0
      %2843 = vmatprep.subr.mxu0 0.0
      %2844 = vmatpush2.xpose.msra.mxu0 0.0
      %2845 = vmatprep.subr.mxu0 0.0
      %2846 = vmatpush2.xpose.msra.mxu0 0.0
      %2847 = vmatprep.subr.mxu0 0.0
      %2848 = vmatpush2.xpose.msra.mxu0 0.0
      %2849 = vmatprep.subr.mxu0 0.0
      %2850 = vmatpush2.xpose.msra.mxu0 0.0
      %2851 = vmatprep.subr.mxu0 0.0
      %2852 = vmatpush2.xpose.msra.mxu0 0.0
      %2853 = vmatprep.subr.mxu0 0.0
      %2854 = vmatpush2.xpose.msra.mxu0 0.0
      %2855 = vmatprep.subr.mxu0 0.0
      %2856 = vmatpush2.xpose.msra.mxu0 0.0
      %2857 = vmatprep.subr.mxu0 0.0
      %2858 = vmatpush2.xpose.msra.mxu0 0.0
      %2859 = vmatprep.subr.mxu0 0.0
      %2860 = vmatpush2.xpose.msra.mxu0 0.0
      %2861 = vmatprep.subr.mxu0 0.0
      %2862 = vmatpush2.xpose.msra.mxu0 0.0
      %2863 = vmatprep.subr.mxu0 0.0
      %2864 = vmatpush2.xpose.msra.mxu0 0.0
      %2865 = vmatprep.subr.mxu0 0.0
      %2866 = vmatpush2.xpose.msra.mxu0 0.0
      %2867 = vmatprep.subr.mxu0 0.0
      %2868 = vmatpush2.xpose.msra.mxu0 0.0
      %2869 = vmatprep.subr.mxu0 0.0
      %2870 = vmatpush2.xpose.msra.mxu0 0.0
      %2871 = vmatprep.subr.mxu0 0.0
      %2872 = vmatpush2.xpose.msra.mxu0 0.0
      %2873 = vmatprep.mubr.f32.mxu0 0.0
      %2874 = vmatmul.mubr.f32.gmra.mxu0 %v2777
      %v2875 = vpop.f32.mrf.mxu0
      %v2876 = vadd.f32 0.0, %v2875
      %v2877 = vpop.f32.mrf.mxu0
      %2878 = vmatprep.mubr.f32.mxu0 0.0
      %2879 = vmatmul.mubr.f32.gmra.mxu0 %v2779
      %v2880 = vpop.f32.mrf.mxu0
      %v2881 = vadd.f32 0.0, %v2880
      %v2882 = vpop.f32.mrf.mxu0
      %2883 = vmatprep.mubr.f32.mxu0 0.0
      %2884 = vmatmul.mubr.f32.gmra.mxu0 %v2781
      %v2885 = vpop.f32.mrf.mxu0
      %v2886 = vadd.f32 0.0, %v2885
      %v2887 = vpop.f32.mrf.mxu0
      %2888 = vmatprep.mubr.f32.mxu0 0.0
      %2889 = vmatmul.mubr.f32.gmra.mxu0 %v2783
      %v2890 = vpop.f32.mrf.mxu0
      %v2891 = vadd.f32 0.0, %v2890
      %v2892 = vpop.f32.mrf.mxu0
      %2893 = vmatprep.mubr.f32.mxu0 0.0
      %2894 = vmatmul.mubr.f32.gmra.mxu0 %v2785
      %v2895 = vpop.f32.mrf.mxu0
      %v2896 = vadd.f32 0.0, %v2895
      %v2897 = vpop.f32.mrf.mxu0
      %2898 = vmatprep.mubr.f32.mxu0 0.0
      %2899 = vmatmul.mubr.f32.gmra.mxu0 %v2787
      %v2900 = vpop.f32.mrf.mxu0
      %v2901 = vadd.f32 0.0, %v2900
      %v2902 = vpop.f32.mrf.mxu0
      %2903 = vmatprep.mubr.f32.mxu0 0.0
      %2904 = vmatmul.mubr.f32.gmra.mxu0 %v2789
      %v2905 = vpop.f32.mrf.mxu0
      %v2906 = vadd.f32 0.0, %v2905
      %v2907 = vpop.f32.mrf.mxu0
      %2908 = vmatprep.mubr.f32.mxu0 0.0
      %2909 = vmatmul.mubr.f32.gmra.mxu0 %v2791
      %v2910 = vpop.f32.mrf.mxu0
      %v2911 = vadd.f32 0.0, %v2910
      %v2912 = vpop.f32.mrf.mxu0
      %2913 = vdwg.mxu0
      %v2914 = vmul.f32 %v2369, 0.5
      %v2915 = vmul.f32 %v2374, 0.5
      %v2916 = vmul.f32 %v2379, 0.5
      %v2917 = vmul.f32 %v2384, 0.5
      %v2918 = vmul.f32 %v2389, 0.5
      %v2919 = vmul.f32 %v2394, 0.5
      %v2920 = vmul.f32 %v2399, 0.5
      %v2921 = vmul.f32 %v2404, 0.5
      %v2922 = vmul.f32 %v2538, 0.5
      %v2923 = vmul.f32 %v2543, 0.5
      %v2924 = vmul.f32 %v2548, 0.5
      %v2925 = vmul.f32 %v2553, 0.5
      %v2926 = vmul.f32 %v2558, 0.5
      %v2927 = vmul.f32 %v2563, 0.5
      %v2928 = vmul.f32 %v2568, 0.5
      %v2929 = vmul.f32 %v2573, 0.5
      %v2930 = vmul.f32 %v2707, 0.5
      %v2931 = vmul.f32 %v2712, 0.5
      %v2932 = vmul.f32 %v2717, 0.5
      %v2933 = vmul.f32 %v2722, 0.5
      %v2934 = vmul.f32 %v2727, 0.5
      %v2935 = vmul.f32 %v2732, 0.5
      %v2936 = vmul.f32 %v2737, 0.5
      %v2937 = vmul.f32 %v2742, 0.5
      %v2938 = vmul.f32 %v2876, 0.5
      %v2939 = vmul.f32 %v2881, 0.5
      %v2940 = vmul.f32 %v2886, 0.5
      %v2941 = vmul.f32 %v2891, 0.5
      %v2942 = vmul.f32 %v2896, 0.5
      %v2943 = vmul.f32 %v2901, 0.5
      %v2944 = vmul.f32 %v2906, 0.5
      %v2945 = vmul.f32 %v2911, 0.5
      %v2946 = vsel %vm1273, %v2914, -inf
      %2947 = vmax.xlane.f32.xlu0 %v2946
      %v2948 = vpop.xlane.xlu0 %2947
      %v2949 = vsel %vm1273, %v2915, -inf
      %2950 = vmax.xlane.f32.xlu0 %v2949
      %v2951 = vpop.xlane.xlu0 %2950
      %v2952 = vsel %vm1273, %v2916, -inf
      %2953 = vmax.xlane.f32.xlu0 %v2952
      %v2954 = vpop.xlane.xlu0 %2953
      %v2955 = vsel %vm1273, %v2917, -inf
      %2956 = vmax.xlane.f32.xlu0 %v2955
      %v2957 = vpop.xlane.xlu0 %2956
      %v2958 = vsel %vm1273, %v2918, -inf
      %2959 = vmax.xlane.f32.xlu0 %v2958
      %v2960 = vpop.xlane.xlu0 %2959
      %v2961 = vsel %vm1273, %v2919, -inf
      %2962 = vmax.xlane.f32.xlu0 %v2961
      %v2963 = vpop.xlane.xlu0 %2962
      %v2964 = vsel %vm1273, %v2920, -inf
      %2965 = vmax.xlane.f32.xlu0 %v2964
      %v2966 = vpop.xlane.xlu0 %2965
      %v2967 = vsel %vm1273, %v2921, -inf
      %2968 = vmax.xlane.f32.xlu0 %v2967
      %v2969 = vpop.xlane.xlu0 %2968
      %v2970 = vsel %vm1273, %v2922, -inf
      %2971 = vmax.xlane.f32.xlu0 %v2970
      %v2972 = vpop.xlane.xlu0 %2971
      %v2973 = vsel %vm1273, %v2923, -inf
      %2974 = vmax.xlane.f32.xlu0 %v2973
      %v2975 = vpop.xlane.xlu0 %2974
      %v2976 = vsel %vm1273, %v2924, -inf
      %2977 = vmax.xlane.f32.xlu0 %v2976
      %v2978 = vpop.xlane.xlu0 %2977
      %v2979 = vsel %vm1273, %v2925, -inf
      %2980 = vmax.xlane.f32.xlu0 %v2979
      %v2981 = vpop.xlane.xlu0 %2980
      %v2982 = vsel %vm1273, %v2926, -inf
      %2983 = vmax.xlane.f32.xlu0 %v2982
      %v2984 = vpop.xlane.xlu0 %2983
      %v2985 = vsel %vm1273, %v2927, -inf
      %2986 = vmax.xlane.f32.xlu0 %v2985
      %v2987 = vpop.xlane.xlu0 %2986
      %v2988 = vsel %vm1273, %v2928, -inf
      %2989 = vmax.xlane.f32.xlu0 %v2988
      %v2990 = vpop.xlane.xlu0 %2989
      %v2991 = vsel %vm1273, %v2929, -inf
      %2992 = vmax.xlane.f32.xlu0 %v2991
      %v2993 = vpop.xlane.xlu0 %2992
      %v2994 = vsel %vm1273, %v2930, -inf
      %2995 = vmax.xlane.f32.xlu0 %v2994
      %v2996 = vpop.xlane.xlu0 %2995
      %v2997 = vsel %vm1273, %v2931, -inf
      %2998 = vmax.xlane.f32.xlu0 %v2997
      %v2999 = vpop.xlane.xlu0 %2998
      %v3000 = vsel %vm1273, %v2932, -inf
      %3001 = vmax.xlane.f32.xlu0 %v3000
      %v3002 = vpop.xlane.xlu0 %3001
      %v3003 = vsel %vm1273, %v2933, -inf
      %3004 = vmax.xlane.f32.xlu0 %v3003
      %v3005 = vpop.xlane.xlu0 %3004
      %v3006 = vsel %vm1273, %v2934, -inf
      %3007 = vmax.xlane.f32.xlu0 %v3006
      %v3008 = vpop.xlane.xlu0 %3007
      %v3009 = vsel %vm1273, %v2935, -inf
      %3010 = vmax.xlane.f32.xlu0 %v3009
      %v3011 = vpop.xlane.xlu0 %3010
      %v3012 = vsel %vm1273, %v2936, -inf
      %3013 = vmax.xlane.f32.xlu0 %v3012
      %v3014 = vpop.xlane.xlu0 %3013
      %v3015 = vsel %vm1273, %v2937, -inf
      %3016 = vmax.xlane.f32.xlu0 %v3015
      %v3017 = vpop.xlane.xlu0 %3016
      %v3018 = vsel %vm1273, %v2938, -inf
      %3019 = vmax.xlane.f32.xlu0 %v3018
      %v3020 = vpop.xlane.xlu0 %3019
      %v3021 = vsel %vm1273, %v2939, -inf
      %3022 = vmax.xlane.f32.xlu0 %v3021
      %v3023 = vpop.xlane.xlu0 %3022
      %v3024 = vsel %vm1273, %v2940, -inf
      %3025 = vmax.xlane.f32.xlu0 %v3024
      %v3026 = vpop.xlane.xlu0 %3025
      %v3027 = vsel %vm1273, %v2941, -inf
      %3028 = vmax.xlane.f32.xlu0 %v3027
      %v3029 = vpop.xlane.xlu0 %3028
      %v3030 = vsel %vm1273, %v2942, -inf
      %3031 = vmax.xlane.f32.xlu0 %v3030
      %v3032 = vpop.xlane.xlu0 %3031
      %v3033 = vsel %vm1273, %v2943, -inf
      %3034 = vmax.xlane.f32.xlu0 %v3033
      %v3035 = vpop.xlane.xlu0 %3034
      %v3036 = vsel %vm1273, %v2944, -inf
      %3037 = vmax.xlane.f32.xlu0 %v3036
      %v3038 = vpop.xlane.xlu0 %3037
      %v3039 = vsel %vm1273, %v2945, -inf
      %3040 = vmax.xlane.f32.xlu0 %v3039
      %v3041 = vpop.xlane.xlu0 %3040
      %v3042 = vsub.f32 %v2914, %v2948
      %v3043 = vsub.f32 %v2915, %v2951
      %v3044 = vsub.f32 %v2916, %v2954
      %v3045 = vsub.f32 %v2917, %v2957
      %v3046 = vsub.f32 %v2918, %v2960
      %v3047 = vsub.f32 %v2919, %v2963
      %v3048 = vsub.f32 %v2920, %v2966
      %v3049 = vsub.f32 %v2921, %v2969
      %v3050 = vsub.f32 %v2922, %v2972
      %v3051 = vsub.f32 %v2923, %v2975
      %v3052 = vsub.f32 %v2924, %v2978
      %v3053 = vsub.f32 %v2925, %v2981
      %v3054 = vsub.f32 %v2926, %v2984
      %v3055 = vsub.f32 %v2927, %v2987
      %v3056 = vsub.f32 %v2928, %v2990
      %v3057 = vsub.f32 %v2929, %v2993
      %v3058 = vsub.f32 %v2930, %v2996
      %v3059 = vsub.f32 %v2931, %v2999
      %v3060 = vsub.f32 %v2932, %v3002
      %v3061 = vsub.f32 %v2933, %v3005
      %v3062 = vsub.f32 %v2934, %v3008
      %v3063 = vsub.f32 %v2935, %v3011
      %v3064 = vsub.f32 %v2936, %v3014
      %v3065 = vsub.f32 %v2937, %v3017
      %v3066 = vsub.f32 %v2938, %v3020
      %v3067 = vsub.f32 %v2939, %v3023
      %v3068 = vsub.f32 %v2940, %v3026
      %v3069 = vsub.f32 %v2941, %v3029
      %v3070 = vsub.f32 %v2942, %v3032
      %v3071 = vsub.f32 %v2943, %v3035
      %v3072 = vsub.f32 %v2944, %v3038
      %v3073 = vsub.f32 %v2945, %v3041
      %v3074 = vmul.f32 %v3042, 1.442695
      %v3075 = vpow.pop %v3074
      %v3076 = vmul.f32 %v3043, 1.442695
      %v3077 = vpow.pop %v3076
      %v3078 = vmul.f32 %v3044, 1.442695
      %v3079 = vpow.pop %v3078
      %v3080 = vmul.f32 %v3045, 1.442695
      %v3081 = vpow.pop %v3080
      %v3082 = vmul.f32 %v3046, 1.442695
      %v3083 = vpow.pop %v3082
      %v3084 = vmul.f32 %v3047, 1.442695
      %v3085 = vpow.pop %v3084
      %v3086 = vmul.f32 %v3048, 1.442695
      %v3087 = vpow.pop %v3086
      %v3088 = vmul.f32 %v3049, 1.442695
      %v3089 = vpow.pop %v3088
      %v3090 = vmul.f32 %v3050, 1.442695
      %v3091 = vpow.pop %v3090
      %v3092 = vmul.f32 %v3051, 1.442695
      %v3093 = vpow.pop %v3092
      %v3094 = vmul.f32 %v3052, 1.442695
      %v3095 = vpow.pop %v3094
      %v3096 = vmul.f32 %v3053, 1.442695
      %v3097 = vpow.pop %v3096
      %v3098 = vmul.f32 %v3054, 1.442695
      %v3099 = vpow.pop %v3098
      %v3100 = vmul.f32 %v3055, 1.442695
      %v3101 = vpow.pop %v3100
      %v3102 = vmul.f32 %v3056, 1.442695
      %v3103 = vpow.pop %v3102
      %v3104 = vmul.f32 %v3057, 1.442695
      %v3105 = vpow.pop %v3104
      %v3106 = vmul.f32 %v3058, 1.442695
      %v3107 = vpow.pop %v3106
      %v3108 = vmul.f32 %v3059, 1.442695
      %v3109 = vpow.pop %v3108
      %v3110 = vmul.f32 %v3060, 1.442695
      %v3111 = vpow.pop %v3110
      %v3112 = vmul.f32 %v3061, 1.442695
      %v3113 = vpow.pop %v3112
      %v3114 = vmul.f32 %v3062, 1.442695
      %v3115 = vpow.pop %v3114
      %v3116 = vmul.f32 %v3063, 1.442695
      %v3117 = vpow.pop %v3116
      %v3118 = vmul.f32 %v3064, 1.442695
      %v3119 = vpow.pop %v3118
      %v3120 = vmul.f32 %v3065, 1.442695
      %v3121 = vpow.pop %v3120
      %v3122 = vmul.f32 %v3066, 1.442695
      %v3123 = vpow.pop %v3122
      %v3124 = vmul.f32 %v3067, 1.442695
      %v3125 = vpow.pop %v3124
      %v3126 = vmul.f32 %v3068, 1.442695
      %v3127 = vpow.pop %v3126
      %v3128 = vmul.f32 %v3069, 1.442695
      %v3129 = vpow.pop %v3128
      %v3130 = vmul.f32 %v3070, 1.442695
      %v3131 = vpow.pop %v3130
      %v3132 = vmul.f32 %v3071, 1.442695
      %v3133 = vpow.pop %v3132
      %v3134 = vmul.f32 %v3072, 1.442695
      %v3135 = vpow.pop %v3134
      %v3136 = vmul.f32 %v3073, 1.442695
      %v3137 = vpow.pop %v3136
      %v3138 = vsel %vm1273, %v3075, 0.0
      %3139 = vadd.xlane.f32.xlu0 %v3138
      %v3140 = vpop.xlane.xlu0 %3139
      %v3141 = vsel %vm1273, %v3077, 0.0
      %3142 = vadd.xlane.f32.xlu0 %v3141
      %v3143 = vpop.xlane.xlu0 %3142
      %v3144 = vsel %vm1273, %v3079, 0.0
      %3145 = vadd.xlane.f32.xlu0 %v3144
      %v3146 = vpop.xlane.xlu0 %3145
      %v3147 = vsel %vm1273, %v3081, 0.0
      %3148 = vadd.xlane.f32.xlu0 %v3147
      %v3149 = vpop.xlane.xlu0 %3148
      %v3150 = vsel %vm1273, %v3083, 0.0
      %3151 = vadd.xlane.f32.xlu0 %v3150
      %v3152 = vpop.xlane.xlu0 %3151
      %v3153 = vsel %vm1273, %v3085, 0.0
      %3154 = vadd.xlane.f32.xlu0 %v3153
      %v3155 = vpop.xlane.xlu0 %3154
      %v3156 = vsel %vm1273, %v3087, 0.0
      %3157 = vadd.xlane.f32.xlu0 %v3156
      %v3158 = vpop.xlane.xlu0 %3157
      %v3159 = vsel %vm1273, %v3089, 0.0
      %3160 = vadd.xlane.f32.xlu0 %v3159
      %v3161 = vpop.xlane.xlu0 %3160
      %v3162 = vsel %vm1273, %v3091, 0.0
      %3163 = vadd.xlane.f32.xlu0 %v3162
      %v3164 = vpop.xlane.xlu0 %3163
      %v3165 = vsel %vm1273, %v3093, 0.0
      %3166 = vadd.xlane.f32.xlu0 %v3165
      %v3167 = vpop.xlane.xlu0 %3166
      %v3168 = vsel %vm1273, %v3095, 0.0
      %3169 = vadd.xlane.f32.xlu0 %v3168
      %v3170 = vpop.xlane.xlu0 %3169
      %v3171 = vsel %vm1273, %v3097, 0.0
      %3172 = vadd.xlane.f32.xlu0 %v3171
      %v3173 = vpop.xlane.xlu0 %3172
      %v3174 = vsel %vm1273, %v3099, 0.0
      %3175 = vadd.xlane.f32.xlu0 %v3174
      %v3176 = vpop.xlane.xlu0 %3175
      %v3177 = vsel %vm1273, %v3101, 0.0
      %3178 = vadd.xlane.f32.xlu0 %v3177
      %v3179 = vpop.xlane.xlu0 %3178
      %v3180 = vsel %vm1273, %v3103, 0.0
      %3181 = vadd.xlane.f32.xlu0 %v3180
      %v3182 = vpop.xlane.xlu0 %3181
      %v3183 = vsel %vm1273, %v3105, 0.0
      %3184 = vadd.xlane.f32.xlu0 %v3183
      %v3185 = vpop.xlane.xlu0 %3184
      %v3186 = vsel %vm1273, %v3107, 0.0
      %3187 = vadd.xlane.f32.xlu0 %v3186
      %v3188 = vpop.xlane.xlu0 %3187
      %v3189 = vsel %vm1273, %v3109, 0.0
      %3190 = vadd.xlane.f32.xlu0 %v3189
      %v3191 = vpop.xlane.xlu0 %3190
      %v3192 = vsel %vm1273, %v3111, 0.0
      %3193 = vadd.xlane.f32.xlu0 %v3192
      %v3194 = vpop.xlane.xlu0 %3193
      %v3195 = vsel %vm1273, %v3113, 0.0
      %3196 = vadd.xlane.f32.xlu0 %v3195
      %v3197 = vpop.xlane.xlu0 %3196
      %v3198 = vsel %vm1273, %v3115, 0.0
      %3199 = vadd.xlane.f32.xlu0 %v3198
      %v3200 = vpop.xlane.xlu0 %3199
      %v3201 = vsel %vm1273, %v3117, 0.0
      %3202 = vadd.xlane.f32.xlu0 %v3201
      %v3203 = vpop.xlane.xlu0 %3202
      %v3204 = vsel %vm1273, %v3119, 0.0
      %3205 = vadd.xlane.f32.xlu0 %v3204
      %v3206 = vpop.xlane.xlu0 %3205
      %v3207 = vsel %vm1273, %v3121, 0.0
      %3208 = vadd.xlane.f32.xlu0 %v3207
      %v3209 = vpop.xlane.xlu0 %3208
      %v3210 = vsel %vm1273, %v3123, 0.0
      %3211 = vadd.xlane.f32.xlu0 %v3210
      %v3212 = vpop.xlane.xlu0 %3211
      %v3213 = vsel %vm1273, %v3125, 0.0
      %3214 = vadd.xlane.f32.xlu0 %v3213
      %v3215 = vpop.xlane.xlu0 %3214
      %v3216 = vsel %vm1273, %v3127, 0.0
      %3217 = vadd.xlane.f32.xlu0 %v3216
      %v3218 = vpop.xlane.xlu0 %3217
      %v3219 = vsel %vm1273, %v3129, 0.0
      %3220 = vadd.xlane.f32.xlu0 %v3219
      %v3221 = vpop.xlane.xlu0 %3220
      %v3222 = vsel %vm1273, %v3131, 0.0
      %3223 = vadd.xlane.f32.xlu0 %v3222
      %v3224 = vpop.xlane.xlu0 %3223
      %v3225 = vsel %vm1273, %v3133, 0.0
      %3226 = vadd.xlane.f32.xlu0 %v3225
      %v3227 = vpop.xlane.xlu0 %3226
      %v3228 = vsel %vm1273, %v3135, 0.0
      %3229 = vadd.xlane.f32.xlu0 %v3228
      %v3230 = vpop.xlane.xlu0 %3229
      %v3231 = vsel %vm1273, %v3137, 0.0
      %3232 = vadd.xlane.f32.xlu0 %v3231
      %v3233 = vpop.xlane.xlu0 %3232
      %v3234 = vrcp.pop %v3140
      %v3235 = vmul.f32 %v3075, %v3234
      %v3236 = vrcp.pop %v3143
      %v3237 = vmul.f32 %v3077, %v3236
      %v3238 = vrcp.pop %v3146
      %v3239 = vmul.f32 %v3079, %v3238
      %v3240 = vrcp.pop %v3149
      %v3241 = vmul.f32 %v3081, %v3240
      %v3242 = vrcp.pop %v3152
      %v3243 = vmul.f32 %v3083, %v3242
      %v3244 = vrcp.pop %v3155
      %v3245 = vmul.f32 %v3085, %v3244
      %v3246 = vrcp.pop %v3158
      %v3247 = vmul.f32 %v3087, %v3246
      %v3248 = vrcp.pop %v3161
      %v3249 = vmul.f32 %v3089, %v3248
      %v3250 = vrcp.pop %v3164
      %v3251 = vmul.f32 %v3091, %v3250
      %v3252 = vrcp.pop %v3167
      %v3253 = vmul.f32 %v3093, %v3252
      %v3254 = vrcp.pop %v3170
      %v3255 = vmul.f32 %v3095, %v3254
      %v3256 = vrcp.pop %v3173
      %v3257 = vmul.f32 %v3097, %v3256
      %v3258 = vrcp.pop %v3176
      %v3259 = vmul.f32 %v3099, %v3258
      %v3260 = vrcp.pop %v3179
      %v3261 = vmul.f32 %v3101, %v3260
      %v3262 = vrcp.pop %v3182
      %v3263 = vmul.f32 %v3103, %v3262
      %v3264 = vrcp.pop %v3185
      %v3265 = vmul.f32 %v3105, %v3264
      %v3266 = vrcp.pop %v3188
      %v3267 = vmul.f32 %v3107, %v3266
      %v3268 = vrcp.pop %v3191
      %v3269 = vmul.f32 %v3109, %v3268
      %v3270 = vrcp.pop %v3194
      %v3271 = vmul.f32 %v3111, %v3270
      %v3272 = vrcp.pop %v3197
      %v3273 = vmul.f32 %v3113, %v3272
      %v3274 = vrcp.pop %v3200
      %v3275 = vmul.f32 %v3115, %v3274
      %v3276 = vrcp.pop %v3203
      %v3277 = vmul.f32 %v3117, %v3276
      %v3278 = vrcp.pop %v3206
      %v3279 = vmul.f32 %v3119, %v3278
      %v3280 = vrcp.pop %v3209
      %v3281 = vmul.f32 %v3121, %v3280
      %v3282 = vrcp.pop %v3212
      %v3283 = vmul.f32 %v3123, %v3282
      %v3284 = vrcp.pop %v3215
      %v3285 = vmul.f32 %v3125, %v3284
      %v3286 = vrcp.pop %v3218
      %v3287 = vmul.f32 %v3127, %v3286
      %v3288 = vrcp.pop %v3221
      %v3289 = vmul.f32 %v3129, %v3288
      %v3290 = vrcp.pop %v3224
      %v3291 = vmul.f32 %v3131, %v3290
      %v3292 = vrcp.pop %v3227
      %v3293 = vmul.f32 %v3133, %v3292
      %v3294 = vrcp.pop %v3230
      %v3295 = vmul.f32 %v3135, %v3294
      %v3296 = vrcp.pop %v3233
      %v3297 = vmul.f32 %v3137, %v3296
      %3298 = vrot.lane.b32.xlu0 %v437, 108
      %v3299 = vpop.permute.xlu0 %3298
      %3300 = vrot.lane.b32.xlu0 %v442, 108
      %v3301 = vpop.permute.xlu0 %3300
      %3302 = vrot.lane.b32.xlu0 %v447, 108
      %v3303 = vpop.permute.xlu0 %3302
      %3304 = vrot.lane.b32.xlu0 %v452, 108
      %v3305 = vpop.permute.xlu0 %3304
      %3306 = vrot.lane.b32.xlu0 %v457, 108
      %v3307 = vpop.permute.xlu0 %3306
      %3308 = vrot.lane.b32.xlu0 %v462, 108
      %v3309 = vpop.permute.xlu0 %3308
      %3310 = vrot.lane.b32.xlu0 %v467, 108
      %v3311 = vpop.permute.xlu0 %3310
      %3312 = vrot.lane.b32.xlu0 %v472, 108
      %v3313 = vpop.permute.xlu0 %3312
      %v3323 = vsel %vm1273, %v3235, 0
      %v3326 = vsel %vm1273, %v3237, 0
      %v3329 = vsel %vm1273, %v3239, 0
      %v3332 = vsel %vm1273, %v3241, 0
      %v3335 = vsel %vm1273, %v3243, 0
      %v3338 = vsel %vm1273, %v3245, 0
      %v3341 = vsel %vm1273, %v3247, 0
      %v3344 = vsel %vm1273, %v3249, 0
      %3346 = vmatprep.subr.mxu0 0.0
      %3347 = vmatpush1.msra.mxu0 0.0
      %3348 = vmatprep.subr.mxu0 0.0
      %3349 = vmatpush1.msra.mxu0 0.0
      %3350 = vmatprep.subr.mxu0 0.0
      %3351 = vmatpush1.msra.mxu0 0.0
      %3352 = vmatprep.subr.mxu0 0.0
      %3353 = vmatpush1.msra.mxu0 0.0
      %3354 = vmatprep.subr.mxu0 0.0
      %3355 = vmatpush1.msra.mxu0 0.0
      %3356 = vmatprep.subr.mxu0 0.0
      %3357 = vmatpush1.msra.mxu0 0.0
      %3358 = vmatprep.subr.mxu0 0.0
      %3359 = vmatpush1.msra.mxu0 0.0
      %3360 = vmatprep.subr.mxu0 0.0
      %3361 = vmatpush1.msra.mxu0 0.0
      %3362 = vmatprep.subr.mxu0 0.0
      %3363 = vmatpush1.msra.mxu0 %v3313
      %3364 = vmatprep.subr.mxu0 0.0
      %3365 = vmatpush1.msra.mxu0 %v3311
      %3366 = vmatprep.subr.mxu0 0.0
      %3367 = vmatpush1.msra.mxu0 %v3309
      %3368 = vmatprep.subr.mxu0 0.0
      %3369 = vmatpush1.msra.mxu0 %v3307
      %3370 = vmatprep.subr.mxu0 0.0
      %3371 = vmatpush1.msra.mxu0 %v3305
      %3372 = vmatprep.subr.mxu0 0.0
      %3373 = vmatpush1.msra.mxu0 %v3303
      %3374 = vmatprep.subr.mxu0 0.0
      %3375 = vmatpush1.msra.mxu0 %v3301
      %3376 = vmatprep.subr.mxu0 0.0
      %3377 = vmatpush1.msra.mxu0 %v3299
      %3378 = vmatprep.subr.mxu0 0.0
      %3379 = vmatpush2.msra.mxu0 0.0
      %3380 = vmatprep.subr.mxu0 0.0
      %3381 = vmatpush2.msra.mxu0 0.0
      %3382 = vmatprep.subr.mxu0 0.0
      %3383 = vmatpush2.msra.mxu0 0.0
      %3384 = vmatprep.subr.mxu0 0.0
      %3385 = vmatpush2.msra.mxu0 0.0
      %3386 = vmatprep.subr.mxu0 0.0
      %3387 = vmatpush2.msra.mxu0 0.0
      %3388 = vmatprep.subr.mxu0 0.0
      %3389 = vmatpush2.msra.mxu0 0.0
      %3390 = vmatprep.subr.mxu0 0.0
      %3391 = vmatpush2.msra.mxu0 0.0
      %3392 = vmatprep.subr.mxu0 0.0
      %3393 = vmatpush2.msra.mxu0 0.0
      %3394 = vmatprep.subr.mxu0 0.0
      %3395 = vmatpush2.msra.mxu0 0.0
      %3396 = vmatprep.subr.mxu0 0.0
      %3397 = vmatpush2.msra.mxu0 0.0
      %3398 = vmatprep.subr.mxu0 0.0
      %3399 = vmatpush2.msra.mxu0 0.0
      %3400 = vmatprep.subr.mxu0 0.0
      %3401 = vmatpush2.msra.mxu0 0.0
      %3402 = vmatprep.subr.mxu0 0.0
      %3403 = vmatpush2.msra.mxu0 0.0
      %3404 = vmatprep.subr.mxu0 0.0
      %3405 = vmatpush2.msra.mxu0 0.0
      %3406 = vmatprep.subr.mxu0 0.0
      %3407 = vmatpush2.msra.mxu0 0.0
      %3408 = vmatprep.subr.mxu0 0.0
      %3409 = vmatpush2.msra.mxu0 0.0
      %3410 = vmatprep.mubr.f32.mxu0 0.0
      %3411 = vmatmul.mubr.f32.gmra.mxu0 %v3323
      %v3412 = vpop.f32.mrf.mxu0
      %v3413 = vadd.f32 0.0, %v3412
      %v3414 = vpop.f32.mrf.mxu0
      %3415 = vmatprep.mubr.f32.mxu0 0.0
      %3416 = vmatmul.mubr.f32.gmra.mxu0 %v3326
      %v3417 = vpop.f32.mrf.mxu0
      %v3418 = vadd.f32 0.0, %v3417
      %v3419 = vpop.f32.mrf.mxu0
      %3420 = vmatprep.mubr.f32.mxu0 0.0
      %3421 = vmatmul.mubr.f32.gmra.mxu0 %v3329
      %v3422 = vpop.f32.mrf.mxu0
      %v3423 = vadd.f32 0.0, %v3422
      %v3424 = vpop.f32.mrf.mxu0
      %3425 = vmatprep.mubr.f32.mxu0 0.0
      %3426 = vmatmul.mubr.f32.gmra.mxu0 %v3332
      %v3427 = vpop.f32.mrf.mxu0
      %v3428 = vadd.f32 0.0, %v3427
      %v3429 = vpop.f32.mrf.mxu0
      %3430 = vmatprep.mubr.f32.mxu0 0.0
      %3431 = vmatmul.mubr.f32.gmra.mxu0 %v3335
      %v3432 = vpop.f32.mrf.mxu0
      %v3433 = vadd.f32 0.0, %v3432
      %v3434 = vpop.f32.mrf.mxu0
      %3435 = vmatprep.mubr.f32.mxu0 0.0
      %3436 = vmatmul.mubr.f32.gmra.mxu0 %v3338
      %v3437 = vpop.f32.mrf.mxu0
      %v3438 = vadd.f32 0.0, %v3437
      %v3439 = vpop.f32.mrf.mxu0
      %3440 = vmatprep.mubr.f32.mxu0 0.0
      %3441 = vmatmul.mubr.f32.gmra.mxu0 %v3341
      %v3442 = vpop.f32.mrf.mxu0
      %v3443 = vadd.f32 0.0, %v3442
      %v3444 = vpop.f32.mrf.mxu0
      %3445 = vmatprep.mubr.f32.mxu0 0.0
      %3446 = vmatmul.mubr.f32.gmra.mxu0 %v3344
      %v3447 = vpop.f32.mrf.mxu0
      %v3448 = vadd.f32 0.0, %v3447
      %v3449 = vpop.f32.mrf.mxu0
      %3450 = vdwg.mxu0
      %3451 = vrot.lane.b32.xlu0 %v477, 108
      %v3452 = vpop.permute.xlu0 %3451
      %3453 = vrot.lane.b32.xlu0 %v482, 108
      %v3454 = vpop.permute.xlu0 %3453
      %3455 = vrot.lane.b32.xlu0 %v487, 108
      %v3456 = vpop.permute.xlu0 %3455
      %3457 = vrot.lane.b32.xlu0 %v492, 108
      %v3458 = vpop.permute.xlu0 %3457
      %3459 = vrot.lane.b32.xlu0 %v497, 108
      %v3460 = vpop.permute.xlu0 %3459
      %3461 = vrot.lane.b32.xlu0 %v502, 108
      %v3462 = vpop.permute.xlu0 %3461
      %3463 = vrot.lane.b32.xlu0 %v507, 108
      %v3464 = vpop.permute.xlu0 %3463
      %3465 = vrot.lane.b32.xlu0 %v512, 108
      %v3466 = vpop.permute.xlu0 %3465
      %v3476 = vsel %vm1273, %v3251, 0
      %v3479 = vsel %vm1273, %v3253, 0
      %v3482 = vsel %vm1273, %v3255, 0
      %v3485 = vsel %vm1273, %v3257, 0
      %v3488 = vsel %vm1273, %v3259, 0
      %v3491 = vsel %vm1273, %v3261, 0
      %v3494 = vsel %vm1273, %v3263, 0
      %v3497 = vsel %vm1273, %v3265, 0
      %3499 = vmatprep.subr.mxu0 0.0
      %3500 = vmatpush1.msra.mxu0 0.0
      %3501 = vmatprep.subr.mxu0 0.0
      %3502 = vmatpush1.msra.mxu0 0.0
      %3503 = vmatprep.subr.mxu0 0.0
      %3504 = vmatpush1.msra.mxu0 0.0
      %3505 = vmatprep.subr.mxu0 0.0
      %3506 = vmatpush1.msra.mxu0 0.0
      %3507 = vmatprep.subr.mxu0 0.0
      %3508 = vmatpush1.msra.mxu0 0.0
      %3509 = vmatprep.subr.mxu0 0.0
      %3510 = vmatpush1.msra.mxu0 0.0
      %3511 = vmatprep.subr.mxu0 0.0
      %3512 = vmatpush1.msra.mxu0 0.0
      %3513 = vmatprep.subr.mxu0 0.0
      %3514 = vmatpush1.msra.mxu0 0.0
      %3515 = vmatprep.subr.mxu0 0.0
      %3516 = vmatpush1.msra.mxu0 %v3466
      %3517 = vmatprep.subr.mxu0 0.0
      %3518 = vmatpush1.msra.mxu0 %v3464
      %3519 = vmatprep.subr.mxu0 0.0
      %3520 = vmatpush1.msra.mxu0 %v3462
      %3521 = vmatprep.subr.mxu0 0.0
      %3522 = vmatpush1.msra.mxu0 %v3460
      %3523 = vmatprep.subr.mxu0 0.0
      %3524 = vmatpush1.msra.mxu0 %v3458
      %3525 = vmatprep.subr.mxu0 0.0
      %3526 = vmatpush1.msra.mxu0 %v3456
      %3527 = vmatprep.subr.mxu0 0.0
      %3528 = vmatpush1.msra.mxu0 %v3454
      %3529 = vmatprep.subr.mxu0 0.0
      %3530 = vmatpush1.msra.mxu0 %v3452
      %3531 = vmatprep.subr.mxu0 0.0
      %3532 = vmatpush2.msra.mxu0 0.0
      %3533 = vmatprep.subr.mxu0 0.0
      %3534 = vmatpush2.msra.mxu0 0.0
      %3535 = vmatprep.subr.mxu0 0.0
      %3536 = vmatpush2.msra.mxu0 0.0
      %3537 = vmatprep.subr.mxu0 0.0
      %3538 = vmatpush2.msra.mxu0 0.0
      %3539 = vmatprep.subr.mxu0 0.0
      %3540 = vmatpush2.msra.mxu0 0.0
      %3541 = vmatprep.subr.mxu0 0.0
      %3542 = vmatpush2.msra.mxu0 0.0
      %3543 = vmatprep.subr.mxu0 0.0
      %3544 = vmatpush2.msra.mxu0 0.0
      %3545 = vmatprep.subr.mxu0 0.0
      %3546 = vmatpush2.msra.mxu0 0.0
      %3547 = vmatprep.subr.mxu0 0.0
      %3548 = vmatpush2.msra.mxu0 0.0
      %3549 = vmatprep.subr.mxu0 0.0
      %3550 = vmatpush2.msra.mxu0 0.0
      %3551 = vmatprep.subr.mxu0 0.0
      %3552 = vmatpush2.msra.mxu0 0.0
      %3553 = vmatprep.subr.mxu0 0.0
      %3554 = vmatpush2.msra.mxu0 0.0
      %3555 = vmatprep.subr.mxu0 0.0
      %3556 = vmatpush2.msra.mxu0 0.0
      %3557 = vmatprep.subr.mxu0 0.0
      %3558 = vmatpush2.msra.mxu0 0.0
      %3559 = vmatprep.subr.mxu0 0.0
      %3560 = vmatpush2.msra.mxu0 0.0
      %3561 = vmatprep.subr.mxu0 0.0
      %3562 = vmatpush2.msra.mxu0 0.0
      %3563 = vmatprep.mubr.f32.mxu0 0.0
      %3564 = vmatmul.mubr.f32.gmra.mxu0 %v3476
      %v3565 = vpop.f32.mrf.mxu0
      %v3566 = vadd.f32 0.0, %v3565
      %v3567 = vpop.f32.mrf.mxu0
      %3568 = vmatprep.mubr.f32.mxu0 0.0
      %3569 = vmatmul.mubr.f32.gmra.mxu0 %v3479
      %v3570 = vpop.f32.mrf.mxu0
      %v3571 = vadd.f32 0.0, %v3570
      %v3572 = vpop.f32.mrf.mxu0
      %3573 = vmatprep.mubr.f32.mxu0 0.0
      %3574 = vmatmul.mubr.f32.gmra.mxu0 %v3482
      %v3575 = vpop.f32.mrf.mxu0
      %v3576 = vadd.f32 0.0, %v3575
      %v3577 = vpop.f32.mrf.mxu0
      %3578 = vmatprep.mubr.f32.mxu0 0.0
      %3579 = vmatmul.mubr.f32.gmra.mxu0 %v3485
      %v3580 = vpop.f32.mrf.mxu0
      %v3581 = vadd.f32 0.0, %v3580
      %v3582 = vpop.f32.mrf.mxu0
      %3583 = vmatprep.mubr.f32.mxu0 0.0
      %3584 = vmatmul.mubr.f32.gmra.mxu0 %v3488
      %v3585 = vpop.f32.mrf.mxu0
      %v3586 = vadd.f32 0.0, %v3585
      %v3587 = vpop.f32.mrf.mxu0
      %3588 = vmatprep.mubr.f32.mxu0 0.0
      %3589 = vmatmul.mubr.f32.gmra.mxu0 %v3491
      %v3590 = vpop.f32.mrf.mxu0
      %v3591 = vadd.f32 0.0, %v3590
      %v3592 = vpop.f32.mrf.mxu0
      %3593 = vmatprep.mubr.f32.mxu0 0.0
      %3594 = vmatmul.mubr.f32.gmra.mxu0 %v3494
      %v3595 = vpop.f32.mrf.mxu0
      %v3596 = vadd.f32 0.0, %v3595
      %v3597 = vpop.f32.mrf.mxu0
      %3598 = vmatprep.mubr.f32.mxu0 0.0
      %3599 = vmatmul.mubr.f32.gmra.mxu0 %v3497
      %v3600 = vpop.f32.mrf.mxu0
      %v3601 = vadd.f32 0.0, %v3600
      %v3602 = vpop.f32.mrf.mxu0
      %3603 = vdwg.mxu0
      %3604 = vrot.lane.b32.xlu0 %v517, 108
      %v3605 = vpop.permute.xlu0 %3604
      %3606 = vrot.lane.b32.xlu0 %v522, 108
      %v3607 = vpop.permute.xlu0 %3606
      %3608 = vrot.lane.b32.xlu0 %v527, 108
      %v3609 = vpop.permute.xlu0 %3608
      %3610 = vrot.lane.b32.xlu0 %v532, 108
      %v3611 = vpop.permute.xlu0 %3610
      %3612 = vrot.lane.b32.xlu0 %v537, 108
      %v3613 = vpop.permute.xlu0 %3612
      %3614 = vrot.lane.b32.xlu0 %v542, 108
      %v3615 = vpop.permute.xlu0 %3614
      %3616 = vrot.lane.b32.xlu0 %v547, 108
      %v3617 = vpop.permute.xlu0 %3616
      %3618 = vrot.lane.b32.xlu0 %v552, 108
      %v3619 = vpop.permute.xlu0 %3618
      %v3629 = vsel %vm1273, %v3267, 0
      %v3632 = vsel %vm1273, %v3269, 0
      %v3635 = vsel %vm1273, %v3271, 0
      %v3638 = vsel %vm1273, %v3273, 0
      %v3641 = vsel %vm1273, %v3275, 0
      %v3644 = vsel %vm1273, %v3277, 0
      %v3647 = vsel %vm1273, %v3279, 0
      %v3650 = vsel %vm1273, %v3281, 0
      %3652 = vmatprep.subr.mxu0 0.0
      %3653 = vmatpush1.msra.mxu0 0.0
      %3654 = vmatprep.subr.mxu0 0.0
      %3655 = vmatpush1.msra.mxu0 0.0
      %3656 = vmatprep.subr.mxu0 0.0
      %3657 = vmatpush1.msra.mxu0 0.0
      %3658 = vmatprep.subr.mxu0 0.0
      %3659 = vmatpush1.msra.mxu0 0.0
      %3660 = vmatprep.subr.mxu0 0.0
      %3661 = vmatpush1.msra.mxu0 0.0
      %3662 = vmatprep.subr.mxu0 0.0
      %3663 = vmatpush1.msra.mxu0 0.0
      %3664 = vmatprep.subr.mxu0 0.0
      %3665 = vmatpush1.msra.mxu0 0.0
      %3666 = vmatprep.subr.mxu0 0.0
      %3667 = vmatpush1.msra.mxu0 0.0
      %3668 = vmatprep.subr.mxu0 0.0
      %3669 = vmatpush1.msra.mxu0 %v3619
      %3670 = vmatprep.subr.mxu0 0.0
      %3671 = vmatpush1.msra.mxu0 %v3617
      %3672 = vmatprep.subr.mxu0 0.0
      %3673 = vmatpush1.msra.mxu0 %v3615
      %3674 = vmatprep.subr.mxu0 0.0
      %3675 = vmatpush1.msra.mxu0 %v3613
      %3676 = vmatprep.subr.mxu0 0.0
      %3677 = vmatpush1.msra.mxu0 %v3611
      %3678 = vmatprep.subr.mxu0 0.0
      %3679 = vmatpush1.msra.mxu0 %v3609
      %3680 = vmatprep.subr.mxu0 0.0
      %3681 = vmatpush1.msra.mxu0 %v3607
      %3682 = vmatprep.subr.mxu0 0.0
      %3683 = vmatpush1.msra.mxu0 %v3605
      %3684 = vmatprep.subr.mxu0 0.0
      %3685 = vmatpush2.msra.mxu0 0.0
      %3686 = vmatprep.subr.mxu0 0.0
      %3687 = vmatpush2.msra.mxu0 0.0
      %3688 = vmatprep.subr.mxu0 0.0
      %3689 = vmatpush2.msra.mxu0 0.0
      %3690 = vmatprep.subr.mxu0 0.0
      %3691 = vmatpush2.msra.mxu0 0.0
      %3692 = vmatprep.subr.mxu0 0.0
      %3693 = vmatpush2.msra.mxu0 0.0
      %3694 = vmatprep.subr.mxu0 0.0
      %3695 = vmatpush2.msra.mxu0 0.0
      %3696 = vmatprep.subr.mxu0 0.0
      %3697 = vmatpush2.msra.mxu0 0.0
      %3698 = vmatprep.subr.mxu0 0.0
      %3699 = vmatpush2.msra.mxu0 0.0
      %3700 = vmatprep.subr.mxu0 0.0
      %3701 = vmatpush2.msra.mxu0 0.0
      %3702 = vmatprep.subr.mxu0 0.0
      %3703 = vmatpush2.msra.mxu0 0.0
      %3704 = vmatprep.subr.mxu0 0.0
      %3705 = vmatpush2.msra.mxu0 0.0
      %3706 = vmatprep.subr.mxu0 0.0
      %3707 = vmatpush2.msra.mxu0 0.0
      %3708 = vmatprep.subr.mxu0 0.0
      %3709 = vmatpush2.msra.mxu0 0.0
      %3710 = vmatprep.subr.mxu0 0.0
      %3711 = vmatpush2.msra.mxu0 0.0
      %3712 = vmatprep.subr.mxu0 0.0
      %3713 = vmatpush2.msra.mxu0 0.0
      %3714 = vmatprep.subr.mxu0 0.0
      %3715 = vmatpush2.msra.mxu0 0.0
      %3716 = vmatprep.mubr.f32.mxu0 0.0
      %3717 = vmatmul.mubr.f32.gmra.mxu0 %v3629
      %v3718 = vpop.f32.mrf.mxu0
      %v3719 = vadd.f32 0.0, %v3718
      %v3720 = vpop.f32.mrf.mxu0
      %3721 = vmatprep.mubr.f32.mxu0 0.0
      %3722 = vmatmul.mubr.f32.gmra.mxu0 %v3632
      %v3723 = vpop.f32.mrf.mxu0
      %v3724 = vadd.f32 0.0, %v3723
      %v3725 = vpop.f32.mrf.mxu0
      %3726 = vmatprep.mubr.f32.mxu0 0.0
      %3727 = vmatmul.mubr.f32.gmra.mxu0 %v3635
      %v3728 = vpop.f32.mrf.mxu0
      %v3729 = vadd.f32 0.0, %v3728
      %v3730 = vpop.f32.mrf.mxu0
      %3731 = vmatprep.mubr.f32.mxu0 0.0
      %3732 = vmatmul.mubr.f32.gmra.mxu0 %v3638
      %v3733 = vpop.f32.mrf.mxu0
      %v3734 = vadd.f32 0.0, %v3733
      %v3735 = vpop.f32.mrf.mxu0
      %3736 = vmatprep.mubr.f32.mxu0 0.0
      %3737 = vmatmul.mubr.f32.gmra.mxu0 %v3641
      %v3738 = vpop.f32.mrf.mxu0
      %v3739 = vadd.f32 0.0, %v3738
      %v3740 = vpop.f32.mrf.mxu0
      %3741 = vmatprep.mubr.f32.mxu0 0.0
      %3742 = vmatmul.mubr.f32.gmra.mxu0 %v3644
      %v3743 = vpop.f32.mrf.mxu0
      %v3744 = vadd.f32 0.0, %v3743
      %v3745 = vpop.f32.mrf.mxu0
      %3746 = vmatprep.mubr.f32.mxu0 0.0
      %3747 = vmatmul.mubr.f32.gmra.mxu0 %v3647
      %v3748 = vpop.f32.mrf.mxu0
      %v3749 = vadd.f32 0.0, %v3748
      %v3750 = vpop.f32.mrf.mxu0
      %3751 = vmatprep.mubr.f32.mxu0 0.0
      %3752 = vmatmul.mubr.f32.gmra.mxu0 %v3650
      %v3753 = vpop.f32.mrf.mxu0
      %v3754 = vadd.f32 0.0, %v3753
      %v3755 = vpop.f32.mrf.mxu0
      %3756 = vdwg.mxu0
      %3757 = vrot.lane.b32.xlu0 %v557, 108
      %v3758 = vpop.permute.xlu0 %3757
      %3759 = vrot.lane.b32.xlu0 %v562, 108
      %v3760 = vpop.permute.xlu0 %3759
      %3761 = vrot.lane.b32.xlu0 %v567, 108
      %v3762 = vpop.permute.xlu0 %3761
      %3763 = vrot.lane.b32.xlu0 %v572, 108
      %v3764 = vpop.permute.xlu0 %3763
      %3765 = vrot.lane.b32.xlu0 %v577, 108
      %v3766 = vpop.permute.xlu0 %3765
      %3767 = vrot.lane.b32.xlu0 %v582, 108
      %v3768 = vpop.permute.xlu0 %3767
      %3769 = vrot.lane.b32.xlu0 %v587, 108
      %v3770 = vpop.permute.xlu0 %3769
      %3771 = vrot.lane.b32.xlu0 %v592, 108
      %v3772 = vpop.permute.xlu0 %3771
      %v3782 = vsel %vm1273, %v3283, 0
      %v3785 = vsel %vm1273, %v3285, 0
      %v3788 = vsel %vm1273, %v3287, 0
      %v3791 = vsel %vm1273, %v3289, 0
      %v3794 = vsel %vm1273, %v3291, 0
      %v3797 = vsel %vm1273, %v3293, 0
      %v3800 = vsel %vm1273, %v3295, 0
      %v3803 = vsel %vm1273, %v3297, 0
      %3805 = vmatprep.subr.mxu0 0.0
      %3806 = vmatpush1.msra.mxu0 0.0
      %3807 = vmatprep.subr.mxu0 0.0
      %3808 = vmatpush1.msra.mxu0 0.0
      %3809 = vmatprep.subr.mxu0 0.0
      %3810 = vmatpush1.msra.mxu0 0.0
      %3811 = vmatprep.subr.mxu0 0.0
      %3812 = vmatpush1.msra.mxu0 0.0
      %3813 = vmatprep.subr.mxu0 0.0
      %3814 = vmatpush1.msra.mxu0 0.0
      %3815 = vmatprep.subr.mxu0 0.0
      %3816 = vmatpush1.msra.mxu0 0.0
      %3817 = vmatprep.subr.mxu0 0.0
      %3818 = vmatpush1.msra.mxu0 0.0
      %3819 = vmatprep.subr.mxu0 0.0
      %3820 = vmatpush1.msra.mxu0 0.0
      %3821 = vmatprep.subr.mxu0 0.0
      %3822 = vmatpush1.msra.mxu0 %v3772
      %3823 = vmatprep.subr.mxu0 0.0
      %3824 = vmatpush1.msra.mxu0 %v3770
      %3825 = vmatprep.subr.mxu0 0.0
      %3826 = vmatpush1.msra.mxu0 %v3768
      %3827 = vmatprep.subr.mxu0 0.0
      %3828 = vmatpush1.msra.mxu0 %v3766
      %3829 = vmatprep.subr.mxu0 0.0
      %3830 = vmatpush1.msra.mxu0 %v3764
      %3831 = vmatprep.subr.mxu0 0.0
      %3832 = vmatpush1.msra.mxu0 %v3762
      %3833 = vmatprep.subr.mxu0 0.0
      %3834 = vmatpush1.msra.mxu0 %v3760
      %3835 = vmatprep.subr.mxu0 0.0
      %3836 = vmatpush1.msra.mxu0 %v3758
      %3837 = vmatprep.subr.mxu0 0.0
      %3838 = vmatpush2.msra.mxu0 0.0
      %3839 = vmatprep.subr.mxu0 0.0
      %3840 = vmatpush2.msra.mxu0 0.0
      %3841 = vmatprep.subr.mxu0 0.0
      %3842 = vmatpush2.msra.mxu0 0.0
      %3843 = vmatprep.subr.mxu0 0.0
      %3844 = vmatpush2.msra.mxu0 0.0
      %3845 = vmatprep.subr.mxu0 0.0
      %3846 = vmatpush2.msra.mxu0 0.0
      %3847 = vmatprep.subr.mxu0 0.0
      %3848 = vmatpush2.msra.mxu0 0.0
      %3849 = vmatprep.subr.mxu0 0.0
      %3850 = vmatpush2.msra.mxu0 0.0
      %3851 = vmatprep.subr.mxu0 0.0
      %3852 = vmatpush2.msra.mxu0 0.0
      %3853 = vmatprep.subr.mxu0 0.0
      %3854 = vmatpush2.msra.mxu0 0.0
      %3855 = vmatprep.subr.mxu0 0.0
      %3856 = vmatpush2.msra.mxu0 0.0
      %3857 = vmatprep.subr.mxu0 0.0
      %3858 = vmatpush2.msra.mxu0 0.0
      %3859 = vmatprep.subr.mxu0 0.0
      %3860 = vmatpush2.msra.mxu0 0.0
      %3861 = vmatprep.subr.mxu0 0.0
      %3862 = vmatpush2.msra.mxu0 0.0
      %3863 = vmatprep.subr.mxu0 0.0
      %3864 = vmatpush2.msra.mxu0 0.0
      %3865 = vmatprep.subr.mxu0 0.0
      %3866 = vmatpush2.msra.mxu0 0.0
      %3867 = vmatprep.subr.mxu0 0.0
      %3868 = vmatpush2.msra.mxu0 0.0
      %3869 = vmatprep.mubr.f32.mxu0 0.0
      %3870 = vmatmul.mubr.f32.gmra.mxu0 %v3782
      %v3871 = vpop.f32.mrf.mxu0
      %v3872 = vadd.f32 0.0, %v3871
      %v3873 = vpop.f32.mrf.mxu0
      %3874 = vmatprep.mubr.f32.mxu0 0.0
      %3875 = vmatmul.mubr.f32.gmra.mxu0 %v3785
      %v3876 = vpop.f32.mrf.mxu0
      %v3877 = vadd.f32 0.0, %v3876
      %v3878 = vpop.f32.mrf.mxu0
      %3879 = vmatprep.mubr.f32.mxu0 0.0
      %3880 = vmatmul.mubr.f32.gmra.mxu0 %v3788
      %v3881 = vpop.f32.mrf.mxu0
      %v3882 = vadd.f32 0.0, %v3881
      %v3883 = vpop.f32.mrf.mxu0
      %3884 = vmatprep.mubr.f32.mxu0 0.0
      %3885 = vmatmul.mubr.f32.gmra.mxu0 %v3791
      %v3886 = vpop.f32.mrf.mxu0
      %v3887 = vadd.f32 0.0, %v3886
      %v3888 = vpop.f32.mrf.mxu0
      %3889 = vmatprep.mubr.f32.mxu0 0.0
      %3890 = vmatmul.mubr.f32.gmra.mxu0 %v3794
      %v3891 = vpop.f32.mrf.mxu0
      %v3892 = vadd.f32 0.0, %v3891
      %v3893 = vpop.f32.mrf.mxu0
      %3894 = vmatprep.mubr.f32.mxu0 0.0
      %3895 = vmatmul.mubr.f32.gmra.mxu0 %v3797
      %v3896 = vpop.f32.mrf.mxu0
      %v3897 = vadd.f32 0.0, %v3896
      %v3898 = vpop.f32.mrf.mxu0
      %3899 = vmatprep.mubr.f32.mxu0 0.0
      %3900 = vmatmul.mubr.f32.gmra.mxu0 %v3800
      %v3901 = vpop.f32.mrf.mxu0
      %v3902 = vadd.f32 0.0, %v3901
      %v3903 = vpop.f32.mrf.mxu0
      %3904 = vmatprep.mubr.f32.mxu0 0.0
      %3905 = vmatmul.mubr.f32.gmra.mxu0 %v3803
      %v3906 = vpop.f32.mrf.mxu0
      %v3907 = vadd.f32 0.0, %v3906
      %v3908 = vpop.f32.mrf.mxu0
      %3909 = vdwg.mxu0
      %v3911 = vrot.slane %v595, 4
      %v3913 = vsel %vm620, %v3413, 0
      %v3916 = vsel %vm620, %v3418, 0
      %v3919 = vsel %vm620, %v3423, 0
      %v3922 = vsel %vm620, %v3428, 0
      %v3925 = vsel %vm620, %v3433, 0
      %v3928 = vsel %vm620, %v3438, 0
      %v3931 = vsel %vm620, %v3443, 0
      %v3934 = vsel %vm620, %v3448, 0
      %v3937 = vsel %vm620, %v3566, 0
      %v3940 = vsel %vm620, %v3571, 0
      %v3943 = vsel %vm620, %v3576, 0
      %v3946 = vsel %vm620, %v3581, 0
      %v3949 = vsel %vm620, %v3586, 0
      %v3952 = vsel %vm620, %v3591, 0
      %v3955 = vsel %vm620, %v3596, 0
      %v3958 = vsel %vm620, %v3601, 0
      %v3961 = vsel %vm620, %v3719, 0
      %v3964 = vsel %vm620, %v3724, 0
      %v3967 = vsel %vm620, %v3729, 0
      %v3970 = vsel %vm620, %v3734, 0
      %v3973 = vsel %vm620, %v3739, 0
      %v3976 = vsel %vm620, %v3744, 0
      %v3979 = vsel %vm620, %v3749, 0
      %v3982 = vsel %vm620, %v3754, 0
      %v3985 = vsel %vm620, %v3872, 0
      %v3988 = vsel %vm620, %v3877, 0
      %v3991 = vsel %vm620, %v3882, 0
      %v3994 = vsel %vm620, %v3887, 0
      %v3997 = vsel %vm620, %v3892, 0
      %v4000 = vsel %vm620, %v3897, 0
      %v4003 = vsel %vm620, %v3902, 0
      %v4006 = vsel %vm620, %v3907, 0
      %vm4008 = vcmask 1043456
      %v4009 = vsel %vm4008, %v3911, 0
      %4011 = vmatprep.subr.mxu0 0.0
      %4012 = vmatpush1.msra.mxu0 0.0
      %4013 = vmatprep.subr.mxu0 0.0
      %4014 = vmatpush1.msra.mxu0 0.0
      %4015 = vmatprep.subr.mxu0 0.0
      %4016 = vmatpush1.msra.mxu0 0.0
      %4017 = vmatprep.subr.mxu0 0.0
      %4018 = vmatpush1.msra.mxu0 0.0
      %4019 = vmatprep.subr.mxu0 0.0
      %4020 = vmatpush1.msra.mxu0 0.0
      %4021 = vmatprep.subr.mxu0 0.0
      %4022 = vmatpush1.msra.mxu0 0.0
      %4023 = vmatprep.subr.mxu0 0.0
      %4024 = vmatpush1.msra.mxu0 0.0
      %4025 = vmatprep.subr.mxu0 0.0
      %4026 = vmatpush1.msra.mxu0 0.0
      %4027 = vmatprep.subr.mxu0 0.0
      %4028 = vmatpush1.msra.mxu0 0.0
      %4029 = vmatprep.subr.mxu0 0.0
      %4030 = vmatpush1.msra.mxu0 0.0
      %4031 = vmatprep.subr.mxu0 0.0
      %4032 = vmatpush1.msra.mxu0 0.0
      %4033 = vmatprep.subr.mxu0 0.0
      %4034 = vmatpush1.msra.mxu0 0.0
      %4035 = vmatprep.subr.mxu0 0.0
      %4036 = vmatpush1.msra.mxu0 0.0
      %4037 = vmatprep.subr.mxu0 0.0
      %4038 = vmatpush1.msra.mxu0 0.0
      %4039 = vmatprep.subr.mxu0 0.0
      %4040 = vmatpush1.msra.mxu0 0.0
      %4041 = vmatprep.subr.mxu0 0.0
      %4042 = vmatpush1.msra.mxu0 %v4009
      %4043 = vmatprep.subr.mxu0 0.0
      %4044 = vmatpush2.msra.mxu0 0.0
      %4045 = vmatprep.subr.mxu0 0.0
      %4046 = vmatpush2.msra.mxu0 0.0
      %4047 = vmatprep.subr.mxu0 0.0
      %4048 = vmatpush2.msra.mxu0 0.0
      %4049 = vmatprep.subr.mxu0 0.0
      %4050 = vmatpush2.msra.mxu0 0.0
      %4051 = vmatprep.subr.mxu0 0.0
      %4052 = vmatpush2.msra.mxu0 0.0
      %4053 = vmatprep.subr.mxu0 0.0
      %4054 = vmatpush2.msra.mxu0 0.0
      %4055 = vmatprep.subr.mxu0 0.0
      %4056 = vmatpush2.msra.mxu0 0.0
      %4057 = vmatprep.subr.mxu0 0.0
      %4058 = vmatpush2.msra.mxu0 0.0
      %4059 = vmatprep.subr.mxu0 0.0
      %4060 = vmatpush2.msra.mxu0 0.0
      %4061 = vmatprep.subr.mxu0 0.0
      %4062 = vmatpush2.msra.mxu0 0.0
      %4063 = vmatprep.subr.mxu0 0.0
      %4064 = vmatpush2.msra.mxu0 0.0
      %4065 = vmatprep.subr.mxu0 0.0
      %4066 = vmatpush2.msra.mxu0 0.0
      %4067 = vmatprep.subr.mxu0 0.0
      %4068 = vmatpush2.msra.mxu0 0.0
      %4069 = vmatprep.subr.mxu0 0.0
      %4070 = vmatpush2.msra.mxu0 0.0
      %4071 = vmatprep.subr.mxu0 0.0
      %4072 = vmatpush2.msra.mxu0 0.0
      %4073 = vmatprep.subr.mxu0 0.0
      %4074 = vmatpush2.msra.mxu0 0.0
      %4075 = vmatprep.mubr.f32.mxu0 0.0
      %4076 = vmatmul.mubr.f32.gmra.mxu0 %v3913
      %v4077 = vpop.f32.mrf.mxu0
      %v4078 = vadd.f32 0.0, %v4077
      %v4079 = vpop.f32.mrf.mxu0
      %4080 = vmatprep.mubr.f32.mxu0 0.0
      %4081 = vmatmul.mubr.f32.gmra.mxu0 %v3916
      %v4082 = vpop.f32.mrf.mxu0
      %v4083 = vadd.f32 0.0, %v4082
      %v4084 = vpop.f32.mrf.mxu0
      %4085 = vmatprep.mubr.f32.mxu0 0.0
      %4086 = vmatmul.mubr.f32.gmra.mxu0 %v3919
      %v4087 = vpop.f32.mrf.mxu0
      %v4088 = vadd.f32 0.0, %v4087
      %v4089 = vpop.f32.mrf.mxu0
      %4090 = vmatprep.mubr.f32.mxu0 0.0
      %4091 = vmatmul.mubr.f32.gmra.mxu0 %v3922
      %v4092 = vpop.f32.mrf.mxu0
      %v4093 = vadd.f32 0.0, %v4092
      %v4094 = vpop.f32.mrf.mxu0
      %4095 = vmatprep.mubr.f32.mxu0 0.0
      %4096 = vmatmul.mubr.f32.gmra.mxu0 %v3925
      %v4097 = vpop.f32.mrf.mxu0
      %v4098 = vadd.f32 0.0, %v4097
      %v4099 = vpop.f32.mrf.mxu0
      %4100 = vmatprep.mubr.f32.mxu0 0.0
      %4101 = vmatmul.mubr.f32.gmra.mxu0 %v3928
      %v4102 = vpop.f32.mrf.mxu0
      %v4103 = vadd.f32 0.0, %v4102
      %v4104 = vpop.f32.mrf.mxu0
      %4105 = vmatprep.mubr.f32.mxu0 0.0
      %4106 = vmatmul.mubr.f32.gmra.mxu0 %v3931
      %v4107 = vpop.f32.mrf.mxu0
      %v4108 = vadd.f32 0.0, %v4107
      %v4109 = vpop.f32.mrf.mxu0
      %4110 = vmatprep.mubr.f32.mxu0 0.0
      %4111 = vmatmul.mubr.f32.gmra.mxu0 %v3934
      %v4112 = vpop.f32.mrf.mxu0
      %v4113 = vadd.f32 0.0, %v4112
      %v4114 = vpop.f32.mrf.mxu0
      %4115 = vmatprep.mubr.f32.mxu0 0.0
      %4116 = vmatmul.mubr.f32.gmra.mxu0 %v3937
      %v4117 = vpop.f32.mrf.mxu0
      %v4118 = vadd.f32 0.0, %v4117
      %v4119 = vpop.f32.mrf.mxu0
      %4120 = vmatprep.mubr.f32.mxu0 0.0
      %4121 = vmatmul.mubr.f32.gmra.mxu0 %v3940
      %v4122 = vpop.f32.mrf.mxu0
      %v4123 = vadd.f32 0.0, %v4122
      %v4124 = vpop.f32.mrf.mxu0
      %4125 = vmatprep.mubr.f32.mxu0 0.0
      %4126 = vmatmul.mubr.f32.gmra.mxu0 %v3943
      %v4127 = vpop.f32.mrf.mxu0
      %v4128 = vadd.f32 0.0, %v4127
      %v4129 = vpop.f32.mrf.mxu0
      %4130 = vmatprep.mubr.f32.mxu0 0.0
      %4131 = vmatmul.mubr.f32.gmra.mxu0 %v3946
      %v4132 = vpop.f32.mrf.mxu0
      %v4133 = vadd.f32 0.0, %v4132
      %v4134 = vpop.f32.mrf.mxu0
      %4135 = vmatprep.mubr.f32.mxu0 0.0
      %4136 = vmatmul.mubr.f32.gmra.mxu0 %v3949
      %v4137 = vpop.f32.mrf.mxu0
      %v4138 = vadd.f32 0.0, %v4137
      %v4139 = vpop.f32.mrf.mxu0
      %4140 = vmatprep.mubr.f32.mxu0 0.0
      %4141 = vmatmul.mubr.f32.gmra.mxu0 %v3952
      %v4142 = vpop.f32.mrf.mxu0
      %v4143 = vadd.f32 0.0, %v4142
      %v4144 = vpop.f32.mrf.mxu0
      %4145 = vmatprep.mubr.f32.mxu0 0.0
      %4146 = vmatmul.mubr.f32.gmra.mxu0 %v3955
      %v4147 = vpop.f32.mrf.mxu0
      %v4148 = vadd.f32 0.0, %v4147
      %v4149 = vpop.f32.mrf.mxu0
      %4150 = vmatprep.mubr.f32.mxu0 0.0
      %4151 = vmatmul.mubr.f32.gmra.mxu0 %v3958
      %v4152 = vpop.f32.mrf.mxu0
      %v4153 = vadd.f32 0.0, %v4152
      %v4154 = vpop.f32.mrf.mxu0
      %4155 = vmatprep.mubr.f32.mxu0 0.0
      %4156 = vmatmul.mubr.f32.gmra.mxu0 %v3961
      %v4157 = vpop.f32.mrf.mxu0
      %v4158 = vadd.f32 0.0, %v4157
      %v4159 = vpop.f32.mrf.mxu0
      %4160 = vmatprep.mubr.f32.mxu0 0.0
      %4161 = vmatmul.mubr.f32.gmra.mxu0 %v3964
      %v4162 = vpop.f32.mrf.mxu0
      %v4163 = vadd.f32 0.0, %v4162
      %v4164 = vpop.f32.mrf.mxu0
      %4165 = vmatprep.mubr.f32.mxu0 0.0
      %4166 = vmatmul.mubr.f32.gmra.mxu0 %v3967
      %v4167 = vpop.f32.mrf.mxu0
      %v4168 = vadd.f32 0.0, %v4167
      %v4169 = vpop.f32.mrf.mxu0
      %4170 = vmatprep.mubr.f32.mxu0 0.0
      %4171 = vmatmul.mubr.f32.gmra.mxu0 %v3970
      %v4172 = vpop.f32.mrf.mxu0
      %v4173 = vadd.f32 0.0, %v4172
      %v4174 = vpop.f32.mrf.mxu0
      %4175 = vmatprep.mubr.f32.mxu0 0.0
      %4176 = vmatmul.mubr.f32.gmra.mxu0 %v3973
      %v4177 = vpop.f32.mrf.mxu0
      %v4178 = vadd.f32 0.0, %v4177
      %v4179 = vpop.f32.mrf.mxu0
      %4180 = vmatprep.mubr.f32.mxu0 0.0
      %4181 = vmatmul.mubr.f32.gmra.mxu0 %v3976
      %v4182 = vpop.f32.mrf.mxu0
      %v4183 = vadd.f32 0.0, %v4182
      %v4184 = vpop.f32.mrf.mxu0
      %4185 = vmatprep.mubr.f32.mxu0 0.0
      %4186 = vmatmul.mubr.f32.gmra.mxu0 %v3979
      %v4187 = vpop.f32.mrf.mxu0
      %v4188 = vadd.f32 0.0, %v4187
      %v4189 = vpop.f32.mrf.mxu0
      %4190 = vmatprep.mubr.f32.mxu0 0.0
      %4191 = vmatmul.mubr.f32.gmra.mxu0 %v3982
      %v4192 = vpop.f32.mrf.mxu0
      %v4193 = vadd.f32 0.0, %v4192
      %v4194 = vpop.f32.mrf.mxu0
      %4195 = vmatprep.mubr.f32.mxu0 0.0
      %4196 = vmatmul.mubr.f32.gmra.mxu0 %v3985
      %v4197 = vpop.f32.mrf.mxu0
      %v4198 = vadd.f32 0.0, %v4197
      %v4199 = vpop.f32.mrf.mxu0
      %4200 = vmatprep.mubr.f32.mxu0 0.0
      %4201 = vmatmul.mubr.f32.gmra.mxu0 %v3988
      %v4202 = vpop.f32.mrf.mxu0
      %v4203 = vadd.f32 0.0, %v4202
      %v4204 = vpop.f32.mrf.mxu0
      %4205 = vmatprep.mubr.f32.mxu0 0.0
      %4206 = vmatmul.mubr.f32.gmra.mxu0 %v3991
      %v4207 = vpop.f32.mrf.mxu0
      %v4208 = vadd.f32 0.0, %v4207
      %v4209 = vpop.f32.mrf.mxu0
      %4210 = vmatprep.mubr.f32.mxu0 0.0
      %4211 = vmatmul.mubr.f32.gmra.mxu0 %v3994
      %v4212 = vpop.f32.mrf.mxu0
      %v4213 = vadd.f32 0.0, %v4212
      %v4214 = vpop.f32.mrf.mxu0
      %4215 = vmatprep.mubr.f32.mxu0 0.0
      %4216 = vmatmul.mubr.f32.gmra.mxu0 %v3997
      %v4217 = vpop.f32.mrf.mxu0
      %v4218 = vadd.f32 0.0, %v4217
      %v4219 = vpop.f32.mrf.mxu0
      %4220 = vmatprep.mubr.f32.mxu0 0.0
      %4221 = vmatmul.mubr.f32.gmra.mxu0 %v4000
      %v4222 = vpop.f32.mrf.mxu0
      %v4223 = vadd.f32 0.0, %v4222
      %v4224 = vpop.f32.mrf.mxu0
      %4225 = vmatprep.mubr.f32.mxu0 0.0
      %4226 = vmatmul.mubr.f32.gmra.mxu0 %v4003
      %v4227 = vpop.f32.mrf.mxu0
      %v4228 = vadd.f32 0.0, %v4227
      %v4229 = vpop.f32.mrf.mxu0
      %4230 = vmatprep.mubr.f32.mxu0 0.0
      %4231 = vmatmul.mubr.f32.gmra.mxu0 %v4006
      %v4232 = vpop.f32.mrf.mxu0
      %v4233 = vadd.f32 0.0, %v4232
      %v4234 = vpop.f32.mrf.mxu0
      %4235 = vdwg.mxu0
      %v4237 = vsel %vm620, %v1741, 0
      %v4240 = vsel %vm620, %v1746, 0
      %v4243 = vsel %vm620, %v1751, 0
      %v4246 = vsel %vm620, %v1756, 0
      %v4249 = vsel %vm620, %v1761, 0
      %v4252 = vsel %vm620, %v1766, 0
      %v4255 = vsel %vm620, %v1771, 0
      %v4258 = vsel %vm620, %v1776, 0
      %v4261 = vsel %vm620, %v1894, 0
      %v4264 = vsel %vm620, %v1899, 0
      %v4267 = vsel %vm620, %v1904, 0
      %v4270 = vsel %vm620, %v1909, 0
      %v4273 = vsel %vm620, %v1914, 0
      %v4276 = vsel %vm620, %v1919, 0
      %v4279 = vsel %vm620, %v1924, 0
      %v4282 = vsel %vm620, %v1929, 0
      %v4285 = vsel %vm620, %v2047, 0
      %v4288 = vsel %vm620, %v2052, 0
      %v4291 = vsel %vm620, %v2057, 0
      %v4294 = vsel %vm620, %v2062, 0
      %v4297 = vsel %vm620, %v2067, 0
      %v4300 = vsel %vm620, %v2072, 0
      %v4303 = vsel %vm620, %v2077, 0
      %v4306 = vsel %vm620, %v2082, 0
      %v4309 = vsel %vm620, %v2200, 0
      %v4312 = vsel %vm620, %v2205, 0
      %v4315 = vsel %vm620, %v2210, 0
      %v4318 = vsel %vm620, %v2215, 0
      %v4321 = vsel %vm620, %v2220, 0
      %v4324 = vsel %vm620, %v2225, 0
      %v4327 = vsel %vm620, %v2230, 0
      %v4330 = vsel %vm620, %v2235, 0
      %v4332 = vsel %vm4008, %v595, 0
      %4334 = vmatprep.subr.mxu0 0.0
      %4335 = vmatpush1.msra.mxu0 0.0
      %4336 = vmatprep.subr.mxu0 0.0
      %4337 = vmatpush1.msra.mxu0 0.0
      %4338 = vmatprep.subr.mxu0 0.0
      %4339 = vmatpush1.msra.mxu0 0.0
      %4340 = vmatprep.subr.mxu0 0.0
      %4341 = vmatpush1.msra.mxu0 0.0
      %4342 = vmatprep.subr.mxu0 0.0
      %4343 = vmatpush1.msra.mxu0 0.0
      %4344 = vmatprep.subr.mxu0 0.0
      %4345 = vmatpush1.msra.mxu0 0.0
      %4346 = vmatprep.subr.mxu0 0.0
      %4347 = vmatpush1.msra.mxu0 0.0
      %4348 = vmatprep.subr.mxu0 0.0
      %4349 = vmatpush1.msra.mxu0 0.0
      %4350 = vmatprep.subr.mxu0 0.0
      %4351 = vmatpush1.msra.mxu0 0.0
      %4352 = vmatprep.subr.mxu0 0.0
      %4353 = vmatpush1.msra.mxu0 0.0
      %4354 = vmatprep.subr.mxu0 0.0
      %4355 = vmatpush1.msra.mxu0 0.0
      %4356 = vmatprep.subr.mxu0 0.0
      %4357 = vmatpush1.msra.mxu0 0.0
      %4358 = vmatprep.subr.mxu0 0.0
      %4359 = vmatpush1.msra.mxu0 0.0
      %4360 = vmatprep.subr.mxu0 0.0
      %4361 = vmatpush1.msra.mxu0 0.0
      %4362 = vmatprep.subr.mxu0 0.0
      %4363 = vmatpush1.msra.mxu0 0.0
      %4364 = vmatprep.subr.mxu0 0.0
      %4365 = vmatpush1.msra.mxu0 %v4332
      %4366 = vmatprep.subr.mxu0 0.0
      %4367 = vmatpush2.msra.mxu0 0.0
      %4368 = vmatprep.subr.mxu0 0.0
      %4369 = vmatpush2.msra.mxu0 0.0
      %4370 = vmatprep.subr.mxu0 0.0
      %4371 = vmatpush2.msra.mxu0 0.0
      %4372 = vmatprep.subr.mxu0 0.0
      %4373 = vmatpush2.msra.mxu0 0.0
      %4374 = vmatprep.subr.mxu0 0.0
      %4375 = vmatpush2.msra.mxu0 0.0
      %4376 = vmatprep.subr.mxu0 0.0
      %4377 = vmatpush2.msra.mxu0 0.0
      %4378 = vmatprep.subr.mxu0 0.0
      %4379 = vmatpush2.msra.mxu0 0.0
      %4380 = vmatprep.subr.mxu0 0.0
      %4381 = vmatpush2.msra.mxu0 0.0
      %4382 = vmatprep.subr.mxu0 0.0
      %4383 = vmatpush2.msra.mxu0 0.0
      %4384 = vmatprep.subr.mxu0 0.0
      %4385 = vmatpush2.msra.mxu0 0.0
      %4386 = vmatprep.subr.mxu0 0.0
      %4387 = vmatpush2.msra.mxu0 0.0
      %4388 = vmatprep.subr.mxu0 0.0
      %4389 = vmatpush2.msra.mxu0 0.0
      %4390 = vmatprep.subr.mxu0 0.0
      %4391 = vmatpush2.msra.mxu0 0.0
      %4392 = vmatprep.subr.mxu0 0.0
      %4393 = vmatpush2.msra.mxu0 0.0
      %4394 = vmatprep.subr.mxu0 0.0
      %4395 = vmatpush2.msra.mxu0 0.0
      %4396 = vmatprep.subr.mxu0 0.0
      %4397 = vmatpush2.msra.mxu0 0.0
      %4398 = vmatprep.mubr.f32.mxu0 0.0
      %4399 = vmatmul.mubr.f32.gmra.mxu0 %v4237
      %v4400 = vpop.f32.mrf.mxu0
      %v4401 = vadd.f32 %v4078, %v4400
      %v4402 = vpop.f32.mrf.mxu0
      %4403 = vmatprep.mubr.f32.mxu0 0.0
      %4404 = vmatmul.mubr.f32.gmra.mxu0 %v4240
      %v4405 = vpop.f32.mrf.mxu0
      %v4406 = vadd.f32 %v4083, %v4405
      %v4407 = vpop.f32.mrf.mxu0
      %4408 = vmatprep.mubr.f32.mxu0 0.0
      %4409 = vmatmul.mubr.f32.gmra.mxu0 %v4243
      %v4410 = vpop.f32.mrf.mxu0
      %v4411 = vadd.f32 %v4088, %v4410
      %v4412 = vpop.f32.mrf.mxu0
      %4413 = vmatprep.mubr.f32.mxu0 0.0
      %4414 = vmatmul.mubr.f32.gmra.mxu0 %v4246
      %v4415 = vpop.f32.mrf.mxu0
      %v4416 = vadd.f32 %v4093, %v4415
      %v4417 = vpop.f32.mrf.mxu0
      %4418 = vmatprep.mubr.f32.mxu0 0.0
      %4419 = vmatmul.mubr.f32.gmra.mxu0 %v4249
      %v4420 = vpop.f32.mrf.mxu0
      %v4421 = vadd.f32 %v4098, %v4420
      %v4422 = vpop.f32.mrf.mxu0
      %4423 = vmatprep.mubr.f32.mxu0 0.0
      %4424 = vmatmul.mubr.f32.gmra.mxu0 %v4252
      %v4425 = vpop.f32.mrf.mxu0
      %v4426 = vadd.f32 %v4103, %v4425
      %v4427 = vpop.f32.mrf.mxu0
      %4428 = vmatprep.mubr.f32.mxu0 0.0
      %4429 = vmatmul.mubr.f32.gmra.mxu0 %v4255
      %v4430 = vpop.f32.mrf.mxu0
      %v4431 = vadd.f32 %v4108, %v4430
      %v4432 = vpop.f32.mrf.mxu0
      %4433 = vmatprep.mubr.f32.mxu0 0.0
      %4434 = vmatmul.mubr.f32.gmra.mxu0 %v4258
      %v4435 = vpop.f32.mrf.mxu0
      %v4436 = vadd.f32 %v4113, %v4435
      %v4437 = vpop.f32.mrf.mxu0
      %4438 = vmatprep.mubr.f32.mxu0 0.0
      %4439 = vmatmul.mubr.f32.gmra.mxu0 %v4261
      %v4440 = vpop.f32.mrf.mxu0
      %v4441 = vadd.f32 %v4118, %v4440
      %v4442 = vpop.f32.mrf.mxu0
      %4443 = vmatprep.mubr.f32.mxu0 0.0
      %4444 = vmatmul.mubr.f32.gmra.mxu0 %v4264
      %v4445 = vpop.f32.mrf.mxu0
      %v4446 = vadd.f32 %v4123, %v4445
      %v4447 = vpop.f32.mrf.mxu0
      %4448 = vmatprep.mubr.f32.mxu0 0.0
      %4449 = vmatmul.mubr.f32.gmra.mxu0 %v4267
      %v4450 = vpop.f32.mrf.mxu0
      %v4451 = vadd.f32 %v4128, %v4450
      %v4452 = vpop.f32.mrf.mxu0
      %4453 = vmatprep.mubr.f32.mxu0 0.0
      %4454 = vmatmul.mubr.f32.gmra.mxu0 %v4270
      %v4455 = vpop.f32.mrf.mxu0
      %v4456 = vadd.f32 %v4133, %v4455
      %v4457 = vpop.f32.mrf.mxu0
      %4458 = vmatprep.mubr.f32.mxu0 0.0
      %4459 = vmatmul.mubr.f32.gmra.mxu0 %v4273
      %v4460 = vpop.f32.mrf.mxu0
      %v4461 = vadd.f32 %v4138, %v4460
      %v4462 = vpop.f32.mrf.mxu0
      %4463 = vmatprep.mubr.f32.mxu0 0.0
      %4464 = vmatmul.mubr.f32.gmra.mxu0 %v4276
      %v4465 = vpop.f32.mrf.mxu0
      %v4466 = vadd.f32 %v4143, %v4465
      %v4467 = vpop.f32.mrf.mxu0
      %4468 = vmatprep.mubr.f32.mxu0 0.0
      %4469 = vmatmul.mubr.f32.gmra.mxu0 %v4279
      %v4470 = vpop.f32.mrf.mxu0
      %v4471 = vadd.f32 %v4148, %v4470
      %v4472 = vpop.f32.mrf.mxu0
      %4473 = vmatprep.mubr.f32.mxu0 0.0
      %4474 = vmatmul.mubr.f32.gmra.mxu0 %v4282
      %v4475 = vpop.f32.mrf.mxu0
      %v4476 = vadd.f32 %v4153, %v4475
      %v4477 = vpop.f32.mrf.mxu0
      %4478 = vmatprep.mubr.f32.mxu0 0.0
      %4479 = vmatmul.mubr.f32.gmra.mxu0 %v4285
      %v4480 = vpop.f32.mrf.mxu0
      %v4481 = vadd.f32 %v4158, %v4480
      %v4482 = vpop.f32.mrf.mxu0
      %4483 = vmatprep.mubr.f32.mxu0 0.0
      %4484 = vmatmul.mubr.f32.gmra.mxu0 %v4288
      %v4485 = vpop.f32.mrf.mxu0
      %v4486 = vadd.f32 %v4163, %v4485
      %v4487 = vpop.f32.mrf.mxu0
      %4488 = vmatprep.mubr.f32.mxu0 0.0
      %4489 = vmatmul.mubr.f32.gmra.mxu0 %v4291
      %v4490 = vpop.f32.mrf.mxu0
      %v4491 = vadd.f32 %v4168, %v4490
      %v4492 = vpop.f32.mrf.mxu0
      %4493 = vmatprep.mubr.f32.mxu0 0.0
      %4494 = vmatmul.mubr.f32.gmra.mxu0 %v4294
      %v4495 = vpop.f32.mrf.mxu0
      %v4496 = vadd.f32 %v4173, %v4495
      %v4497 = vpop.f32.mrf.mxu0
      %4498 = vmatprep.mubr.f32.mxu0 0.0
      %4499 = vmatmul.mubr.f32.gmra.mxu0 %v4297
      %v4500 = vpop.f32.mrf.mxu0
      %v4501 = vadd.f32 %v4178, %v4500
      %v4502 = vpop.f32.mrf.mxu0
      %4503 = vmatprep.mubr.f32.mxu0 0.0
      %4504 = vmatmul.mubr.f32.gmra.mxu0 %v4300
      %v4505 = vpop.f32.mrf.mxu0
      %v4506 = vadd.f32 %v4183, %v4505
      %v4507 = vpop.f32.mrf.mxu0
      %4508 = vmatprep.mubr.f32.mxu0 0.0
      %4509 = vmatmul.mubr.f32.gmra.mxu0 %v4303
      %v4510 = vpop.f32.mrf.mxu0
      %v4511 = vadd.f32 %v4188, %v4510
      %v4512 = vpop.f32.mrf.mxu0
      %4513 = vmatprep.mubr.f32.mxu0 0.0
      %4514 = vmatmul.mubr.f32.gmra.mxu0 %v4306
      %v4515 = vpop.f32.mrf.mxu0
      %v4516 = vadd.f32 %v4193, %v4515
      %v4517 = vpop.f32.mrf.mxu0
      %4518 = vmatprep.mubr.f32.mxu0 0.0
      %4519 = vmatmul.mubr.f32.gmra.mxu0 %v4309
      %v4520 = vpop.f32.mrf.mxu0
      %v4521 = vadd.f32 %v4198, %v4520
      %v4522 = vpop.f32.mrf.mxu0
      %4523 = vmatprep.mubr.f32.mxu0 0.0
      %4524 = vmatmul.mubr.f32.gmra.mxu0 %v4312
      %v4525 = vpop.f32.mrf.mxu0
      %v4526 = vadd.f32 %v4203, %v4525
      %v4527 = vpop.f32.mrf.mxu0
      %4528 = vmatprep.mubr.f32.mxu0 0.0
      %4529 = vmatmul.mubr.f32.gmra.mxu0 %v4315
      %v4530 = vpop.f32.mrf.mxu0
      %v4531 = vadd.f32 %v4208, %v4530
      %v4532 = vpop.f32.mrf.mxu0
      %4533 = vmatprep.mubr.f32.mxu0 0.0
      %4534 = vmatmul.mubr.f32.gmra.mxu0 %v4318
      %v4535 = vpop.f32.mrf.mxu0
      %v4536 = vadd.f32 %v4213, %v4535
      %v4537 = vpop.f32.mrf.mxu0
      %4538 = vmatprep.mubr.f32.mxu0 0.0
      %4539 = vmatmul.mubr.f32.gmra.mxu0 %v4321
      %v4540 = vpop.f32.mrf.mxu0
      %v4541 = vadd.f32 %v4218, %v4540
      %v4542 = vpop.f32.mrf.mxu0
      %4543 = vmatprep.mubr.f32.mxu0 0.0
      %4544 = vmatmul.mubr.f32.gmra.mxu0 %v4324
      %v4545 = vpop.f32.mrf.mxu0
      %v4546 = vadd.f32 %v4223, %v4545
      %v4547 = vpop.f32.mrf.mxu0
      %4548 = vmatprep.mubr.f32.mxu0 0.0
      %4549 = vmatmul.mubr.f32.gmra.mxu0 %v4327
      %v4550 = vpop.f32.mrf.mxu0
      %v4551 = vadd.f32 %v4228, %v4550
      %v4552 = vpop.f32.mrf.mxu0
      %4553 = vmatprep.mubr.f32.mxu0 0.0
      %4554 = vmatmul.mubr.f32.gmra.mxu0 %v4330
      %v4555 = vpop.f32.mrf.mxu0
      %v4556 = vadd.f32 %v4233, %v4555
      %v4557 = vpop.f32.mrf.mxu0
      %4558 = vdwg.mxu0
      %v4559 = vld [vmem:[%s4] sm:$0x1]
      %v4561 = vlaneseq
      %v4562 = vshrl.u32 %v4561, 7
      %v4563 = vsub.s32 0, %v4562
      %v4564 = vrot.slane %v4559, %v4563
      %v4566 = vadd.f32 %v4401, %v4564
      %v4567 = vadd.f32 %v4406, %v4564
      %v4568 = vadd.f32 %v4411, %v4564
      %v4569 = vadd.f32 %v4416, %v4564
      %v4570 = vadd.f32 %v4421, %v4564
      %v4571 = vadd.f32 %v4426, %v4564
      %v4572 = vadd.f32 %v4431, %v4564
      %v4573 = vadd.f32 %v4436, %v4564
      %v4574 = vadd.f32 %v4441, %v4564
      %v4575 = vadd.f32 %v4446, %v4564
      %v4576 = vadd.f32 %v4451, %v4564
      %v4577 = vadd.f32 %v4456, %v4564
      %v4578 = vadd.f32 %v4461, %v4564
      %v4579 = vadd.f32 %v4466, %v4564
      %v4580 = vadd.f32 %v4471, %v4564
      %v4581 = vadd.f32 %v4476, %v4564
      %v4582 = vadd.f32 %v4481, %v4564
      %v4583 = vadd.f32 %v4486, %v4564
      %v4584 = vadd.f32 %v4491, %v4564
      %v4585 = vadd.f32 %v4496, %v4564
      %v4586 = vadd.f32 %v4501, %v4564
      %v4587 = vadd.f32 %v4506, %v4564
      %v4588 = vadd.f32 %v4511, %v4564
      %v4589 = vadd.f32 %v4516, %v4564
      %v4590 = vadd.f32 %v4521, %v4564
      %v4591 = vadd.f32 %v4526, %v4564
      %v4592 = vadd.f32 %v4531, %v4564
      %v4593 = vadd.f32 %v4536, %v4564
      %v4594 = vadd.f32 %v4541, %v4564
      %v4595 = vadd.f32 %v4546, %v4564
      %v4596 = vadd.f32 %v4551, %v4564
      %v4597 = vadd.f32 %v4556, %v4564
      %4598 = vst.msk [vmem:[%s231] sm:$0xff] %vm273, %v4566
      %4599 = vst.msk [vmem:[%s231 + $0x8] sm:$0xff] %vm273, %v4567
      %4600 = vst.msk [vmem:[%s231 + $0x10] sm:$0xff] %vm273, %v4568
      %4601 = vst.msk [vmem:[%s231 + $0x18] sm:$0xff] %vm273, %v4569
      %4602 = vst.msk [vmem:[%s231 + $0x20] sm:$0xff] %vm273, %v4570
      %4603 = vst.msk [vmem:[%s231 + $0x28] sm:$0xff] %vm273, %v4571
      %4604 = vst.msk [vmem:[%s231 + $0x30] sm:$0xff] %vm273, %v4572
      %4605 = vst.msk [vmem:[%s231 + $0x38] sm:$0xff] %vm273, %v4573
      %4606 = vst.msk [vmem:[%s231 + $0x40] sm:$0xff] %vm273, %v4574
      %4607 = vst.msk [vmem:[%s231 + $0x48] sm:$0xff] %vm273, %v4575
      %4608 = vst.msk [vmem:[%s231 + $0x50] sm:$0xff] %vm273, %v4576
      %4609 = vst.msk [vmem:[%s231 + $0x58] sm:$0xff] %vm273, %v4577
      %4610 = vst.msk [vmem:[%s231 + $0x60] sm:$0xff] %vm273, %v4578
      %4611 = vst.msk [vmem:[%s231 + $0x68] sm:$0xff] %vm273, %v4579
      %4612 = vst.msk [vmem:[%s231 + $0x70] sm:$0xff] %vm273, %v4580
      %4613 = vst.msk [vmem:[%s231 + $0x78] sm:$0xff] %vm273, %v4581
      %4614 = vst.msk [vmem:[%s231 + $0x80] sm:$0xff] %vm273, %v4582
      %4615 = vst.msk [vmem:[%s231 + $0x88] sm:$0xff] %vm273, %v4583
      %4616 = vst.msk [vmem:[%s231 + $0x90] sm:$0xff] %vm273, %v4584
      %4617 = vst.msk [vmem:[%s231 + $0x98] sm:$0xff] %vm273, %v4585
      %4618 = vst.msk [vmem:[%s231 + $0xa0] sm:$0xff] %vm273, %v4586
      %4619 = vst.msk [vmem:[%s231 + $0xa8] sm:$0xff] %vm273, %v4587
      %4620 = vst.msk [vmem:[%s231 + $0xb0] sm:$0xff] %vm273, %v4588
      %4621 = vst.msk [vmem:[%s231 + $0xb8] sm:$0xff] %vm273, %v4589
      %4622 = vst.msk [vmem:[%s231 + $0xc0] sm:$0xff] %vm273, %v4590
      %4623 = vst.msk [vmem:[%s231 + $0xc8] sm:$0xff] %vm273, %v4591
      %4624 = vst.msk [vmem:[%s231 + $0xd0] sm:$0xff] %vm273, %v4592
      %4625 = vst.msk [vmem:[%s231 + $0xd8] sm:$0xff] %vm273, %v4593
      %4626 = vst.msk [vmem:[%s231 + $0xe0] sm:$0xff] %vm273, %v4594
      %4627 = vst.msk [vmem:[%s231 + $0xe8] sm:$0xff] %vm273, %v4595
      %4628 = vst.msk [vmem:[%s231 + $0xf0] sm:$0xff] %vm273, %v4596
      %4629 = vst.msk [vmem:[%s231 + $0xf8] sm:$0xff] %vm273, %v4597
      %s4630 = smul.u32 4, %s16
      %p4631 = scmp.lt.s32.totalorder %s4630, 7
      %s4632 = scalar_select %p4631, %s4630, 7
      %s4633 = smul.addr %s4632, 8
      %s4634 = smul.addr %s4633, 8
      %s4635 = scalar_lea.vmem %s5, %s4634
      // Predicated region
      $region41: #{tpu_custom_call.1} parent=39 // pred_check
        %p4636 = pneg %p144
      $region42: #{tpu_custom_call.1} parent=39 // pred_check_branch
        %4638 = sbr.rel (%p4636) target = $region44
      $region43: #{tpu_custom_call.1} parent=39 // pred_region
        %s4639 = smul.u32 4, %s16
      $region44: #{tpu_custom_call.1} parent=39 // pred_fallthru
        _
    $region40: #{tpu_custom_call.1} parent=5 // pred_fallthru
      _
    %p4640 = scmp.le.s32.totalorder 2, %s11
    // Predicated region
    $region45: #{tpu_custom_call.1} parent=5 // pred_check
      %p4641 = pneg %p4640
    $region46: #{tpu_custom_call.1} parent=5 // pred_check_branch
      %4643 = sbr.rel (%p4641) target = $region48
    $region47: #{tpu_custom_call.1} parent=5 // pred_region
      %s4644 = ssub.s32 %s11, 2
      // Predicated region
      $region49: #{tpu_custom_call.1} parent=47 // pred_check
        %p4645 = pneg %p150
      $region50: #{tpu_custom_call.1} parent=47 // pred_check_branch
        %4647 = sbr.rel (%p4645) target = $region52
      $region51: #{tpu_custom_call.1} parent=47 // pred_region
        %s4648 = smul.u32 4, %s17
        %p4649 = scmp.lt.s32.totalorder %s4648, 7
        %s4650 = scalar_select %p4649, %s4648, 7
        %s4651 = smul.addr %s4650, 8
        %s4652 = smul.addr %s4651, 8
        %s4653 = scalar_lea.vmem %s5, %s4652
      $region52: #{tpu_custom_call.1} parent=47 // pred_fallthru
        _
    $region48: #{tpu_custom_call.1} parent=5 // pred_fallthru
      _
  $region6: #{tpu_custom_call.1} parent=0 // loop_footer
    %s15 = sadd.s32 1, %s11
  $region7: #{tpu_custom_call.1} parent=0 // loop_footer_branch
    %10 = sbr.rel target = $region3
  $region8: #{tpu_custom_call.1} parent=0 // loop_exit
    _

</llo_original>
